<compile_context>
chip_gen: v6e
topology: v6e:2x2x1
jax: 0.10.0
libtpu: 0.0.40
codegen_flags: <defaults>
</compile_context>

<pallas_src>
import functools

import jax
import jax.numpy as jnp
from jax import lax
from jax.experimental import pallas as pl
from jax.experimental.pallas import tpu as pltpu

EPS = 1e-5  # torch.nn.InstanceNorm2d default


def _row_tile(H, Wp, C):
    """Row-block height: keep the f32 (TH*Wp, C) accumulator well under the
    64 x 4KiB vreg file so it never spills (target ~64-256 matmul rows)."""
    target_rows = 256 if C < 128 else (128 if C < 256 else 64)
    th = max(1, min(H, max(1, target_rows // max(Wp, 1))))
    while H % th:
        th -= 1
    return th


def _fused_residual_kernel(x_ref, w1_ref, w2_ref, out_ref, xs_ref, h_ref,
                           *, H, W, Wp, C, TH, cdt, ky_fused):
    """Fused ResidualBlock forward for one batch element.

    x_ref   : (1, H, W, C)            f32 input tile
    w*_ref  : (9C, C)                 conv weights, rows ordered (ky, kx, cin)
    out_ref : (1, H, W, C)            f32 output tile
    xs_ref  : (H, Wp, 9C) or (H+2, Wp, 3C)  scratch, compute dtype (tap layout)
    h_ref   : (H, Wp, C)              scratch, compute dtype (conv output)
    """
    nrb = H // TH
    npix = float(H * W)

    def load_shifted(src):
        # src: (H, >=W, C); only columns [0, W) are read.  Builds the reflect-
        # padded, channel-concatenated tap layout and writes it to xs_ref.
        src = src.astype(cdt)
        vh = jnp.concatenate([src[1:2], src, src[H - 2:H - 1]], axis=0)   # (H+2, ., C)
        s0 = jnp.concatenate([vh[:, 1:2], vh[:, :W - 1]], axis=1)         # kx = 0
        s1 = vh[:, :W]                                                    # kx = 1
        s2 = jnp.concatenate([vh[:, 1:W], vh[:, W - 2:W - 1]], axis=1)    # kx = 2
        xs = jnp.concatenate([s0, s1, s2], axis=-1)                       # (H+2, W, 3C)
        if ky_fused:
            # Concat the ky shifts too -> (H, W, 9C); one matmul per row block.
            xs = jnp.concatenate([xs[0:H], xs[1:H + 1], xs[2:H + 2]], axis=-1)
        if Wp > W:
            pad = jnp.zeros(xs.shape[:1] + (Wp - W,) + xs.shape[2:], cdt)
            xs = jnp.concatenate([xs, pad], axis=1)   # zero pad cols: stats stay exact
        xs_ref[...] = xs

    def conv(w_ref):
        # 3x3 conv as K-concatenated MXU matmuls over row blocks; bias-free
        # (InstanceNorm cancels it); single-pass IN statistics fused into the
        # conv write-out (pad columns contribute exactly zero to both sums).
        def body(rb, carry):
            s, ss = carry
            r0 = pl.multiple_of(rb * TH, TH)
            if ky_fused:
                patch = xs_ref[pl.ds(r0, TH), :, :]                     # (TH, Wp, 9C)
                acc = jnp.dot(patch.reshape(TH * Wp, 9 * C), w_ref[...],
                              preferred_element_type=jnp.float32)
            else:
                acc = jnp.zeros((TH * Wp, C), jnp.float32)
                for ky in range(3):
                    patch = xs_ref[pl.ds(r0 + ky, TH), :, :]            # (TH, Wp, 3C)
                    acc += jnp.dot(patch.reshape(TH * Wp, 3 * C),
                                   w_ref[pl.ds(ky * 3 * C, 3 * C), :],
                                   preferred_element_type=jnp.float32)
            h_ref[pl.ds(r0, TH), :, :] = acc.reshape(TH, Wp, C).astype(cdt)
            s = s + jnp.sum(acc, axis=0, keepdims=True)
            ss = ss + jnp.sum(acc * acc, axis=0, keepdims=True)
            return s, ss

        init = (jnp.zeros((1, C), jnp.float32), jnp.zeros((1, C), jnp.float32))
        s, ss = lax.fori_loop(0, nrb, body, init, unroll=(nrb <= 4))
        mean = s / npix
        var = jnp.maximum(ss / npix - mean * mean, 0.0)   # biased var (PyTorch IN)
        inv = lax.rsqrt(var + EPS)
        return mean.reshape(1, 1, C), inv.reshape(1, 1, C)

    # ---- ConvBlock 1: conv -> InstanceNorm -> ReLU --------------------------
    load_shifted(x_ref[0])
    m1, i1 = conv(w1_ref)
    # Normalize + ReLU fused directly into building ConvBlock2's tap buffer
    # (no separate full-tile write-back pass over h).
    load_shifted(jnp.maximum((h_ref[...] - m1) * i1, 0.0))

    # ---- ConvBlock 2: conv -> InstanceNorm, then residual add ---------------
    m2, i2 = conv(w2_ref)
    h2 = h_ref[...][:, :W, :].astype(jnp.float32)
    out_ref[0] = (h2 - m2) * i2 + x_ref[0]


def residual_block(x_nchw, params, compute_dtype=None):
    """ResidualBlock forward. x_nchw: (B, C, H, W) float32 (PyTorch layout)."""
    w1, _b1, w2, _b2 = params   # conv biases cancel under affine-free InstanceNorm
    B, C, H, W = x_nchw.shape
    assert H >= 2 and W >= 2, "reflect padding (pad=1) needs H, W >= 2"

    x = jnp.transpose(x_nchw, (0, 2, 3, 1)).astype(jnp.float32)   # NCHW -> NHWC

    # bf16 MXU inputs once C fills a lane tile; f32 for small C so the 1e-4
    # self-check at the test shape stays meaningful.
    if compute_dtype is None:
        cdt = jnp.bfloat16 if C >= 128 else jnp.float32
    else:
        cdt = compute_dtype

    Wp = (W + 7) // 8 * 8                      # scratch width: sublane-aligned
    ky_fused = C < 128                         # single K=9C matmul for small C
    TH = _row_tile(H, Wp, C)

    kernel = functools.partial(_fused_residual_kernel, H=H, W=W, Wp=Wp, C=C,
                               TH=TH, cdt=cdt, ky_fused=ky_fused)

    # (3,3,C,C) HWIO -> (9C, C) with rows ordered (ky, kx, cin); matches both
    # the ky-fused (full) and ky-looped (3C slab per ky) tap layouts.
    wcat1 = w1.reshape(9 * C, C).astype(cdt)
    wcat2 = w2.reshape(9 * C, C).astype(cdt)

    xs_shape = (H, Wp, 9 * C) if ky_fused else (H + 2, Wp, 3 * C)

    try:
        vmem_cap = pltpu.get_tpu_info().vmem_capacity_bytes
    except Exception:  # conservative fallback if the query is unavailable
        vmem_cap = 128 * 1024 * 1024
    vmem_limit = min(int(vmem_cap) * 3 // 4, 100 * 1024 * 1024)

    out = pl.pallas_call(
        kernel,
        out_shape=jax.ShapeDtypeStruct((B, H, W, C), jnp.float32),
        grid_spec=pltpu.PrefetchScalarGridSpec(
            num_scalar_prefetch=0,
            grid=(B,),
            in_specs=[
                pl.BlockSpec((1, H, W, C), lambda i: (i, 0, 0, 0)),
                pl.BlockSpec((9 * C, C), lambda i: (0, 0)),
                pl.BlockSpec((9 * C, C), lambda i: (0, 0)),
            ],
            out_specs=pl.BlockSpec((1, H, W, C), lambda i: (i, 0, 0, 0)),
            scratch_shapes=[
                pltpu.VMEM(xs_shape, cdt),          # channel-concat tap layout
                pltpu.VMEM((H, Wp, C), cdt),        # conv output / intermediate
            ],
        ),
        compiler_params=pltpu.CompilerParams(
            dimension_semantics=("parallel",),
            vmem_limit_bytes=vmem_limit,
        ),
    )(x, wcat1, wcat2)

    return jnp.transpose(out, (0, 3, 1, 2))               # NHWC -> NCHW


def init_params(key, channels):
    """Deterministic synthetic parameters (Conv2d weight OIHW -> HWIO).
    Biases are kept to mirror nn.Conv2d, even though InstanceNorm cancels them."""
    k1, k2, k3, k4 = jax.random.split(key, 4)
    scale = 0.1
    w1_oihw = scale * jax.random.normal(k1, (channels, channels, 3, 3), jnp.float32)
    w2_oihw = scale * jax.random.normal(k2, (channels, channels, 3, 3), jnp.float32)
    b1 = scale * jax.random.normal(k3, (channels,), jnp.float32)
    b2 = scale * jax.random.normal(k4, (channels,), jnp.float32)
    w1 = jnp.transpose(w1_oihw, (2, 3, 1, 0))   # OIHW -> HWIO
    w2 = jnp.transpose(w2_oihw, (2, 3, 1, 0))
    return (w1, b1, w2, b2)


def _reference(x_nchw, params):
    """Pure-JAX reference (lax.conv, bias applied) to sanity-check the kernel."""
    w1, b1, w2, b2 = params

    def conv_block(x, w_hwio, b, use_relu):
        xpad = jnp.pad(x, ((0, 0), (1, 1), (1, 1), (0, 0)), mode="reflect")
        y = lax.conv_general_dilated(
            xpad, w_hwio, window_strides=(1, 1), padding="VALID",
            dimension_numbers=("NHWC", "HWIO", "NHWC"),
            precision=lax.Precision.HIGHEST)
        y = y + b
        mean = jnp.mean(y, axis=(1, 2), keepdims=True)
        var = jnp.mean((y - mean) ** 2, axis=(1, 2), keepdims=True)
        y = (y - mean) * lax.rsqrt(var + EPS)
        if use_relu:
            y = jnp.maximum(y, 0.0)
        return y

    x = jnp.transpose(x_nchw, (0, 2, 3, 1))
    h = conv_block(x, w1, b1, True)
    y = x + conv_block(h, w2, b2, False)
    return jnp.transpose(y, (0, 3, 1, 2))


if __name__ == "__main__":
    key = jax.random.PRNGKey(0)

    # Primary small-shape check (ky-fused K=9C path, f32 compute).
    B, C, H, W = 2, 4, 16, 16
    kx_, kp = jax.random.split(key)
    x = jax.random.normal(kx_, (B, C, H, W), jnp.float32)
    params = init_params(kp, C)

    out = jax.block_until_ready(residual_block(x, params))
    ref = _reference(x, params)
    assert out.shape == (B, C, H, W)
    assert jnp.allclose(out, ref, atol=1e-4, rtol=1e-4), \
        float(jnp.max(jnp.abs(out - ref)))

    # Secondary check of the wide-channel path (ky loop, K=3C slabs); force f32
    # compute so the strict tolerance stays meaningful.
    B2, C2, H2, W2 = 1, 128, 8, 8
    kx2, kp2 = jax.random.split(kp)
    x2 = jax.random.normal(kx2, (B2, C2, H2, W2), jnp.float32)
    params2 = init_params(kp2, C2)
    out2 = jax.block_until_ready(
        residual_block(x2, params2, compute_dtype=jnp.float32))
    ref2 = _reference(x2, params2)
    assert jnp.allclose(out2, ref2, atol=1e-4, rtol=1e-4), \
        float(jnp.max(jnp.abs(out2 - ref2)))

    print("KERNEL_OK")
</pallas_src>

<mosaic_0001>
module attributes {stable_mosaic.version = 11 : i64} {
  func.func @_fused_residual_kernel(%arg0: i32, %arg1: memref<1x16x16x4xf32, #tpu.memory_space<vmem>>, %arg2: memref<36x4xf32, #tpu.memory_space<vmem>>, %arg3: memref<36x4xf32, #tpu.memory_space<vmem>>, %arg4: memref<1x16x16x4xf32, #tpu.memory_space<vmem>>, %arg5: memref<16x16x36xf32, #tpu.memory_space<vmem>>, %arg6: memref<16x16x4xf32, #tpu.memory_space<vmem>>) attributes {dimension_semantics = [#tpu.dimension_semantics<parallel>], iteration_bounds = array<i64: 2>, scalar_prefetch = 0 : i64, scratch_operands = 2 : i64, tpu.core_type = #tpu.core_type<tc>, window_params = [{transform_indices = @transform_0, window_bounds = array<i64: 1, 16, 16, 4>}, {pipeline_mode = #tpu.pipeline_mode<synchronous>, transform_indices = @transform_1, window_bounds = array<i64: 36, 4>}, {pipeline_mode = #tpu.pipeline_mode<synchronous>, transform_indices = @transform_2, window_bounds = array<i64: 36, 4>}, {transform_indices = @transform_3, window_bounds = array<i64: 1, 16, 16, 4>}]} {
    %c0 = arith.constant 0 : index
    %c0_0 = arith.constant 0 : index
    %c0_1 = arith.constant 0 : index
    %c0_2 = arith.constant 0 : index
    %0 = vector.load %arg1[%c0, %c0_0, %c0_1, %c0_2] : memref<1x16x16x4xf32, #tpu.memory_space<vmem>>, vector<1x16x16x4xf32>
    %1 = vector.shape_cast %0 : vector<1x16x16x4xf32> to vector<16x16x4xf32>
    %2 = vector.extract_strided_slice %1 {offsets = [1, 0, 0], sizes = [1, 16, 4], strides = [1, 1, 1]} : vector<16x16x4xf32> to vector<1x16x4xf32>
    %3 = vector.extract_strided_slice %1 {offsets = [14, 0, 0], sizes = [1, 16, 4], strides = [1, 1, 1]} : vector<16x16x4xf32> to vector<1x16x4xf32>
    %4 = tpu.concatenate %2, %1, %3 in 0 : vector<1x16x4xf32>, vector<16x16x4xf32>, vector<1x16x4xf32> -> vector<18x16x4xf32>
    %5 = vector.extract_strided_slice %4 {offsets = [0, 1, 0], sizes = [18, 1, 4], strides = [1, 1, 1]} : vector<18x16x4xf32> to vector<18x1x4xf32>
    %6 = vector.extract_strided_slice %4 {offsets = [0, 0, 0], sizes = [18, 15, 4], strides = [1, 1, 1]} : vector<18x16x4xf32> to vector<18x15x4xf32>
    %7 = tpu.concatenate %5, %6 in 1 : vector<18x1x4xf32>, vector<18x15x4xf32> -> vector<18x16x4xf32>
    %8 = vector.extract_strided_slice %4 {offsets = [0, 1, 0], sizes = [18, 15, 4], strides = [1, 1, 1]} : vector<18x16x4xf32> to vector<18x15x4xf32>
    %9 = vector.extract_strided_slice %4 {offsets = [0, 14, 0], sizes = [18, 1, 4], strides = [1, 1, 1]} : vector<18x16x4xf32> to vector<18x1x4xf32>
    %10 = tpu.concatenate %8, %9 in 1 : vector<18x15x4xf32>, vector<18x1x4xf32> -> vector<18x16x4xf32>
    %11 = tpu.concatenate %7, %4, %10 in 2 : vector<18x16x4xf32>, vector<18x16x4xf32>, vector<18x16x4xf32> -> vector<18x16x12xf32>
    %12 = vector.extract_strided_slice %11 {offsets = [0, 0, 0], sizes = [16, 16, 12], strides = [1, 1, 1]} : vector<18x16x12xf32> to vector<16x16x12xf32>
    %13 = vector.extract_strided_slice %11 {offsets = [1, 0, 0], sizes = [16, 16, 12], strides = [1, 1, 1]} : vector<18x16x12xf32> to vector<16x16x12xf32>
    %14 = vector.extract_strided_slice %11 {offsets = [2, 0, 0], sizes = [16, 16, 12], strides = [1, 1, 1]} : vector<18x16x12xf32> to vector<16x16x12xf32>
    %15 = tpu.concatenate %12, %13, %14 in 2 : vector<16x16x12xf32>, vector<16x16x12xf32>, vector<16x16x12xf32> -> vector<16x16x36xf32>
    %c0_3 = arith.constant 0 : index
    %c0_4 = arith.constant 0 : index
    %c0_5 = arith.constant 0 : index
    %16 = vector.load %arg5[%c0_3, %c0_4, %c0_5] : memref<16x16x36xf32, #tpu.memory_space<vmem>>, vector<16x16x36xf32>
    tpu.vector_store %arg5[%c0_3, %c0_4, %c0_5], %15 {strides = array<i32>} : memref<16x16x36xf32, #tpu.memory_space<vmem>>, vector<16x16x36xf32>,
    %cst = arith.constant 0.000000e+00 : f32
    %17 = vector.broadcast %cst : f32 to vector<1x4xf32>
    %cst_6 = arith.constant 0.000000e+00 : f32
    %18 = vector.broadcast %cst_6 : f32 to vector<1x4xf32>
    %c0_i32 = arith.constant 0 : i32
    %c16_i32 = arith.constant 16 : i32
    %19 = arith.muli %c0_i32, %c16_i32 : i32
    %20 = tpu.assume_multiple %19, 16 : i32
    %21 = arith.index_cast %20 : i32 to index
    %c0_7 = arith.constant 0 : index
    %c0_8 = arith.constant 0 : index
    %22 = vector.load %arg5[%21, %c0_7, %c0_8] : memref<16x16x36xf32, #tpu.memory_space<vmem>>, vector<16x16x36xf32>
    %23 = vector.shape_cast %22 : vector<16x16x36xf32> to vector<256x36xf32>
    %c0_9 = arith.constant 0 : index
    %c0_10 = arith.constant 0 : index
    %24 = vector.load %arg2[%c0_9, %c0_10] : memref<36x4xf32, #tpu.memory_space<vmem>>, vector<36x4xf32>
    %cst_11 = arith.constant dense<0.000000e+00> : vector<256x4xf32>
    %25 = tpu.matmul %23, %24, %cst_11 {dimension_numbers = #tpu.dot_dimension_numbers<[1], [0], [0], [1], [0, 0, 1, 1], [], []>} : vector<256x36xf32>, vector<36x4xf32>, vector<256x4xf32> -> vector<256x4xf32>
    %26 = vector.shape_cast %25 : vector<256x4xf32> to vector<16x16x4xf32>
    %27 = arith.index_cast %20 : i32 to index
    %c0_12 = arith.constant 0 : index
    %c0_13 = arith.constant 0 : index
    %28 = vector.load %arg6[%27, %c0_12, %c0_13] : memref<16x16x4xf32, #tpu.memory_space<vmem>>, vector<16x16x4xf32>
    tpu.vector_store %arg6[%27, %c0_12, %c0_13], %26 {strides = array<i32>} : memref<16x16x4xf32, #tpu.memory_space<vmem>>, vector<16x16x4xf32>,
    %cst_14 = arith.constant dense<0.000000e+00> : vector<4xf32>
    %29 = vector.multi_reduction <add>, %25, %cst_14 [0] : vector<256x4xf32> to vector<4xf32>
    %30 = vector.shape_cast %29 : vector<4xf32> to vector<1x4xf32>
    %31 = arith.addf %17, %30 : vector<1x4xf32>
    %32 = arith.mulf %25, %25 : vector<256x4xf32>
    %cst_15 = arith.constant dense<0.000000e+00> : vector<4xf32>
    %33 = vector.multi_reduction <add>, %32, %cst_15 [0] : vector<256x4xf32> to vector<4xf32>
    %34 = vector.shape_cast %33 : vector<4xf32> to vector<1x4xf32>
    %35 = arith.addf %18, %34 : vector<1x4xf32>
    %c1_i32 = arith.constant 1 : i32
    %cst_16 = arith.constant 2.560000e+02 : f32
    %36 = vector.broadcast %cst_16 : f32 to vector<1x4xf32>
    %37 = arith.divf %31, %36 : vector<1x4xf32>
    %cst_17 = arith.constant 2.560000e+02 : f32
    %38 = vector.broadcast %cst_17 : f32 to vector<1x4xf32>
    %39 = arith.divf %35, %38 : vector<1x4xf32>
    %40 = arith.mulf %37, %37 : vector<1x4xf32>
    %41 = arith.subf %39, %40 : vector<1x4xf32>
    %cst_18 = arith.constant 0.000000e+00 : f32
    %42 = vector.broadcast %cst_18 : f32 to vector<1x4xf32>
    %43 = arith.maximumf %41, %42 : vector<1x4xf32>
    %cst_19 = arith.constant 9.99999974E-6 : f32
    %44 = vector.broadcast %cst_19 : f32 to vector<1x4xf32>
    %45 = arith.addf %43, %44 : vector<1x4xf32>
    %46 = math.rsqrt %45 : vector<1x4xf32>
    %47 = vector.shape_cast %37 : vector<1x4xf32> to vector<1x1x4xf32>
    %48 = vector.shape_cast %46 : vector<1x4xf32> to vector<1x1x4xf32>
    %c0_20 = arith.constant 0 : index
    %c0_21 = arith.constant 0 : index
    %c0_22 = arith.constant 0 : index
    %49 = vector.load %arg6[%c0_20, %c0_21, %c0_22] : memref<16x16x4xf32, #tpu.memory_space<vmem>>, vector<16x16x4xf32>
    %50 = vector.broadcast %47 : vector<1x1x4xf32> to vector<16x16x4xf32>
    %51 = arith.subf %49, %50 : vector<16x16x4xf32>
    %52 = vector.broadcast %48 : vector<1x1x4xf32> to vector<16x16x4xf32>
    %53 = arith.mulf %51, %52 : vector<16x16x4xf32>
    %cst_23 = arith.constant 0.000000e+00 : f32
    %54 = vector.broadcast %cst_23 : f32 to vector<16x16x4xf32>
    %55 = arith.maximumf %53, %54 : vector<16x16x4xf32>
    %56 = vector.extract_strided_slice %55 {offsets = [1, 0, 0], sizes = [1, 16, 4], strides = [1, 1, 1]} : vector<16x16x4xf32> to vector<1x16x4xf32>
    %57 = vector.extract_strided_slice %55 {offsets = [14, 0, 0], sizes = [1, 16, 4], strides = [1, 1, 1]} : vector<16x16x4xf32> to vector<1x16x4xf32>
    %58 = tpu.concatenate %56, %55, %57 in 0 : vector<1x16x4xf32>, vector<16x16x4xf32>, vector<1x16x4xf32> -> vector<18x16x4xf32>
    %59 = vector.extract_strided_slice %58 {offsets = [0, 1, 0], sizes = [18, 1, 4], strides = [1, 1, 1]} : vector<18x16x4xf32> to vector<18x1x4xf32>
    %60 = vector.extract_strided_slice %58 {offsets = [0, 0, 0], sizes = [18, 15, 4], strides = [1, 1, 1]} : vector<18x16x4xf32> to vector<18x15x4xf32>
    %61 = tpu.concatenate %59, %60 in 1 : vector<18x1x4xf32>, vector<18x15x4xf32> -> vector<18x16x4xf32>
    %62 = vector.extract_strided_slice %58 {offsets = [0, 1, 0], sizes = [18, 15, 4], strides = [1, 1, 1]} : vector<18x16x4xf32> to vector<18x15x4xf32>
    %63 = vector.extract_strided_slice %58 {offsets = [0, 14, 0], sizes = [18, 1, 4], strides = [1, 1, 1]} : vector<18x16x4xf32> to vector<18x1x4xf32>
    %64 = tpu.concatenate %62, %63 in 1 : vector<18x15x4xf32>, vector<18x1x4xf32> -> vector<18x16x4xf32>
    %65 = tpu.concatenate %61, %58, %64 in 2 : vector<18x16x4xf32>, vector<18x16x4xf32>, vector<18x16x4xf32> -> vector<18x16x12xf32>
    %66 = vector.extract_strided_slice %65 {offsets = [0, 0, 0], sizes = [16, 16, 12], strides = [1, 1, 1]} : vector<18x16x12xf32> to vector<16x16x12xf32>
    %67 = vector.extract_strided_slice %65 {offsets = [1, 0, 0], sizes = [16, 16, 12], strides = [1, 1, 1]} : vector<18x16x12xf32> to vector<16x16x12xf32>
    %68 = vector.extract_strided_slice %65 {offsets = [2, 0, 0], sizes = [16, 16, 12], strides = [1, 1, 1]} : vector<18x16x12xf32> to vector<16x16x12xf32>
    %69 = tpu.concatenate %66, %67, %68 in 2 : vector<16x16x12xf32>, vector<16x16x12xf32>, vector<16x16x12xf32> -> vector<16x16x36xf32>
    %c0_24 = arith.constant 0 : index
    %c0_25 = arith.constant 0 : index
    %c0_26 = arith.constant 0 : index
    %70 = vector.load %arg5[%c0_24, %c0_25, %c0_26] : memref<16x16x36xf32, #tpu.memory_space<vmem>>, vector<16x16x36xf32>
    tpu.vector_store %arg5[%c0_24, %c0_25, %c0_26], %69 {strides = array<i32>} : memref<16x16x36xf32, #tpu.memory_space<vmem>>, vector<16x16x36xf32>,
    %cst_27 = arith.constant 0.000000e+00 : f32
    %71 = vector.broadcast %cst_27 : f32 to vector<1x4xf32>
    %cst_28 = arith.constant 0.000000e+00 : f32
    %72 = vector.broadcast %cst_28 : f32 to vector<1x4xf32>
    %c0_i32_29 = arith.constant 0 : i32
    %c16_i32_30 = arith.constant 16 : i32
    %73 = arith.muli %c0_i32_29, %c16_i32_30 : i32
    %74 = tpu.assume_multiple %73, 16 : i32
    %75 = arith.index_cast %74 : i32 to index
    %c0_31 = arith.constant 0 : index
    %c0_32 = arith.constant 0 : index
    %76 = vector.load %arg5[%75, %c0_31, %c0_32] : memref<16x16x36xf32, #tpu.memory_space<vmem>>, vector<16x16x36xf32>
    %77 = vector.shape_cast %76 : vector<16x16x36xf32> to vector<256x36xf32>
    %c0_33 = arith.constant 0 : index
    %c0_34 = arith.constant 0 : index
    %78 = vector.load %arg3[%c0_33, %c0_34] : memref<36x4xf32, #tpu.memory_space<vmem>>, vector<36x4xf32>
    %cst_35 = arith.constant dense<0.000000e+00> : vector<256x4xf32>
    %79 = tpu.matmul %77, %78, %cst_35 {dimension_numbers = #tpu.dot_dimension_numbers<[1], [0], [0], [1], [0, 0, 1, 1], [], []>} : vector<256x36xf32>, vector<36x4xf32>, vector<256x4xf32> -> vector<256x4xf32>
    %80 = vector.shape_cast %79 : vector<256x4xf32> to vector<16x16x4xf32>
    %81 = arith.index_cast %74 : i32 to index
    %c0_36 = arith.constant 0 : index
    %c0_37 = arith.constant 0 : index
    %82 = vector.load %arg6[%81, %c0_36, %c0_37] : memref<16x16x4xf32, #tpu.memory_space<vmem>>, vector<16x16x4xf32>
    tpu.vector_store %arg6[%81, %c0_36, %c0_37], %80 {strides = array<i32>} : memref<16x16x4xf32, #tpu.memory_space<vmem>>, vector<16x16x4xf32>,
    %cst_38 = arith.constant dense<0.000000e+00> : vector<4xf32>
    %83 = vector.multi_reduction <add>, %79, %cst_38 [0] : vector<256x4xf32> to vector<4xf32>
    %84 = vector.shape_cast %83 : vector<4xf32> to vector<1x4xf32>
    %85 = arith.addf %71, %84 : vector<1x4xf32>
    %86 = arith.mulf %79, %79 : vector<256x4xf32>
    %cst_39 = arith.constant dense<0.000000e+00> : vector<4xf32>
    %87 = vector.multi_reduction <add>, %86, %cst_39 [0] : vector<256x4xf32> to vector<4xf32>
    %88 = vector.shape_cast %87 : vector<4xf32> to vector<1x4xf32>
    %89 = arith.addf %72, %88 : vector<1x4xf32>
    %c1_i32_40 = arith.constant 1 : i32
    %cst_41 = arith.constant 2.560000e+02 : f32
    %90 = vector.broadcast %cst_41 : f32 to vector<1x4xf32>
    %91 = arith.divf %85, %90 : vector<1x4xf32>
    %cst_42 = arith.constant 2.560000e+02 : f32
    %92 = vector.broadcast %cst_42 : f32 to vector<1x4xf32>
    %93 = arith.divf %89, %92 : vector<1x4xf32>
    %94 = arith.mulf %91, %91 : vector<1x4xf32>
    %95 = arith.subf %93, %94 : vector<1x4xf32>
    %cst_43 = arith.constant 0.000000e+00 : f32
    %96 = vector.broadcast %cst_43 : f32 to vector<1x4xf32>
    %97 = arith.maximumf %95, %96 : vector<1x4xf32>
    %cst_44 = arith.constant 9.99999974E-6 : f32
    %98 = vector.broadcast %cst_44 : f32 to vector<1x4xf32>
    %99 = arith.addf %97, %98 : vector<1x4xf32>
    %100 = math.rsqrt %99 : vector<1x4xf32>
    %101 = vector.shape_cast %91 : vector<1x4xf32> to vector<1x1x4xf32>
    %102 = vector.shape_cast %100 : vector<1x4xf32> to vector<1x1x4xf32>
    %c0_45 = arith.constant 0 : index
    %c0_46 = arith.constant 0 : index
    %c0_47 = arith.constant 0 : index
    %103 = vector.load %arg6[%c0_45, %c0_46, %c0_47] : memref<16x16x4xf32, #tpu.memory_space<vmem>>, vector<16x16x4xf32>
    %104 = vector.broadcast %101 : vector<1x1x4xf32> to vector<16x16x4xf32>
    %105 = arith.subf %103, %104 : vector<16x16x4xf32>
    %106 = vector.broadcast %102 : vector<1x1x4xf32> to vector<16x16x4xf32>
    %107 = arith.mulf %105, %106 : vector<16x16x4xf32>
    %c0_48 = arith.constant 0 : index
    %c0_49 = arith.constant 0 : index
    %c0_50 = arith.constant 0 : index
    %c0_51 = arith.constant 0 : index
    %108 = vector.load %arg1[%c0_48, %c0_49, %c0_50, %c0_51] : memref<1x16x16x4xf32, #tpu.memory_space<vmem>>, vector<1x16x16x4xf32>
    %109 = vector.shape_cast %108 : vector<1x16x16x4xf32> to vector<16x16x4xf32>
    %110 = arith.addf %107, %109 : vector<16x16x4xf32>
    %c0_52 = arith.constant 0 : index
    %c0_53 = arith.constant 0 : index
    %c0_54 = arith.constant 0 : index
    %c0_55 = arith.constant 0 : index
    %111 = vector.load %arg4[%c0_52, %c0_53, %c0_54, %c0_55] : memref<1x16x16x4xf32, #tpu.memory_space<vmem>>, vector<1x16x16x4xf32>
    %112 = vector.shape_cast %111 : vector<1x16x16x4xf32> to vector<16x16x4xf32>
    %113 = vector.shape_cast %110 : vector<16x16x4xf32> to vector<1x16x16x4xf32>
    tpu.vector_store %arg4[%c0_52, %c0_53, %c0_54, %c0_55], %113 {strides = array<i32>} : memref<1x16x16x4xf32, #tpu.memory_space<vmem>>, vector<1x16x16x4xf32>,
    return
  }
  func.func @transform_0(%arg0: i32) -> (i32, i32, i32, i32) {
    %c0_i32 = arith.constant 0 : i32
    %c0_i32_0 = arith.constant 0 : i32
    %c0_i32_1 = arith.constant 0 : i32
    %c0_i32_2 = arith.constant 0 : i32
    return %arg0, %c0_i32, %c0_i32_0, %c0_i32_1 : i32, i32, i32, i32
  }
  func.func @transform_1(%arg0: i32) -> (i32, i32) {
    %c0_i32 = arith.constant 0 : i32
    %c0_i32_0 = arith.constant 0 : i32
    %c0_i32_1 = arith.constant 0 : i32
    return %c0_i32, %c0_i32_0 : i32, i32
  }
  func.func @transform_2(%arg0: i32) -> (i32, i32) {
    %c0_i32 = arith.constant 0 : i32
    %c0_i32_0 = arith.constant 0 : i32
    %c0_i32_1 = arith.constant 0 : i32
    return %c0_i32, %c0_i32_0 : i32, i32
  }
  func.func @transform_3(%arg0: i32) -> (i32, i32, i32, i32) {
    %c0_i32 = arith.constant 0 : i32
    %c0_i32_0 = arith.constant 0 : i32
    %c0_i32_1 = arith.constant 0 : i32
    %c0_i32_2 = arith.constant 0 : i32
    return %arg0, %c0_i32, %c0_i32_0, %c0_i32_1 : i32, i32, i32, i32
  }
}

</mosaic_0001>

<llo_original>
// kernel: tpu_custom_call.1
$region0: #{tpu_custom_call.1}
  #allocation0 [shape = 'u32[]', space=smem, size = 0x4, offset = 0x4, fixed_abs, tag = 'smem constant byte address 0x4 - core index']
  #allocation1 [shape = 'u32[144,128]{1,0:T(1,128)}', space=vmem, size = 0x12000, scoped, tag = 'internal scratch']
  #allocation2 [shape = 'f32[16,16,36]{2,1,0:T(8,128)}', space=vmem, size = 0x20000, scoped, tag = 'scratch operand']
  #allocation3 [shape = 'f32[16,16,4]{2,1,0:T(8,128)}', space=vmem, size = 0x20000, scoped, tag = 'scratch operand']
  %s0 = inlined_call_operand.vmem [shape: f32[2,16,16,4], index: 0, kind: input, shape index: {}]
  %s1 = inlined_call_operand.vmem [shape: f32[36,4], index: 1, kind: input, shape index: {}]
  %s2 = inlined_call_operand.vmem [shape: f32[36,4], index: 2, kind: input, shape index: {}]
  %s3 = inlined_call_operand.vmem [shape: f32[2,16,16,4], index: 3, kind: output, shape index: {}]
  %s4 = sld [smem:[#allocation0]]
  $region45: #{tpu_custom_call.1} parent=0
    _
  %s6 = ssub.s32 1, %s4
  %s7 = scalar_select 0, %s6, %s4
  loop: start=0, step=1, limit=4
  $region2: #{tpu_custom_call.1} parent=0 // loop_pre_header
    _
  $region3: #{tpu_custom_call.1} parent=0 // loop_header
    %s9 = sphi 0, %s13
    %p10 = scmp.ge.s32.totalorder %s9, 4
    %s19 = sphi 0, %s21
    %s22 = sphi 0, %s19
    %s23 = sphi 0, %s22
    %s39 = sphi 0, %s23
    %s43 = sphi 0, %s43
    %s45 = sphi 0, %s43
    %s46 = sphi 0, %s45
    %s60 = sphi 0, %s46
    %s64 = sphi 0, %s64
    %s66 = sphi 0, %s64
    %s67 = sphi 0, %s66
    %s81 = sphi 0, %s67
    %s87 = sphi 0, %s89
    %s90 = sphi 0, %s87
    %s91 = sphi 0, %s90
    %s107 = sphi 0, %s91
  $region4: #{tpu_custom_call.1} parent=0 // loop_header_branch
    %12 = sbr.rel (%p10) target = $region8
  $region5: #{tpu_custom_call.1} parent=0 // loop_body
    %s14 = ssub.s32 %s9, 1
    %s15 = ssub.s32 %s9, 2
    %s16 = sadd.s32 %s9, 1
    %s17 = ssub.s32 %s9, %s16
    %p18 = scmp.eq.s32.totalorder %s17, 0
    %s20 = sadd.s32 %s19, 1
    %s21 = scalar_select %p18, %s19, %s20
    %p24 = pneg %p18
    %p25 = scmp.eq.s32.totalorder %s9, 1
    %p26 = por %p24, %p25
    %p27 = scmp.ne.s32.totalorder %s19, %s22
    %p28 = scmp.eq.s32.totalorder %s9, 0
    %p29 = por %p27, %p28
    %p30 = scmp.ne.s32.totalorder %s19, %s22
    %p31 = scmp.eq.s32.totalorder %s14, 1
    %p32 = por %p30, %p31
    %p33 = scmp.ne.s32.totalorder %s22, %s23
    %p34 = scmp.eq.s32.totalorder %s14, 0
    %p35 = por %p33, %p34
    %p36 = scmp.ne.s32.totalorder %s22, %s23
    %p37 = scmp.eq.s32.totalorder %s15, 1
    %p38 = por %p36, %p37
    %p40 = scmp.ne.s32.totalorder %s23, %s39
    %p41 = scmp.eq.s32.totalorder %s15, 0
    %p42 = por %p40, %p41
    %s44 = sadd.s32 %s43, 1
    %p47 = scmp.eq.s32.totalorder %s9, 1
    %p48 = scmp.ne.s32.totalorder %s43, %s45
    %p49 = scmp.eq.s32.totalorder %s9, 0
    %p50 = por %p48, %p49
    %p51 = scmp.ne.s32.totalorder %s43, %s45
    %p52 = scmp.eq.s32.totalorder %s14, 1
    %p53 = por %p51, %p52
    %p54 = scmp.ne.s32.totalorder %s45, %s46
    %p55 = scmp.eq.s32.totalorder %s14, 0
    %p56 = por %p54, %p55
    %p57 = scmp.ne.s32.totalorder %s45, %s46
    %p58 = scmp.eq.s32.totalorder %s15, 1
    %p59 = por %p57, %p58
    %p61 = scmp.ne.s32.totalorder %s46, %s60
    %p62 = scmp.eq.s32.totalorder %s15, 0
    %p63 = por %p61, %p62
    %s65 = sadd.s32 %s64, 1
    %p68 = scmp.eq.s32.totalorder %s9, 1
    %p69 = scmp.ne.s32.totalorder %s64, %s66
    %p70 = scmp.eq.s32.totalorder %s9, 0
    %p71 = por %p69, %p70
    %p72 = scmp.ne.s32.totalorder %s64, %s66
    %p73 = scmp.eq.s32.totalorder %s14, 1
    %p74 = por %p72, %p73
    %p75 = scmp.ne.s32.totalorder %s66, %s67
    %p76 = scmp.eq.s32.totalorder %s14, 0
    %p77 = por %p75, %p76
    %p78 = scmp.ne.s32.totalorder %s66, %s67
    %p79 = scmp.eq.s32.totalorder %s15, 1
    %p80 = por %p78, %p79
    %p82 = scmp.ne.s32.totalorder %s67, %s81
    %p83 = scmp.eq.s32.totalorder %s15, 0
    %p84 = por %p82, %p83
    %s85 = ssub.s32 %s9, %s16
    %p86 = scmp.eq.s32.totalorder %s85, 0
    %s88 = sadd.s32 %s87, 1
    %s89 = scalar_select %p86, %s87, %s88
    %p92 = pneg %p86
    %p93 = scmp.eq.s32.totalorder %s9, 1
    %p94 = por %p92, %p93
    %p95 = scmp.ne.s32.totalorder %s87, %s90
    %p96 = scmp.eq.s32.totalorder %s9, 0
    %p97 = por %p95, %p96
    %p98 = scmp.ne.s32.totalorder %s87, %s90
    %p99 = scmp.eq.s32.totalorder %s14, 1
    %p100 = por %p98, %p99
    %p101 = scmp.ne.s32.totalorder %s90, %s91
    %p102 = scmp.eq.s32.totalorder %s14, 0
    %p103 = por %p101, %p102
    %p104 = scmp.ne.s32.totalorder %s90, %s91
    %p105 = scmp.eq.s32.totalorder %s15, 1
    %p106 = por %p104, %p105
    %p108 = scmp.ne.s32.totalorder %s91, %s107
    %p109 = scmp.eq.s32.totalorder %s15, 0
    %p110 = por %p108, %p109
    %p111 = scmp.le.s32.totalorder 1, %s9
    %p112 = scmp.lt.s32.totalorder %s9, 3
    %p113 = pnand %p111, %p112
    %p114 = pneg %p113
    // Predicated region
    $region9: #{tpu_custom_call.1} parent=5 // pred_check
      _
    $region10: #{tpu_custom_call.1} parent=5 // pred_check_branch
      %116 = sbr.rel (%p113) target = $region12
    $region11: #{tpu_custom_call.1} parent=5 // pred_region
      %s117 = ssub.s32 %s9, 1
      // Predicated region
      $region13: #{tpu_custom_call.1} parent=11 // pred_check
        %p118 = pneg %p56
      $region14: #{tpu_custom_call.1} parent=11 // pred_check_branch
        %120 = sbr.rel (%p118) target = $region16
      $region15: #{tpu_custom_call.1} parent=11 // pred_region
        _
      $region16: #{tpu_custom_call.1} parent=11 // pred_fallthru
        _
      // Predicated region
      $region17: #{tpu_custom_call.1} parent=11 // pred_check
        %p121 = pneg %p77
      $region18: #{tpu_custom_call.1} parent=11 // pred_check_branch
        %123 = sbr.rel (%p121) target = $region20
      $region19: #{tpu_custom_call.1} parent=11 // pred_region
        _
      $region20: #{tpu_custom_call.1} parent=11 // pred_fallthru
        _
    $region12: #{tpu_custom_call.1} parent=5 // pred_fallthru
      _
    %p124 = scmp.lt.s32.totalorder %s9, 2
    // Predicated region
    $region21: #{tpu_custom_call.1} parent=5 // pred_check
      %p125 = pneg %p124
    $region22: #{tpu_custom_call.1} parent=5 // pred_check_branch
      %127 = sbr.rel (%p125) target = $region24
    $region23: #{tpu_custom_call.1} parent=5 // pred_region
      // Predicated region
      $region25: #{tpu_custom_call.1} parent=23 // pred_check
        %p128 = pneg %p29
      $region26: #{tpu_custom_call.1} parent=23 // pred_check_branch
        %130 = sbr.rel (%p128) target = $region28
      $region27: #{tpu_custom_call.1} parent=23 // pred_region
        %p131 = scmp.lt.s32.totalorder %s9, 1
        %s132 = scalar_select %p131, %s9, 1
        %s133 = smul.addr %s132, 32
        %s134 = smul.addr %s133, 8
        %s135 = scalar_lea.vmem %s0, %s134
      $region28: #{tpu_custom_call.1} parent=23 // pred_fallthru
        _
    $region24: #{tpu_custom_call.1} parent=5 // pred_fallthru
      _
    %p136 = scmp.le.s32.totalorder 1, %s9
    %p137 = scmp.lt.s32.totalorder %s9, 3
    %p138 = pnand %p136, %p137
    %p139 = pneg %p138
    // Predicated region
    $region29: #{tpu_custom_call.1} parent=5 // pred_check
      _
    $region30: #{tpu_custom_call.1} parent=5 // pred_check_branch
      %141 = sbr.rel (%p138) target = $region32
    $region31: #{tpu_custom_call.1} parent=5 // pred_region
      %s142 = ssub.s32 %s9, 1
      %p143 = scmp.lt.s32.totalorder %s14, 1
      %s144 = scalar_select %p143, %s14, 1
      %s145 = smul.addr %s144, 32
      %s146 = smul.addr %s145, 8
      %s147 = scalar_lea.vmem %s0, %s146
      %p148 = pneg %p35
      %p149 = pneg %p32
      %p150 = pneg %p56
      %p151 = pneg %p53
      %p152 = pneg %p77
      %p153 = pneg %p74
      %p154 = pneg %p103
      %p155 = pneg %p100
      %p156 = scmp.lt.s32.totalorder %s14, 1
      %s157 = scalar_select %p156, %s14, 1
      %s158 = smul.addr %s157, 32
      %s159 = smul.addr %s158, 8
      %s160 = scalar_lea.vmem %s3, %s159
      %p161 = scmp.lt.s32.totalorder %s14, 1
      %s162 = scalar_select %p161, %s14, 1
      %s163 = smul.addr %s162, 32
      %s164 = smul.addr %s163, 8
      %s165 = scalar_lea.vmem %s0, %s164
      %p166 = scmp.lt.s32.totalorder %s14, 1
      %s167 = scalar_select %p166, %s14, 1
      %s168 = smul.addr %s167, 32
      %s169 = smul.addr %s168, 8
      %s170 = scalar_lea.vmem %s3, %s169
      %v171 = vld [vmem:[%s165] sm:$0xff]
      %v172 = vld [vmem:[%s165 + $0x8] sm:$0xff]
      %v173 = vld [vmem:[%s165 + $0x10] sm:$0xff]
      %v174 = vld [vmem:[%s165 + $0x18] sm:$0xff]
      %v175 = vld [vmem:[%s165 + $0x20] sm:$0xff]
      %v176 = vld [vmem:[%s165 + $0x28] sm:$0xff]
      %v177 = vld [vmem:[%s165 + $0x30] sm:$0xff]
      %v178 = vld [vmem:[%s165 + $0x38] sm:$0xff]
      %v179 = vld [vmem:[%s165 + $0x40] sm:$0xff]
      %v180 = vld [vmem:[%s165 + $0x48] sm:$0xff]
      %v181 = vld [vmem:[%s165 + $0x50] sm:$0xff]
      %v182 = vld [vmem:[%s165 + $0x58] sm:$0xff]
      %v183 = vld [vmem:[%s165 + $0x60] sm:$0xff]
      %v184 = vld [vmem:[%s165 + $0x68] sm:$0xff]
      %v185 = vld [vmem:[%s165 + $0x70] sm:$0xff]
      %v186 = vld [vmem:[%s165 + $0x78] sm:$0xff]
      %v187 = vld [vmem:[%s165 + $0x80] sm:$0xff]
      %v188 = vld [vmem:[%s165 + $0x88] sm:$0xff]
      %v189 = vld [vmem:[%s165 + $0x90] sm:$0xff]
      %v190 = vld [vmem:[%s165 + $0x98] sm:$0xff]
      %v191 = vld [vmem:[%s165 + $0xa0] sm:$0xff]
      %v192 = vld [vmem:[%s165 + $0xa8] sm:$0xff]
      %v193 = vld [vmem:[%s165 + $0xb0] sm:$0xff]
      %v194 = vld [vmem:[%s165 + $0xb8] sm:$0xff]
      %v195 = vld [vmem:[%s165 + $0xc0] sm:$0xff]
      %v196 = vld [vmem:[%s165 + $0xc8] sm:$0xff]
      %v197 = vld [vmem:[%s165 + $0xd0] sm:$0xff]
      %v198 = vld [vmem:[%s165 + $0xd8] sm:$0xff]
      %v199 = vld [vmem:[%s165 + $0xe0] sm:$0xff]
      %v200 = vld [vmem:[%s165 + $0xe8] sm:$0xff]
      %v201 = vld [vmem:[%s165 + $0xf0] sm:$0xff]
      %v202 = vld [vmem:[%s165 + $0xf8] sm:$0xff]
      %v219 = vrot.slane %v173, 1
      %v220 = vrot.slane %v171, 1
      %v221 = vrot.slane %v175, 1
      %v222 = vrot.slane %v177, 1
      %v223 = vrot.slane %v179, 1
      %v224 = vrot.slane %v181, 1
      %v225 = vrot.slane %v183, 1
      %v226 = vrot.slane %v185, 1
      %v227 = vrot.slane %v187, 1
      %v228 = vrot.slane %v189, 1
      %v229 = vrot.slane %v191, 1
      %v230 = vrot.slane %v193, 1
      %v231 = vrot.slane %v195, 1
      %v232 = vrot.slane %v197, 1
      %v233 = vrot.slane %v199, 1
      %v234 = vrot.slane %v201, 1
      %vm267 = vcmask 1040384
      %v268 = vrot.slane %v173, 7
      %v269 = vrot.slane %v174, 7
      %v270 = vsel %vm267, %v268, %v269
      %v271 = vrot.slane %v171, 7
      %v272 = vrot.slane %v172, 7
      %v273 = vsel %vm267, %v271, %v272
      %v274 = vrot.slane %v175, 7
      %v275 = vrot.slane %v176, 7
      %v276 = vsel %vm267, %v274, %v275
      %v277 = vrot.slane %v177, 7
      %v278 = vrot.slane %v178, 7
      %v279 = vsel %vm267, %v277, %v278
      %v280 = vrot.slane %v179, 7
      %v281 = vrot.slane %v180, 7
      %v282 = vsel %vm267, %v280, %v281
      %v283 = vrot.slane %v181, 7
      %v284 = vrot.slane %v182, 7
      %v285 = vsel %vm267, %v283, %v284
      %v286 = vrot.slane %v183, 7
      %v287 = vrot.slane %v184, 7
      %v288 = vsel %vm267, %v286, %v287
      %v289 = vrot.slane %v185, 7
      %v290 = vrot.slane %v186, 7
      %v291 = vsel %vm267, %v289, %v290
      %v292 = vrot.slane %v187, 7
      %v293 = vrot.slane %v188, 7
      %v294 = vsel %vm267, %v292, %v293
      %v295 = vrot.slane %v189, 7
      %v296 = vrot.slane %v190, 7
      %v297 = vsel %vm267, %v295, %v296
      %v298 = vrot.slane %v191, 7
      %v299 = vrot.slane %v192, 7
      %v300 = vsel %vm267, %v298, %v299
      %v301 = vrot.slane %v193, 7
      %v302 = vrot.slane %v194, 7
      %v303 = vsel %vm267, %v301, %v302
      %v304 = vrot.slane %v195, 7
      %v305 = vrot.slane %v196, 7
      %v306 = vsel %vm267, %v304, %v305
      %v307 = vrot.slane %v197, 7
      %v308 = vrot.slane %v198, 7
      %v309 = vsel %vm267, %v307, %v308
      %v310 = vrot.slane %v199, 7
      %v311 = vrot.slane %v200, 7
      %v312 = vsel %vm267, %v310, %v311
      %v313 = vrot.slane %v201, 7
      %v314 = vrot.slane %v202, 7
      %v315 = vsel %vm267, %v313, %v314
      %v348 = vsel %vm267, %v219, %v268
      %v349 = vsel %vm267, %v220, %v271
      %v350 = vsel %vm267, %v221, %v274
      %v351 = vsel %vm267, %v222, %v277
      %v352 = vsel %vm267, %v223, %v280
      %v353 = vsel %vm267, %v224, %v283
      %v354 = vsel %vm267, %v225, %v286
      %v355 = vsel %vm267, %v226, %v289
      %v356 = vsel %vm267, %v227, %v292
      %v357 = vsel %vm267, %v228, %v295
      %v358 = vsel %vm267, %v229, %v298
      %v359 = vsel %vm267, %v230, %v301
      %v360 = vsel %vm267, %v231, %v304
      %v361 = vsel %vm267, %v232, %v307
      %v362 = vsel %vm267, %v233, %v310
      %v363 = vsel %vm267, %v234, %v313
      %vm364 = vcmask 1046528
      %v365 = vrot.slane %v174, 1
      %v366 = vsel %vm364, %v219, %v365
      %v367 = vrot.slane %v172, 1
      %v368 = vsel %vm364, %v220, %v367
      %v369 = vrot.slane %v176, 1
      %v370 = vsel %vm364, %v221, %v369
      %v371 = vrot.slane %v178, 1
      %v372 = vsel %vm364, %v222, %v371
      %v373 = vrot.slane %v180, 1
      %v374 = vsel %vm364, %v223, %v373
      %v375 = vrot.slane %v182, 1
      %v376 = vsel %vm364, %v224, %v375
      %v377 = vrot.slane %v184, 1
      %v378 = vsel %vm364, %v225, %v377
      %v379 = vrot.slane %v186, 1
      %v380 = vsel %vm364, %v226, %v379
      %v381 = vrot.slane %v188, 1
      %v382 = vsel %vm364, %v227, %v381
      %v383 = vrot.slane %v190, 1
      %v384 = vsel %vm364, %v228, %v383
      %v385 = vrot.slane %v192, 1
      %v386 = vsel %vm364, %v229, %v385
      %v387 = vrot.slane %v194, 1
      %v388 = vsel %vm364, %v230, %v387
      %v389 = vrot.slane %v196, 1
      %v390 = vsel %vm364, %v231, %v389
      %v391 = vrot.slane %v198, 1
      %v392 = vsel %vm364, %v232, %v391
      %v393 = vrot.slane %v200, 1
      %v394 = vsel %vm364, %v233, %v393
      %v395 = vrot.slane %v202, 1
      %v396 = vsel %vm364, %v234, %v395
      %v429 = vsel %vm364, %v365, %v269
      %v430 = vsel %vm364, %v367, %v272
      %v431 = vsel %vm364, %v369, %v275
      %v432 = vsel %vm364, %v371, %v278
      %v433 = vsel %vm364, %v373, %v281
      %v434 = vsel %vm364, %v375, %v284
      %v435 = vsel %vm364, %v377, %v287
      %v436 = vsel %vm364, %v379, %v290
      %v437 = vsel %vm364, %v381, %v293
      %v438 = vsel %vm364, %v383, %v296
      %v439 = vsel %vm364, %v385, %v299
      %v440 = vsel %vm364, %v387, %v302
      %v441 = vsel %vm364, %v389, %v305
      %v442 = vsel %vm364, %v391, %v308
      %v443 = vsel %vm364, %v393, %v311
      %v444 = vsel %vm364, %v395, %v314
      %445 = vrot.lane.b32.xlu0 %v173, 4
      %v446 = vpop.permute.xlu0 %445
      %447 = vrot.lane.b32.xlu0 %v174, 4
      %v448 = vpop.permute.xlu0 %447
      %449 = vrot.lane.b32.xlu0 %v171, 4
      %v450 = vpop.permute.xlu0 %449
      %451 = vrot.lane.b32.xlu0 %v172, 4
      %v452 = vpop.permute.xlu0 %451
      %453 = vrot.lane.b32.xlu0 %v175, 4
      %v454 = vpop.permute.xlu0 %453
      %455 = vrot.lane.b32.xlu0 %v176, 4
      %v456 = vpop.permute.xlu0 %455
      %457 = vrot.lane.b32.xlu0 %v177, 4
      %v458 = vpop.permute.xlu0 %457
      %459 = vrot.lane.b32.xlu0 %v178, 4
      %v460 = vpop.permute.xlu0 %459
      %461 = vrot.lane.b32.xlu0 %v179, 4
      %v462 = vpop.permute.xlu0 %461
      %463 = vrot.lane.b32.xlu0 %v180, 4
      %v464 = vpop.permute.xlu0 %463
      %465 = vrot.lane.b32.xlu0 %v181, 4
      %v466 = vpop.permute.xlu0 %465
      %467 = vrot.lane.b32.xlu0 %v182, 4
      %v468 = vpop.permute.xlu0 %467
      %469 = vrot.lane.b32.xlu0 %v183, 4
      %v470 = vpop.permute.xlu0 %469
      %471 = vrot.lane.b32.xlu0 %v184, 4
      %v472 = vpop.permute.xlu0 %471
      %473 = vrot.lane.b32.xlu0 %v185, 4
      %v474 = vpop.permute.xlu0 %473
      %475 = vrot.lane.b32.xlu0 %v186, 4
      %v476 = vpop.permute.xlu0 %475
      %477 = vrot.lane.b32.xlu0 %v187, 4
      %v478 = vpop.permute.xlu0 %477
      %479 = vrot.lane.b32.xlu0 %v188, 4
      %v480 = vpop.permute.xlu0 %479
      %481 = vrot.lane.b32.xlu0 %v189, 4
      %v482 = vpop.permute.xlu0 %481
      %483 = vrot.lane.b32.xlu0 %v190, 4
      %v484 = vpop.permute.xlu0 %483
      %485 = vrot.lane.b32.xlu0 %v191, 4
      %v486 = vpop.permute.xlu0 %485
      %487 = vrot.lane.b32.xlu0 %v192, 4
      %v488 = vpop.permute.xlu0 %487
      %489 = vrot.lane.b32.xlu0 %v193, 4
      %v490 = vpop.permute.xlu0 %489
      %491 = vrot.lane.b32.xlu0 %v194, 4
      %v492 = vpop.permute.xlu0 %491
      %493 = vrot.lane.b32.xlu0 %v195, 4
      %v494 = vpop.permute.xlu0 %493
      %495 = vrot.lane.b32.xlu0 %v196, 4
      %v496 = vpop.permute.xlu0 %495
      %497 = vrot.lane.b32.xlu0 %v197, 4
      %v498 = vpop.permute.xlu0 %497
      %499 = vrot.lane.b32.xlu0 %v198, 4
      %v500 = vpop.permute.xlu0 %499
      %501 = vrot.lane.b32.xlu0 %v199, 4
      %v502 = vpop.permute.xlu0 %501
      %503 = vrot.lane.b32.xlu0 %v200, 4
      %v504 = vpop.permute.xlu0 %503
      %505 = vrot.lane.b32.xlu0 %v201, 4
      %v506 = vpop.permute.xlu0 %505
      %507 = vrot.lane.b32.xlu0 %v202, 4
      %v508 = vpop.permute.xlu0 %507
      %557 = vrot.lane.b32.xlu0 %v366, 8
      %v558 = vpop.permute.xlu0 %557
      %559 = vrot.lane.b32.xlu0 %v429, 8
      %v560 = vpop.permute.xlu0 %559
      %561 = vrot.lane.b32.xlu0 %v368, 8
      %v562 = vpop.permute.xlu0 %561
      %563 = vrot.lane.b32.xlu0 %v430, 8
      %v564 = vpop.permute.xlu0 %563
      %565 = vrot.lane.b32.xlu0 %v370, 8
      %v566 = vpop.permute.xlu0 %565
      %567 = vrot.lane.b32.xlu0 %v431, 8
      %v568 = vpop.permute.xlu0 %567
      %569 = vrot.lane.b32.xlu0 %v372, 8
      %v570 = vpop.permute.xlu0 %569
      %571 = vrot.lane.b32.xlu0 %v432, 8
      %v572 = vpop.permute.xlu0 %571
      %573 = vrot.lane.b32.xlu0 %v374, 8
      %v574 = vpop.permute.xlu0 %573
      %575 = vrot.lane.b32.xlu0 %v433, 8
      %v576 = vpop.permute.xlu0 %575
      %577 = vrot.lane.b32.xlu0 %v376, 8
      %v578 = vpop.permute.xlu0 %577
      %579 = vrot.lane.b32.xlu0 %v434, 8
      %v580 = vpop.permute.xlu0 %579
      %581 = vrot.lane.b32.xlu0 %v378, 8
      %v582 = vpop.permute.xlu0 %581
      %583 = vrot.lane.b32.xlu0 %v435, 8
      %v584 = vpop.permute.xlu0 %583
      %585 = vrot.lane.b32.xlu0 %v380, 8
      %v586 = vpop.permute.xlu0 %585
      %587 = vrot.lane.b32.xlu0 %v436, 8
      %v588 = vpop.permute.xlu0 %587
      %589 = vrot.lane.b32.xlu0 %v382, 8
      %v590 = vpop.permute.xlu0 %589
      %591 = vrot.lane.b32.xlu0 %v437, 8
      %v592 = vpop.permute.xlu0 %591
      %593 = vrot.lane.b32.xlu0 %v384, 8
      %v594 = vpop.permute.xlu0 %593
      %595 = vrot.lane.b32.xlu0 %v438, 8
      %v596 = vpop.permute.xlu0 %595
      %597 = vrot.lane.b32.xlu0 %v386, 8
      %v598 = vpop.permute.xlu0 %597
      %599 = vrot.lane.b32.xlu0 %v439, 8
      %v600 = vpop.permute.xlu0 %599
      %601 = vrot.lane.b32.xlu0 %v388, 8
      %v602 = vpop.permute.xlu0 %601
      %603 = vrot.lane.b32.xlu0 %v440, 8
      %v604 = vpop.permute.xlu0 %603
      %605 = vrot.lane.b32.xlu0 %v390, 8
      %v606 = vpop.permute.xlu0 %605
      %607 = vrot.lane.b32.xlu0 %v441, 8
      %v608 = vpop.permute.xlu0 %607
      %609 = vrot.lane.b32.xlu0 %v392, 8
      %v610 = vpop.permute.xlu0 %609
      %611 = vrot.lane.b32.xlu0 %v442, 8
      %v612 = vpop.permute.xlu0 %611
      %613 = vrot.lane.b32.xlu0 %v394, 8
      %v614 = vpop.permute.xlu0 %613
      %615 = vrot.lane.b32.xlu0 %v443, 8
      %v616 = vpop.permute.xlu0 %615
      %617 = vrot.lane.b32.xlu0 %v396, 8
      %v618 = vpop.permute.xlu0 %617
      %619 = vrot.lane.b32.xlu0 %v444, 8
      %v620 = vpop.permute.xlu0 %619
      %vm653 = vcmask 31744
      %v654 = vsel %vm653, %v348, %v446
      %v655 = vsel %vm653, %v270, %v448
      %v656 = vsel %vm653, %v349, %v450
      %v657 = vsel %vm653, %v273, %v452
      %v658 = vsel %vm653, %v350, %v454
      %v659 = vsel %vm653, %v276, %v456
      %v660 = vsel %vm653, %v351, %v458
      %v661 = vsel %vm653, %v279, %v460
      %v662 = vsel %vm653, %v352, %v462
      %v663 = vsel %vm653, %v282, %v464
      %v664 = vsel %vm653, %v353, %v466
      %v665 = vsel %vm653, %v285, %v468
      %v666 = vsel %vm653, %v354, %v470
      %v667 = vsel %vm653, %v288, %v472
      %v668 = vsel %vm653, %v355, %v474
      %v669 = vsel %vm653, %v291, %v476
      %v670 = vsel %vm653, %v356, %v478
      %v671 = vsel %vm653, %v294, %v480
      %v672 = vsel %vm653, %v357, %v482
      %v673 = vsel %vm653, %v297, %v484
      %v674 = vsel %vm653, %v358, %v486
      %v675 = vsel %vm653, %v300, %v488
      %v676 = vsel %vm653, %v359, %v490
      %v677 = vsel %vm653, %v303, %v492
      %v678 = vsel %vm653, %v360, %v494
      %v679 = vsel %vm653, %v306, %v496
      %v680 = vsel %vm653, %v361, %v498
      %v681 = vsel %vm653, %v309, %v500
      %v682 = vsel %vm653, %v362, %v502
      %v683 = vsel %vm653, %v312, %v504
      %v684 = vsel %vm653, %v363, %v506
      %v685 = vsel %vm653, %v315, %v508
      %vm686 = vcmask 64512
      %v687 = vsel %vm686, %v654, %v558
      %v688 = vsel %vm686, %v655, %v560
      %v689 = vsel %vm686, %v656, %v562
      %v690 = vsel %vm686, %v657, %v564
      %v691 = vsel %vm686, %v658, %v566
      %v692 = vsel %vm686, %v659, %v568
      %v693 = vsel %vm686, %v660, %v570
      %v694 = vsel %vm686, %v661, %v572
      %v695 = vsel %vm686, %v662, %v574
      %v696 = vsel %vm686, %v663, %v576
      %v697 = vsel %vm686, %v664, %v578
      %v698 = vsel %vm686, %v665, %v580
      %v699 = vsel %vm686, %v666, %v582
      %v700 = vsel %vm686, %v667, %v584
      %v701 = vsel %vm686, %v668, %v586
      %v702 = vsel %vm686, %v669, %v588
      %v703 = vsel %vm686, %v670, %v590
      %v704 = vsel %vm686, %v671, %v592
      %v705 = vsel %vm686, %v672, %v594
      %v706 = vsel %vm686, %v673, %v596
      %v707 = vsel %vm686, %v674, %v598
      %v708 = vsel %vm686, %v675, %v600
      %v709 = vsel %vm686, %v676, %v602
      %v710 = vsel %vm686, %v677, %v604
      %v711 = vsel %vm686, %v678, %v606
      %v712 = vsel %vm686, %v679, %v608
      %v713 = vsel %vm686, %v680, %v610
      %v714 = vsel %vm686, %v681, %v612
      %v715 = vsel %vm686, %v682, %v614
      %v716 = vsel %vm686, %v683, %v616
      %v717 = vsel %vm686, %v684, %v618
      %v718 = vsel %vm686, %v685, %v620
      %751 = vrot.lane.b32.xlu0 %v689, 12
      %v752 = vpop.permute.xlu0 %751
      %753 = vrot.lane.b32.xlu0 %v690, 12
      %v754 = vpop.permute.xlu0 %753
      %755 = vrot.lane.b32.xlu0 %v687, 12
      %v756 = vpop.permute.xlu0 %755
      %757 = vrot.lane.b32.xlu0 %v688, 12
      %v758 = vpop.permute.xlu0 %757
      %759 = vrot.lane.b32.xlu0 %v691, 12
      %v760 = vpop.permute.xlu0 %759
      %761 = vrot.lane.b32.xlu0 %v692, 12
      %v762 = vpop.permute.xlu0 %761
      %763 = vrot.lane.b32.xlu0 %v693, 12
      %v764 = vpop.permute.xlu0 %763
      %765 = vrot.lane.b32.xlu0 %v694, 12
      %v766 = vpop.permute.xlu0 %765
      %767 = vrot.lane.b32.xlu0 %v695, 12
      %v768 = vpop.permute.xlu0 %767
      %769 = vrot.lane.b32.xlu0 %v696, 12
      %v770 = vpop.permute.xlu0 %769
      %771 = vrot.lane.b32.xlu0 %v697, 12
      %v772 = vpop.permute.xlu0 %771
      %773 = vrot.lane.b32.xlu0 %v698, 12
      %v774 = vpop.permute.xlu0 %773
      %775 = vrot.lane.b32.xlu0 %v699, 12
      %v776 = vpop.permute.xlu0 %775
      %777 = vrot.lane.b32.xlu0 %v700, 12
      %v778 = vpop.permute.xlu0 %777
      %779 = vrot.lane.b32.xlu0 %v701, 12
      %v780 = vpop.permute.xlu0 %779
      %781 = vrot.lane.b32.xlu0 %v702, 12
      %v782 = vpop.permute.xlu0 %781
      %783 = vrot.lane.b32.xlu0 %v703, 12
      %v784 = vpop.permute.xlu0 %783
      %785 = vrot.lane.b32.xlu0 %v704, 12
      %v786 = vpop.permute.xlu0 %785
      %787 = vrot.lane.b32.xlu0 %v705, 12
      %v788 = vpop.permute.xlu0 %787
      %789 = vrot.lane.b32.xlu0 %v706, 12
      %v790 = vpop.permute.xlu0 %789
      %791 = vrot.lane.b32.xlu0 %v707, 12
      %v792 = vpop.permute.xlu0 %791
      %793 = vrot.lane.b32.xlu0 %v708, 12
      %v794 = vpop.permute.xlu0 %793
      %795 = vrot.lane.b32.xlu0 %v709, 12
      %v796 = vpop.permute.xlu0 %795
      %797 = vrot.lane.b32.xlu0 %v710, 12
      %v798 = vpop.permute.xlu0 %797
      %799 = vrot.lane.b32.xlu0 %v711, 12
      %v800 = vpop.permute.xlu0 %799
      %801 = vrot.lane.b32.xlu0 %v712, 12
      %v802 = vpop.permute.xlu0 %801
      %803 = vrot.lane.b32.xlu0 %v713, 12
      %v804 = vpop.permute.xlu0 %803
      %805 = vrot.lane.b32.xlu0 %v714, 12
      %v806 = vpop.permute.xlu0 %805
      %807 = vrot.lane.b32.xlu0 %v715, 12
      %v808 = vpop.permute.xlu0 %807
      %809 = vrot.lane.b32.xlu0 %v716, 12
      %v810 = vpop.permute.xlu0 %809
      %811 = vrot.lane.b32.xlu0 %v717, 12
      %v812 = vpop.permute.xlu0 %811
      %813 = vrot.lane.b32.xlu0 %v718, 12
      %v814 = vpop.permute.xlu0 %813
      %847 = vrot.lane.b32.xlu0 %v687, 24
      %v848 = vpop.permute.xlu0 %847
      %849 = vrot.lane.b32.xlu0 %v688, 24
      %v850 = vpop.permute.xlu0 %849
      %851 = vrot.lane.b32.xlu0 %v691, 24
      %v852 = vpop.permute.xlu0 %851
      %853 = vrot.lane.b32.xlu0 %v692, 24
      %v854 = vpop.permute.xlu0 %853
      %855 = vrot.lane.b32.xlu0 %v693, 24
      %v856 = vpop.permute.xlu0 %855
      %857 = vrot.lane.b32.xlu0 %v694, 24
      %v858 = vpop.permute.xlu0 %857
      %859 = vrot.lane.b32.xlu0 %v695, 24
      %v860 = vpop.permute.xlu0 %859
      %861 = vrot.lane.b32.xlu0 %v696, 24
      %v862 = vpop.permute.xlu0 %861
      %863 = vrot.lane.b32.xlu0 %v697, 24
      %v864 = vpop.permute.xlu0 %863
      %865 = vrot.lane.b32.xlu0 %v698, 24
      %v866 = vpop.permute.xlu0 %865
      %867 = vrot.lane.b32.xlu0 %v699, 24
      %v868 = vpop.permute.xlu0 %867
      %869 = vrot.lane.b32.xlu0 %v700, 24
      %v870 = vpop.permute.xlu0 %869
      %871 = vrot.lane.b32.xlu0 %v701, 24
      %v872 = vpop.permute.xlu0 %871
      %873 = vrot.lane.b32.xlu0 %v702, 24
      %v874 = vpop.permute.xlu0 %873
      %875 = vrot.lane.b32.xlu0 %v703, 24
      %v876 = vpop.permute.xlu0 %875
      %877 = vrot.lane.b32.xlu0 %v704, 24
      %v878 = vpop.permute.xlu0 %877
      %879 = vrot.lane.b32.xlu0 %v705, 24
      %v880 = vpop.permute.xlu0 %879
      %881 = vrot.lane.b32.xlu0 %v706, 24
      %v882 = vpop.permute.xlu0 %881
      %883 = vrot.lane.b32.xlu0 %v707, 24
      %v884 = vpop.permute.xlu0 %883
      %885 = vrot.lane.b32.xlu0 %v708, 24
      %v886 = vpop.permute.xlu0 %885
      %887 = vrot.lane.b32.xlu0 %v709, 24
      %v888 = vpop.permute.xlu0 %887
      %889 = vrot.lane.b32.xlu0 %v710, 24
      %v890 = vpop.permute.xlu0 %889
      %891 = vrot.lane.b32.xlu0 %v711, 24
      %v892 = vpop.permute.xlu0 %891
      %893 = vrot.lane.b32.xlu0 %v712, 24
      %v894 = vpop.permute.xlu0 %893
      %895 = vrot.lane.b32.xlu0 %v713, 24
      %v896 = vpop.permute.xlu0 %895
      %897 = vrot.lane.b32.xlu0 %v714, 24
      %v898 = vpop.permute.xlu0 %897
      %899 = vrot.lane.b32.xlu0 %v715, 24
      %v900 = vpop.permute.xlu0 %899
      %901 = vrot.lane.b32.xlu0 %v716, 24
      %v902 = vpop.permute.xlu0 %901
      %903 = vrot.lane.b32.xlu0 %v717, 24
      %v904 = vpop.permute.xlu0 %903
      %905 = vrot.lane.b32.xlu0 %v718, 24
      %v906 = vpop.permute.xlu0 %905
      %vm937 = vcmask 97280
      %v938 = vsel %vm937, %v687, %v752
      %v939 = vsel %vm937, %v688, %v754
      %v940 = vsel %vm937, %v689, %v756
      %v941 = vsel %vm937, %v690, %v758
      %v942 = vsel %vm937, %v687, %v760
      %v943 = vsel %vm937, %v688, %v762
      %v944 = vsel %vm937, %v691, %v764
      %v945 = vsel %vm937, %v692, %v766
      %v946 = vsel %vm937, %v693, %v768
      %v947 = vsel %vm937, %v694, %v770
      %v948 = vsel %vm937, %v695, %v772
      %v949 = vsel %vm937, %v696, %v774
      %v950 = vsel %vm937, %v697, %v776
      %v951 = vsel %vm937, %v698, %v778
      %v952 = vsel %vm937, %v699, %v780
      %v953 = vsel %vm937, %v700, %v782
      %v954 = vsel %vm937, %v701, %v784
      %v955 = vsel %vm937, %v702, %v786
      %v956 = vsel %vm937, %v703, %v788
      %v957 = vsel %vm937, %v704, %v790
      %v958 = vsel %vm937, %v705, %v792
      %v959 = vsel %vm937, %v706, %v794
      %v960 = vsel %vm937, %v707, %v796
      %v961 = vsel %vm937, %v708, %v798
      %v962 = vsel %vm937, %v709, %v800
      %v963 = vsel %vm937, %v710, %v802
      %v964 = vsel %vm937, %v711, %v804
      %v965 = vsel %vm937, %v712, %v806
      %v966 = vsel %vm937, %v713, %v808
      %v967 = vsel %vm937, %v714, %v810
      %v968 = vsel %vm937, %v715, %v812
      %v969 = vsel %vm937, %v716, %v814
      %vm970 = vcmask 195584
      %v971 = vsel %vm970, %v938, %v848
      %v972 = vsel %vm970, %v939, %v850
      %v973 = vsel %vm970, %v940, %v852
      %v974 = vsel %vm970, %v941, %v854
      %v975 = vsel %vm970, %v942, %v856
      %v976 = vsel %vm970, %v943, %v858
      %v977 = vsel %vm970, %v944, %v860
      %v978 = vsel %vm970, %v945, %v862
      %v979 = vsel %vm970, %v946, %v864
      %v980 = vsel %vm970, %v947, %v866
      %v981 = vsel %vm970, %v948, %v868
      %v982 = vsel %vm970, %v949, %v870
      %v983 = vsel %vm970, %v950, %v872
      %v984 = vsel %vm970, %v951, %v874
      %v985 = vsel %vm970, %v952, %v876
      %v986 = vsel %vm970, %v953, %v878
      %v987 = vsel %vm970, %v954, %v880
      %v988 = vsel %vm970, %v955, %v882
      %v989 = vsel %vm970, %v956, %v884
      %v990 = vsel %vm970, %v957, %v886
      %v991 = vsel %vm970, %v958, %v888
      %v992 = vsel %vm970, %v959, %v890
      %v993 = vsel %vm970, %v960, %v892
      %v994 = vsel %vm970, %v961, %v894
      %v995 = vsel %vm970, %v962, %v896
      %v996 = vsel %vm970, %v963, %v898
      %v997 = vsel %vm970, %v964, %v900
      %v998 = vsel %vm970, %v965, %v902
      %v999 = vsel %vm970, %v966, %v904
      %v1000 = vsel %vm970, %v967, %v906
      %v1001 = vsel %vm970, %v968, %v900
      %v1002 = vsel %vm970, %v969, %v902
      %vm1003 = vcmask 293888
      %1004 = vst.msk [vmem:[#allocation2] sm:$0xff] %vm1003, %v971
      %1005 = vst.msk [vmem:[#allocation2 + $0x8] sm:$0xff] %vm1003, %v972
      %1006 = vst.msk [vmem:[#allocation2 + $0x10] sm:$0xff] %vm1003, %v973
      %1007 = vst.msk [vmem:[#allocation2 + $0x18] sm:$0xff] %vm1003, %v974
      %1008 = vst.msk [vmem:[#allocation2 + $0x20] sm:$0xff] %vm1003, %v975
      %1009 = vst.msk [vmem:[#allocation2 + $0x28] sm:$0xff] %vm1003, %v976
      %1010 = vst.msk [vmem:[#allocation2 + $0x30] sm:$0xff] %vm1003, %v977
      %1011 = vst.msk [vmem:[#allocation2 + $0x38] sm:$0xff] %vm1003, %v978
      %1012 = vst.msk [vmem:[#allocation2 + $0x40] sm:$0xff] %vm1003, %v979
      %1013 = vst.msk [vmem:[#allocation2 + $0x48] sm:$0xff] %vm1003, %v980
      %1014 = vst.msk [vmem:[#allocation2 + $0x50] sm:$0xff] %vm1003, %v981
      %1015 = vst.msk [vmem:[#allocation2 + $0x58] sm:$0xff] %vm1003, %v982
      %1016 = vst.msk [vmem:[#allocation2 + $0x60] sm:$0xff] %vm1003, %v983
      %1017 = vst.msk [vmem:[#allocation2 + $0x68] sm:$0xff] %vm1003, %v984
      %1018 = vst.msk [vmem:[#allocation2 + $0x70] sm:$0xff] %vm1003, %v985
      %1019 = vst.msk [vmem:[#allocation2 + $0x78] sm:$0xff] %vm1003, %v986
      %1020 = vst.msk [vmem:[#allocation2 + $0x80] sm:$0xff] %vm1003, %v987
      %1021 = vst.msk [vmem:[#allocation2 + $0x88] sm:$0xff] %vm1003, %v988
      %1022 = vst.msk [vmem:[#allocation2 + $0x90] sm:$0xff] %vm1003, %v989
      %1023 = vst.msk [vmem:[#allocation2 + $0x98] sm:$0xff] %vm1003, %v990
      %1024 = vst.msk [vmem:[#allocation2 + $0xa0] sm:$0xff] %vm1003, %v991
      %1025 = vst.msk [vmem:[#allocation2 + $0xa8] sm:$0xff] %vm1003, %v992
      %1026 = vst.msk [vmem:[#allocation2 + $0xb0] sm:$0xff] %vm1003, %v993
      %1027 = vst.msk [vmem:[#allocation2 + $0xb8] sm:$0xff] %vm1003, %v994
      %1028 = vst.msk [vmem:[#allocation2 + $0xc0] sm:$0xff] %vm1003, %v995
      %1029 = vst.msk [vmem:[#allocation2 + $0xc8] sm:$0xff] %vm1003, %v996
      %1030 = vst.msk [vmem:[#allocation2 + $0xd0] sm:$0xff] %vm1003, %v997
      %1031 = vst.msk [vmem:[#allocation2 + $0xd8] sm:$0xff] %vm1003, %v998
      %1032 = vst.msk [vmem:[#allocation2 + $0xe0] sm:$0xff] %vm1003, %v999
      %1033 = vst.msk [vmem:[#allocation2 + $0xe8] sm:$0xff] %vm1003, %v1000
      %1034 = vst.msk [vmem:[#allocation2 + $0xf0] sm:$0xff] %vm1003, %v1001
      %1035 = vst.msk [vmem:[#allocation2 + $0xf8] sm:$0xff] %vm1003, %v1002
      %s1036 = smul.u32 0, 16
      %s1037 = scalar_lea.vmem [#allocation2], %s1036
      %v1038 = vld [vmem:[%s1037] sm:$0xff]
      %v1039 = vld [vmem:[%s1037 + $0x8] sm:$0xff]
      %v1040 = vld [vmem:[%s1037 + $0x10] sm:$0xff]
      %v1041 = vld [vmem:[%s1037 + $0x18] sm:$0xff]
      %v1042 = vld [vmem:[%s1037 + $0x20] sm:$0xff]
      %v1043 = vld [vmem:[%s1037 + $0x28] sm:$0xff]
      %v1044 = vld [vmem:[%s1037 + $0x30] sm:$0xff]
      %v1045 = vld [vmem:[%s1037 + $0x38] sm:$0xff]
      %v1046 = vld [vmem:[%s1037 + $0x40] sm:$0xff]
      %v1047 = vld [vmem:[%s1037 + $0x48] sm:$0xff]
      %v1048 = vld [vmem:[%s1037 + $0x50] sm:$0xff]
      %v1049 = vld [vmem:[%s1037 + $0x58] sm:$0xff]
      %v1050 = vld [vmem:[%s1037 + $0x60] sm:$0xff]
      %v1051 = vld [vmem:[%s1037 + $0x68] sm:$0xff]
      %v1052 = vld [vmem:[%s1037 + $0x70] sm:$0xff]
      %v1053 = vld [vmem:[%s1037 + $0x78] sm:$0xff]
      %v1054 = vld [vmem:[%s1037 + $0x80] sm:$0xff]
      %v1055 = vld [vmem:[%s1037 + $0x88] sm:$0xff]
      %v1056 = vld [vmem:[%s1037 + $0x90] sm:$0xff]
      %v1057 = vld [vmem:[%s1037 + $0x98] sm:$0xff]
      %v1058 = vld [vmem:[%s1037 + $0xa0] sm:$0xff]
      %v1059 = vld [vmem:[%s1037 + $0xa8] sm:$0xff]
      %v1060 = vld [vmem:[%s1037 + $0xb0] sm:$0xff]
      %v1061 = vld [vmem:[%s1037 + $0xb8] sm:$0xff]
      %v1062 = vld [vmem:[%s1037 + $0xc0] sm:$0xff]
      %v1063 = vld [vmem:[%s1037 + $0xc8] sm:$0xff]
      %v1064 = vld [vmem:[%s1037 + $0xd0] sm:$0xff]
      %v1065 = vld [vmem:[%s1037 + $0xd8] sm:$0xff]
      %v1066 = vld [vmem:[%s1037 + $0xe0] sm:$0xff]
      %v1067 = vld [vmem:[%s1037 + $0xe8] sm:$0xff]
      %v1068 = vld [vmem:[%s1037 + $0xf0] sm:$0xff]
      %v1069 = vld [vmem:[%s1037 + $0xf8] sm:$0xff]
      %v1070 = vld [vmem:[%s1] sm:$0xff]
      %v1071 = vld [vmem:[%s1 + $0x8] sm:$0xff]
      %v1072 = vld [vmem:[%s1 + $0x10] sm:$0xff]
      %v1073 = vld [vmem:[%s1 + $0x18] sm:$0xff]
      %v1074 = vld [vmem:[%s1 + $0x20] sm:$0xf]
      %v1076 = vsel %vm1003, %v1038, 0
      %v1079 = vsel %vm1003, %v1039, 0
      %v1082 = vsel %vm1003, %v1040, 0
      %v1085 = vsel %vm1003, %v1041, 0
      %v1088 = vsel %vm1003, %v1042, 0
      %v1091 = vsel %vm1003, %v1043, 0
      %v1094 = vsel %vm1003, %v1044, 0
      %v1097 = vsel %vm1003, %v1045, 0
      %v1100 = vsel %vm1003, %v1046, 0
      %v1103 = vsel %vm1003, %v1047, 0
      %v1106 = vsel %vm1003, %v1048, 0
      %v1109 = vsel %vm1003, %v1049, 0
      %v1112 = vsel %vm1003, %v1050, 0
      %v1115 = vsel %vm1003, %v1051, 0
      %v1118 = vsel %vm1003, %v1052, 0
      %v1121 = vsel %vm1003, %v1053, 0
      %v1124 = vsel %vm1003, %v1054, 0
      %v1127 = vsel %vm1003, %v1055, 0
      %v1130 = vsel %vm1003, %v1056, 0
      %v1133 = vsel %vm1003, %v1057, 0
      %v1136 = vsel %vm1003, %v1058, 0
      %v1139 = vsel %vm1003, %v1059, 0
      %v1142 = vsel %vm1003, %v1060, 0
      %v1145 = vsel %vm1003, %v1061, 0
      %v1148 = vsel %vm1003, %v1062, 0
      %v1151 = vsel %vm1003, %v1063, 0
      %v1154 = vsel %vm1003, %v1064, 0
      %v1157 = vsel %vm1003, %v1065, 0
      %v1160 = vsel %vm1003, %v1066, 0
      %v1163 = vsel %vm1003, %v1067, 0
      %v1166 = vsel %vm1003, %v1068, 0
      %v1169 = vsel %vm1003, %v1069, 0
      %vm1171 = vcmask 1043456
      %v1173 = vsel %vm1171, %v1074, 0
      %1175 = vmatprep.subr.mxu0 0.0
      %1176 = vmatpush1.msra.mxu0 0.0
      %1177 = vmatprep.subr.mxu0 0.0
      %1178 = vmatpush1.msra.mxu0 0.0
      %1179 = vmatprep.subr.mxu0 0.0
      %1180 = vmatpush1.msra.mxu0 0.0
      %1181 = vmatprep.subr.mxu0 0.0
      %1182 = vmatpush1.msra.mxu0 0.0
      %1183 = vmatprep.subr.mxu0 0.0
      %1184 = vmatpush1.msra.mxu0 0.0
      %1185 = vmatprep.subr.mxu0 0.0
      %1186 = vmatpush1.msra.mxu0 0.0
      %1187 = vmatprep.subr.mxu0 0.0
      %1188 = vmatpush1.msra.mxu0 0.0
      %1189 = vmatprep.subr.mxu0 0.0
      %1190 = vmatpush1.msra.mxu0 0.0
      %1191 = vmatprep.subr.mxu0 0.0
      %1192 = vmatpush1.msra.mxu0 0.0
      %1193 = vmatprep.subr.mxu0 0.0
      %1194 = vmatpush1.msra.mxu0 0.0
      %1195 = vmatprep.subr.mxu0 0.0
      %1196 = vmatpush1.msra.mxu0 0.0
      %1197 = vmatprep.subr.mxu0 0.0
      %1198 = vmatpush1.msra.mxu0 %v1173
      %1199 = vmatprep.subr.mxu0 0.0
      %1200 = vmatpush1.msra.mxu0 %v1073
      %1201 = vmatprep.subr.mxu0 0.0
      %1202 = vmatpush1.msra.mxu0 %v1072
      %1203 = vmatprep.subr.mxu0 0.0
      %1204 = vmatpush1.msra.mxu0 %v1071
      %1205 = vmatprep.subr.mxu0 0.0
      %1206 = vmatpush1.msra.mxu0 %v1070
      %1207 = vmatprep.subr.mxu0 0.0
      %1208 = vmatpush2.msra.mxu0 0.0
      %1209 = vmatprep.subr.mxu0 0.0
      %1210 = vmatpush2.msra.mxu0 0.0
      %1211 = vmatprep.subr.mxu0 0.0
      %1212 = vmatpush2.msra.mxu0 0.0
      %1213 = vmatprep.subr.mxu0 0.0
      %1214 = vmatpush2.msra.mxu0 0.0
      %1215 = vmatprep.subr.mxu0 0.0
      %1216 = vmatpush2.msra.mxu0 0.0
      %1217 = vmatprep.subr.mxu0 0.0
      %1218 = vmatpush2.msra.mxu0 0.0
      %1219 = vmatprep.subr.mxu0 0.0
      %1220 = vmatpush2.msra.mxu0 0.0
      %1221 = vmatprep.subr.mxu0 0.0
      %1222 = vmatpush2.msra.mxu0 0.0
      %1223 = vmatprep.subr.mxu0 0.0
      %1224 = vmatpush2.msra.mxu0 0.0
      %1225 = vmatprep.subr.mxu0 0.0
      %1226 = vmatpush2.msra.mxu0 0.0
      %1227 = vmatprep.subr.mxu0 0.0
      %1228 = vmatpush2.msra.mxu0 0.0
      %1229 = vmatprep.subr.mxu0 0.0
      %1230 = vmatpush2.msra.mxu0 0.0
      %1231 = vmatprep.subr.mxu0 0.0
      %1232 = vmatpush2.msra.mxu0 0.0
      %1233 = vmatprep.subr.mxu0 0.0
      %1234 = vmatpush2.msra.mxu0 0.0
      %1235 = vmatprep.subr.mxu0 0.0
      %1236 = vmatpush2.msra.mxu0 0.0
      %1237 = vmatprep.subr.mxu0 0.0
      %1238 = vmatpush2.msra.mxu0 0.0
      %1239 = vmatprep.mubr.f32.mxu0 0.0
      %1240 = vmatmul.mubr.f32.gmra.mxu0 %v1076
      %v1241 = vpop.f32.mrf.mxu0
      %v1242 = vadd.f32 0.0, %v1241
      %v1243 = vpop.f32.mrf.mxu0
      %1244 = vmatprep.mubr.f32.mxu0 0.0
      %1245 = vmatmul.mubr.f32.gmra.mxu0 %v1079
      %v1246 = vpop.f32.mrf.mxu0
      %v1247 = vadd.f32 0.0, %v1246
      %v1248 = vpop.f32.mrf.mxu0
      %1249 = vmatprep.mubr.f32.mxu0 0.0
      %1250 = vmatmul.mubr.f32.gmra.mxu0 %v1082
      %v1251 = vpop.f32.mrf.mxu0
      %v1252 = vadd.f32 0.0, %v1251
      %v1253 = vpop.f32.mrf.mxu0
      %1254 = vmatprep.mubr.f32.mxu0 0.0
      %1255 = vmatmul.mubr.f32.gmra.mxu0 %v1085
      %v1256 = vpop.f32.mrf.mxu0
      %v1257 = vadd.f32 0.0, %v1256
      %v1258 = vpop.f32.mrf.mxu0
      %1259 = vmatprep.mubr.f32.mxu0 0.0
      %1260 = vmatmul.mubr.f32.gmra.mxu0 %v1088
      %v1261 = vpop.f32.mrf.mxu0
      %v1262 = vadd.f32 0.0, %v1261
      %v1263 = vpop.f32.mrf.mxu0
      %1264 = vmatprep.mubr.f32.mxu0 0.0
      %1265 = vmatmul.mubr.f32.gmra.mxu0 %v1091
      %v1266 = vpop.f32.mrf.mxu0
      %v1267 = vadd.f32 0.0, %v1266
      %v1268 = vpop.f32.mrf.mxu0
      %1269 = vmatprep.mubr.f32.mxu0 0.0
      %1270 = vmatmul.mubr.f32.gmra.mxu0 %v1094
      %v1271 = vpop.f32.mrf.mxu0
      %v1272 = vadd.f32 0.0, %v1271
      %v1273 = vpop.f32.mrf.mxu0
      %1274 = vmatprep.mubr.f32.mxu0 0.0
      %1275 = vmatmul.mubr.f32.gmra.mxu0 %v1097
      %v1276 = vpop.f32.mrf.mxu0
      %v1277 = vadd.f32 0.0, %v1276
      %v1278 = vpop.f32.mrf.mxu0
      %1279 = vmatprep.mubr.f32.mxu0 0.0
      %1280 = vmatmul.mubr.f32.gmra.mxu0 %v1100
      %v1281 = vpop.f32.mrf.mxu0
      %v1282 = vadd.f32 0.0, %v1281
      %v1283 = vpop.f32.mrf.mxu0
      %1284 = vmatprep.mubr.f32.mxu0 0.0
      %1285 = vmatmul.mubr.f32.gmra.mxu0 %v1103
      %v1286 = vpop.f32.mrf.mxu0
      %v1287 = vadd.f32 0.0, %v1286
      %v1288 = vpop.f32.mrf.mxu0
      %1289 = vmatprep.mubr.f32.mxu0 0.0
      %1290 = vmatmul.mubr.f32.gmra.mxu0 %v1106
      %v1291 = vpop.f32.mrf.mxu0
      %v1292 = vadd.f32 0.0, %v1291
      %v1293 = vpop.f32.mrf.mxu0
      %1294 = vmatprep.mubr.f32.mxu0 0.0
      %1295 = vmatmul.mubr.f32.gmra.mxu0 %v1109
      %v1296 = vpop.f32.mrf.mxu0
      %v1297 = vadd.f32 0.0, %v1296
      %v1298 = vpop.f32.mrf.mxu0
      %1299 = vmatprep.mubr.f32.mxu0 0.0
      %1300 = vmatmul.mubr.f32.gmra.mxu0 %v1112
      %v1301 = vpop.f32.mrf.mxu0
      %v1302 = vadd.f32 0.0, %v1301
      %v1303 = vpop.f32.mrf.mxu0
      %1304 = vmatprep.mubr.f32.mxu0 0.0
      %1305 = vmatmul.mubr.f32.gmra.mxu0 %v1115
      %v1306 = vpop.f32.mrf.mxu0
      %v1307 = vadd.f32 0.0, %v1306
      %v1308 = vpop.f32.mrf.mxu0
      %1309 = vmatprep.mubr.f32.mxu0 0.0
      %1310 = vmatmul.mubr.f32.gmra.mxu0 %v1118
      %v1311 = vpop.f32.mrf.mxu0
      %v1312 = vadd.f32 0.0, %v1311
      %v1313 = vpop.f32.mrf.mxu0
      %1314 = vmatprep.mubr.f32.mxu0 0.0
      %1315 = vmatmul.mubr.f32.gmra.mxu0 %v1121
      %v1316 = vpop.f32.mrf.mxu0
      %v1317 = vadd.f32 0.0, %v1316
      %v1318 = vpop.f32.mrf.mxu0
      %1319 = vmatprep.mubr.f32.mxu0 0.0
      %1320 = vmatmul.mubr.f32.gmra.mxu0 %v1124
      %v1321 = vpop.f32.mrf.mxu0
      %v1322 = vadd.f32 0.0, %v1321
      %v1323 = vpop.f32.mrf.mxu0
      %1324 = vmatprep.mubr.f32.mxu0 0.0
      %1325 = vmatmul.mubr.f32.gmra.mxu0 %v1127
      %v1326 = vpop.f32.mrf.mxu0
      %v1327 = vadd.f32 0.0, %v1326
      %v1328 = vpop.f32.mrf.mxu0
      %1329 = vmatprep.mubr.f32.mxu0 0.0
      %1330 = vmatmul.mubr.f32.gmra.mxu0 %v1130
      %v1331 = vpop.f32.mrf.mxu0
      %v1332 = vadd.f32 0.0, %v1331
      %v1333 = vpop.f32.mrf.mxu0
      %1334 = vmatprep.mubr.f32.mxu0 0.0
      %1335 = vmatmul.mubr.f32.gmra.mxu0 %v1133
      %v1336 = vpop.f32.mrf.mxu0
      %v1337 = vadd.f32 0.0, %v1336
      %v1338 = vpop.f32.mrf.mxu0
      %1339 = vmatprep.mubr.f32.mxu0 0.0
      %1340 = vmatmul.mubr.f32.gmra.mxu0 %v1136
      %v1341 = vpop.f32.mrf.mxu0
      %v1342 = vadd.f32 0.0, %v1341
      %v1343 = vpop.f32.mrf.mxu0
      %1344 = vmatprep.mubr.f32.mxu0 0.0
      %1345 = vmatmul.mubr.f32.gmra.mxu0 %v1139
      %v1346 = vpop.f32.mrf.mxu0
      %v1347 = vadd.f32 0.0, %v1346
      %v1348 = vpop.f32.mrf.mxu0
      %1349 = vmatprep.mubr.f32.mxu0 0.0
      %1350 = vmatmul.mubr.f32.gmra.mxu0 %v1142
      %v1351 = vpop.f32.mrf.mxu0
      %v1352 = vadd.f32 0.0, %v1351
      %v1353 = vpop.f32.mrf.mxu0
      %1354 = vmatprep.mubr.f32.mxu0 0.0
      %1355 = vmatmul.mubr.f32.gmra.mxu0 %v1145
      %v1356 = vpop.f32.mrf.mxu0
      %v1357 = vadd.f32 0.0, %v1356
      %v1358 = vpop.f32.mrf.mxu0
      %1359 = vmatprep.mubr.f32.mxu0 0.0
      %1360 = vmatmul.mubr.f32.gmra.mxu0 %v1148
      %v1361 = vpop.f32.mrf.mxu0
      %v1362 = vadd.f32 0.0, %v1361
      %v1363 = vpop.f32.mrf.mxu0
      %1364 = vmatprep.mubr.f32.mxu0 0.0
      %1365 = vmatmul.mubr.f32.gmra.mxu0 %v1151
      %v1366 = vpop.f32.mrf.mxu0
      %v1367 = vadd.f32 0.0, %v1366
      %v1368 = vpop.f32.mrf.mxu0
      %1369 = vmatprep.mubr.f32.mxu0 0.0
      %1370 = vmatmul.mubr.f32.gmra.mxu0 %v1154
      %v1371 = vpop.f32.mrf.mxu0
      %v1372 = vadd.f32 0.0, %v1371
      %v1373 = vpop.f32.mrf.mxu0
      %1374 = vmatprep.mubr.f32.mxu0 0.0
      %1375 = vmatmul.mubr.f32.gmra.mxu0 %v1157
      %v1376 = vpop.f32.mrf.mxu0
      %v1377 = vadd.f32 0.0, %v1376
      %v1378 = vpop.f32.mrf.mxu0
      %1379 = vmatprep.mubr.f32.mxu0 0.0
      %1380 = vmatmul.mubr.f32.gmra.mxu0 %v1160
      %v1381 = vpop.f32.mrf.mxu0
      %v1382 = vadd.f32 0.0, %v1381
      %v1383 = vpop.f32.mrf.mxu0
      %1384 = vmatprep.mubr.f32.mxu0 0.0
      %1385 = vmatmul.mubr.f32.gmra.mxu0 %v1163
      %v1386 = vpop.f32.mrf.mxu0
      %v1387 = vadd.f32 0.0, %v1386
      %v1388 = vpop.f32.mrf.mxu0
      %1389 = vmatprep.mubr.f32.mxu0 0.0
      %1390 = vmatmul.mubr.f32.gmra.mxu0 %v1166
      %v1391 = vpop.f32.mrf.mxu0
      %v1392 = vadd.f32 0.0, %v1391
      %v1393 = vpop.f32.mrf.mxu0
      %1394 = vmatprep.mubr.f32.mxu0 0.0
      %1395 = vmatmul.mubr.f32.gmra.mxu0 %v1169
      %v1396 = vpop.f32.mrf.mxu0
      %v1397 = vadd.f32 0.0, %v1396
      %v1398 = vpop.f32.mrf.mxu0
      %1399 = vdwg.mxu0
      %s1400 = scalar_lea.vmem [#allocation3], %s1036
      %1401 = vst.msk [vmem:[%s1400] sm:$0xff] %vm653, %v1242
      %1402 = vst.msk [vmem:[%s1400 + $0x8] sm:$0xff] %vm653, %v1247
      %1403 = vst.msk [vmem:[%s1400 + $0x10] sm:$0xff] %vm653, %v1252
      %1404 = vst.msk [vmem:[%s1400 + $0x18] sm:$0xff] %vm653, %v1257
      %1405 = vst.msk [vmem:[%s1400 + $0x20] sm:$0xff] %vm653, %v1262
      %1406 = vst.msk [vmem:[%s1400 + $0x28] sm:$0xff] %vm653, %v1267
      %1407 = vst.msk [vmem:[%s1400 + $0x30] sm:$0xff] %vm653, %v1272
      %1408 = vst.msk [vmem:[%s1400 + $0x38] sm:$0xff] %vm653, %v1277
      %1409 = vst.msk [vmem:[%s1400 + $0x40] sm:$0xff] %vm653, %v1282
      %1410 = vst.msk [vmem:[%s1400 + $0x48] sm:$0xff] %vm653, %v1287
      %1411 = vst.msk [vmem:[%s1400 + $0x50] sm:$0xff] %vm653, %v1292
      %1412 = vst.msk [vmem:[%s1400 + $0x58] sm:$0xff] %vm653, %v1297
      %1413 = vst.msk [vmem:[%s1400 + $0x60] sm:$0xff] %vm653, %v1302
      %1414 = vst.msk [vmem:[%s1400 + $0x68] sm:$0xff] %vm653, %v1307
      %1415 = vst.msk [vmem:[%s1400 + $0x70] sm:$0xff] %vm653, %v1312
      %1416 = vst.msk [vmem:[%s1400 + $0x78] sm:$0xff] %vm653, %v1317
      %1417 = vst.msk [vmem:[%s1400 + $0x80] sm:$0xff] %vm653, %v1322
      %1418 = vst.msk [vmem:[%s1400 + $0x88] sm:$0xff] %vm653, %v1327
      %1419 = vst.msk [vmem:[%s1400 + $0x90] sm:$0xff] %vm653, %v1332
      %1420 = vst.msk [vmem:[%s1400 + $0x98] sm:$0xff] %vm653, %v1337
      %1421 = vst.msk [vmem:[%s1400 + $0xa0] sm:$0xff] %vm653, %v1342
      %1422 = vst.msk [vmem:[%s1400 + $0xa8] sm:$0xff] %vm653, %v1347
      %1423 = vst.msk [vmem:[%s1400 + $0xb0] sm:$0xff] %vm653, %v1352
      %1424 = vst.msk [vmem:[%s1400 + $0xb8] sm:$0xff] %vm653, %v1357
      %1425 = vst.msk [vmem:[%s1400 + $0xc0] sm:$0xff] %vm653, %v1362
      %1426 = vst.msk [vmem:[%s1400 + $0xc8] sm:$0xff] %vm653, %v1367
      %1427 = vst.msk [vmem:[%s1400 + $0xd0] sm:$0xff] %vm653, %v1372
      %1428 = vst.msk [vmem:[%s1400 + $0xd8] sm:$0xff] %vm653, %v1377
      %1429 = vst.msk [vmem:[%s1400 + $0xe0] sm:$0xff] %vm653, %v1382
      %1430 = vst.msk [vmem:[%s1400 + $0xe8] sm:$0xff] %vm653, %v1387
      %1431 = vst.msk [vmem:[%s1400 + $0xf0] sm:$0xff] %vm653, %v1392
      %1432 = vst.msk [vmem:[%s1400 + $0xf8] sm:$0xff] %vm653, %v1397
      %v1433 = vsel %vm653, %v1242, 0.0
      %v1434 = vsel %vm653, %v1247, 0.0
      %v1435 = vadd.f32 %v1433, %v1434
      %v1436 = vsel %vm653, %v1252, 0.0
      %v1437 = vadd.f32 %v1435, %v1436
      %v1438 = vsel %vm653, %v1257, 0.0
      %v1439 = vadd.f32 %v1437, %v1438
      %v1440 = vsel %vm653, %v1262, 0.0
      %v1441 = vadd.f32 %v1439, %v1440
      %v1442 = vsel %vm653, %v1267, 0.0
      %v1443 = vadd.f32 %v1441, %v1442
      %v1444 = vsel %vm653, %v1272, 0.0
      %v1445 = vadd.f32 %v1443, %v1444
      %v1446 = vsel %vm653, %v1277, 0.0
      %v1447 = vadd.f32 %v1445, %v1446
      %v1448 = vsel %vm653, %v1282, 0.0
      %v1449 = vadd.f32 %v1447, %v1448
      %v1450 = vsel %vm653, %v1287, 0.0
      %v1451 = vadd.f32 %v1449, %v1450
      %v1452 = vsel %vm653, %v1292, 0.0
      %v1453 = vadd.f32 %v1451, %v1452
      %v1454 = vsel %vm653, %v1297, 0.0
      %v1455 = vadd.f32 %v1453, %v1454
      %v1456 = vsel %vm653, %v1302, 0.0
      %v1457 = vadd.f32 %v1455, %v1456
      %v1458 = vsel %vm653, %v1307, 0.0
      %v1459 = vadd.f32 %v1457, %v1458
      %v1460 = vsel %vm653, %v1312, 0.0
      %v1461 = vadd.f32 %v1459, %v1460
      %v1462 = vsel %vm653, %v1317, 0.0
      %v1463 = vadd.f32 %v1461, %v1462
      %v1464 = vsel %vm653, %v1322, 0.0
      %v1465 = vadd.f32 %v1463, %v1464
      %v1466 = vsel %vm653, %v1327, 0.0
      %v1467 = vadd.f32 %v1465, %v1466
      %v1468 = vsel %vm653, %v1332, 0.0
      %v1469 = vadd.f32 %v1467, %v1468
      %v1470 = vsel %vm653, %v1337, 0.0
      %v1471 = vadd.f32 %v1469, %v1470
      %v1472 = vsel %vm653, %v1342, 0.0
      %v1473 = vadd.f32 %v1471, %v1472
      %v1474 = vsel %vm653, %v1347, 0.0
      %v1475 = vadd.f32 %v1473, %v1474
      %v1476 = vsel %vm653, %v1352, 0.0
      %v1477 = vadd.f32 %v1475, %v1476
      %v1478 = vsel %vm653, %v1357, 0.0
      %v1479 = vadd.f32 %v1477, %v1478
      %v1480 = vsel %vm653, %v1362, 0.0
      %v1481 = vadd.f32 %v1479, %v1480
      %v1482 = vsel %vm653, %v1367, 0.0
      %v1483 = vadd.f32 %v1481, %v1482
      %v1484 = vsel %vm653, %v1372, 0.0
      %v1485 = vadd.f32 %v1483, %v1484
      %v1486 = vsel %vm653, %v1377, 0.0
      %v1487 = vadd.f32 %v1485, %v1486
      %v1488 = vsel %vm653, %v1382, 0.0
      %v1489 = vadd.f32 %v1487, %v1488
      %v1490 = vsel %vm653, %v1387, 0.0
      %v1491 = vadd.f32 %v1489, %v1490
      %v1492 = vsel %vm653, %v1392, 0.0
      %v1493 = vadd.f32 %v1491, %v1492
      %v1494 = vsel %vm653, %v1397, 0.0
      %v1495 = vadd.f32 %v1493, %v1494
      %v1496 = vrot.slane %v1495, 4
      %v1497 = vadd.f32 %v1495, %v1496
      %v1498 = vrot.slane %v1497, 2
      %v1499 = vadd.f32 %v1497, %v1498
      %v1500 = vrot.slane %v1499, 1
      %v1501 = vadd.f32 %v1499, %v1500
      %v1502 = vadd.f32 %v1501, 0.0
      %v1503 = vmul.f32 %v1242, %v1242
      %v1504 = vmul.f32 %v1247, %v1247
      %v1505 = vmul.f32 %v1252, %v1252
      %v1506 = vmul.f32 %v1257, %v1257
      %v1507 = vmul.f32 %v1262, %v1262
      %v1508 = vmul.f32 %v1267, %v1267
      %v1509 = vmul.f32 %v1272, %v1272
      %v1510 = vmul.f32 %v1277, %v1277
      %v1511 = vmul.f32 %v1282, %v1282
      %v1512 = vmul.f32 %v1287, %v1287
      %v1513 = vmul.f32 %v1292, %v1292
      %v1514 = vmul.f32 %v1297, %v1297
      %v1515 = vmul.f32 %v1302, %v1302
      %v1516 = vmul.f32 %v1307, %v1307
      %v1517 = vmul.f32 %v1312, %v1312
      %v1518 = vmul.f32 %v1317, %v1317
      %v1519 = vmul.f32 %v1322, %v1322
      %v1520 = vmul.f32 %v1327, %v1327
      %v1521 = vmul.f32 %v1332, %v1332
      %v1522 = vmul.f32 %v1337, %v1337
      %v1523 = vmul.f32 %v1342, %v1342
      %v1524 = vmul.f32 %v1347, %v1347
      %v1525 = vmul.f32 %v1352, %v1352
      %v1526 = vmul.f32 %v1357, %v1357
      %v1527 = vmul.f32 %v1362, %v1362
      %v1528 = vmul.f32 %v1367, %v1367
      %v1529 = vmul.f32 %v1372, %v1372
      %v1530 = vmul.f32 %v1377, %v1377
      %v1531 = vmul.f32 %v1382, %v1382
      %v1532 = vmul.f32 %v1387, %v1387
      %v1533 = vmul.f32 %v1392, %v1392
      %v1534 = vmul.f32 %v1397, %v1397
      %v1535 = vsel %vm653, %v1503, 0.0
      %v1536 = vsel %vm653, %v1504, 0.0
      %v1537 = vadd.f32 %v1535, %v1536
      %v1538 = vsel %vm653, %v1505, 0.0
      %v1539 = vadd.f32 %v1537, %v1538
      %v1540 = vsel %vm653, %v1506, 0.0
      %v1541 = vadd.f32 %v1539, %v1540
      %v1542 = vsel %vm653, %v1507, 0.0
      %v1543 = vadd.f32 %v1541, %v1542
      %v1544 = vsel %vm653, %v1508, 0.0
      %v1545 = vadd.f32 %v1543, %v1544
      %v1546 = vsel %vm653, %v1509, 0.0
      %v1547 = vadd.f32 %v1545, %v1546
      %v1548 = vsel %vm653, %v1510, 0.0
      %v1549 = vadd.f32 %v1547, %v1548
      %v1550 = vsel %vm653, %v1511, 0.0
      %v1551 = vadd.f32 %v1549, %v1550
      %v1552 = vsel %vm653, %v1512, 0.0
      %v1553 = vadd.f32 %v1551, %v1552
      %v1554 = vsel %vm653, %v1513, 0.0
      %v1555 = vadd.f32 %v1553, %v1554
      %v1556 = vsel %vm653, %v1514, 0.0
      %v1557 = vadd.f32 %v1555, %v1556
      %v1558 = vsel %vm653, %v1515, 0.0
      %v1559 = vadd.f32 %v1557, %v1558
      %v1560 = vsel %vm653, %v1516, 0.0
      %v1561 = vadd.f32 %v1559, %v1560
      %v1562 = vsel %vm653, %v1517, 0.0
      %v1563 = vadd.f32 %v1561, %v1562
      %v1564 = vsel %vm653, %v1518, 0.0
      %v1565 = vadd.f32 %v1563, %v1564
      %v1566 = vsel %vm653, %v1519, 0.0
      %v1567 = vadd.f32 %v1565, %v1566
      %v1568 = vsel %vm653, %v1520, 0.0
      %v1569 = vadd.f32 %v1567, %v1568
      %v1570 = vsel %vm653, %v1521, 0.0
      %v1571 = vadd.f32 %v1569, %v1570
      %v1572 = vsel %vm653, %v1522, 0.0
      %v1573 = vadd.f32 %v1571, %v1572
      %v1574 = vsel %vm653, %v1523, 0.0
      %v1575 = vadd.f32 %v1573, %v1574
      %v1576 = vsel %vm653, %v1524, 0.0
      %v1577 = vadd.f32 %v1575, %v1576
      %v1578 = vsel %vm653, %v1525, 0.0
      %v1579 = vadd.f32 %v1577, %v1578
      %v1580 = vsel %vm653, %v1526, 0.0
      %v1581 = vadd.f32 %v1579, %v1580
      %v1582 = vsel %vm653, %v1527, 0.0
      %v1583 = vadd.f32 %v1581, %v1582
      %v1584 = vsel %vm653, %v1528, 0.0
      %v1585 = vadd.f32 %v1583, %v1584
      %v1586 = vsel %vm653, %v1529, 0.0
      %v1587 = vadd.f32 %v1585, %v1586
      %v1588 = vsel %vm653, %v1530, 0.0
      %v1589 = vadd.f32 %v1587, %v1588
      %v1590 = vsel %vm653, %v1531, 0.0
      %v1591 = vadd.f32 %v1589, %v1590
      %v1592 = vsel %vm653, %v1532, 0.0
      %v1593 = vadd.f32 %v1591, %v1592
      %v1594 = vsel %vm653, %v1533, 0.0
      %v1595 = vadd.f32 %v1593, %v1594
      %v1596 = vsel %vm653, %v1534, 0.0
      %v1597 = vadd.f32 %v1595, %v1596
      %v1598 = vrot.slane %v1597, 4
      %v1599 = vadd.f32 %v1597, %v1598
      %v1600 = vrot.slane %v1599, 2
      %v1601 = vadd.f32 %v1599, %v1600
      %v1602 = vrot.slane %v1601, 1
      %v1603 = vadd.f32 %v1601, %v1602
      %v1604 = vadd.f32 %v1603, 0.0
      %v1605 = vrcp.pop 256.0
      %v1606 = vmul.f32 %v1502, %v1605
      %v1607 = vmul.f32 %v1604, %v1605
      %v1608 = vmul.f32 %v1606, %v1606
      %v1609 = vsub.f32 %v1607, %v1608
      %v1610 = vmax.f32 %v1609, 0.0
      %v1611 = vadd.f32 %v1610, 1e-05
      %v1612 = vrsqrt.pop %v1611
      %v1613 = vld [vmem:[#allocation3] sm:$0xff]
      %v1614 = vld [vmem:[#allocation3 + $0x8] sm:$0xff]
      %v1615 = vld [vmem:[#allocation3 + $0x10] sm:$0xff]
      %v1616 = vld [vmem:[#allocation3 + $0x18] sm:$0xff]
      %v1617 = vld [vmem:[#allocation3 + $0x20] sm:$0xff]
      %v1618 = vld [vmem:[#allocation3 + $0x28] sm:$0xff]
      %v1619 = vld [vmem:[#allocation3 + $0x30] sm:$0xff]
      %v1620 = vld [vmem:[#allocation3 + $0x38] sm:$0xff]
      %v1621 = vld [vmem:[#allocation3 + $0x40] sm:$0xff]
      %v1622 = vld [vmem:[#allocation3 + $0x48] sm:$0xff]
      %v1623 = vld [vmem:[#allocation3 + $0x50] sm:$0xff]
      %v1624 = vld [vmem:[#allocation3 + $0x58] sm:$0xff]
      %v1625 = vld [vmem:[#allocation3 + $0x60] sm:$0xff]
      %v1626 = vld [vmem:[#allocation3 + $0x68] sm:$0xff]
      %v1627 = vld [vmem:[#allocation3 + $0x70] sm:$0xff]
      %v1628 = vld [vmem:[#allocation3 + $0x78] sm:$0xff]
      %v1629 = vld [vmem:[#allocation3 + $0x80] sm:$0xff]
      %v1630 = vld [vmem:[#allocation3 + $0x88] sm:$0xff]
      %v1631 = vld [vmem:[#allocation3 + $0x90] sm:$0xff]
      %v1632 = vld [vmem:[#allocation3 + $0x98] sm:$0xff]
      %v1633 = vld [vmem:[#allocation3 + $0xa0] sm:$0xff]
      %v1634 = vld [vmem:[#allocation3 + $0xa8] sm:$0xff]
      %v1635 = vld [vmem:[#allocation3 + $0xb0] sm:$0xff]
      %v1636 = vld [vmem:[#allocation3 + $0xb8] sm:$0xff]
      %v1637 = vld [vmem:[#allocation3 + $0xc0] sm:$0xff]
      %v1638 = vld [vmem:[#allocation3 + $0xc8] sm:$0xff]
      %v1639 = vld [vmem:[#allocation3 + $0xd0] sm:$0xff]
      %v1640 = vld [vmem:[#allocation3 + $0xd8] sm:$0xff]
      %v1641 = vld [vmem:[#allocation3 + $0xe0] sm:$0xff]
      %v1642 = vld [vmem:[#allocation3 + $0xe8] sm:$0xff]
      %v1643 = vld [vmem:[#allocation3 + $0xf0] sm:$0xff]
      %v1644 = vld [vmem:[#allocation3 + $0xf8] sm:$0xff]
      %v1645 = vsub.f32 %v1613, %v1606
      %v1646 = vsub.f32 %v1614, %v1606
      %v1647 = vsub.f32 %v1615, %v1606
      %v1648 = vsub.f32 %v1616, %v1606
      %v1649 = vsub.f32 %v1617, %v1606
      %v1650 = vsub.f32 %v1618, %v1606
      %v1651 = vsub.f32 %v1619, %v1606
      %v1652 = vsub.f32 %v1620, %v1606
      %v1653 = vsub.f32 %v1621, %v1606
      %v1654 = vsub.f32 %v1622, %v1606
      %v1655 = vsub.f32 %v1623, %v1606
      %v1656 = vsub.f32 %v1624, %v1606
      %v1657 = vsub.f32 %v1625, %v1606
      %v1658 = vsub.f32 %v1626, %v1606
      %v1659 = vsub.f32 %v1627, %v1606
      %v1660 = vsub.f32 %v1628, %v1606
      %v1661 = vsub.f32 %v1629, %v1606
      %v1662 = vsub.f32 %v1630, %v1606
      %v1663 = vsub.f32 %v1631, %v1606
      %v1664 = vsub.f32 %v1632, %v1606
      %v1665 = vsub.f32 %v1633, %v1606
      %v1666 = vsub.f32 %v1634, %v1606
      %v1667 = vsub.f32 %v1635, %v1606
      %v1668 = vsub.f32 %v1636, %v1606
      %v1669 = vsub.f32 %v1637, %v1606
      %v1670 = vsub.f32 %v1638, %v1606
      %v1671 = vsub.f32 %v1639, %v1606
      %v1672 = vsub.f32 %v1640, %v1606
      %v1673 = vsub.f32 %v1641, %v1606
      %v1674 = vsub.f32 %v1642, %v1606
      %v1675 = vsub.f32 %v1643, %v1606
      %v1676 = vsub.f32 %v1644, %v1606
      %v1677 = vmul.f32 %v1645, %v1612
      %v1678 = vmul.f32 %v1646, %v1612
      %v1679 = vmul.f32 %v1647, %v1612
      %v1680 = vmul.f32 %v1648, %v1612
      %v1681 = vmul.f32 %v1649, %v1612
      %v1682 = vmul.f32 %v1650, %v1612
      %v1683 = vmul.f32 %v1651, %v1612
      %v1684 = vmul.f32 %v1652, %v1612
      %v1685 = vmul.f32 %v1653, %v1612
      %v1686 = vmul.f32 %v1654, %v1612
      %v1687 = vmul.f32 %v1655, %v1612
      %v1688 = vmul.f32 %v1656, %v1612
      %v1689 = vmul.f32 %v1657, %v1612
      %v1690 = vmul.f32 %v1658, %v1612
      %v1691 = vmul.f32 %v1659, %v1612
      %v1692 = vmul.f32 %v1660, %v1612
      %v1693 = vmul.f32 %v1661, %v1612
      %v1694 = vmul.f32 %v1662, %v1612
      %v1695 = vmul.f32 %v1663, %v1612
      %v1696 = vmul.f32 %v1664, %v1612
      %v1697 = vmul.f32 %v1665, %v1612
      %v1698 = vmul.f32 %v1666, %v1612
      %v1699 = vmul.f32 %v1667, %v1612
      %v1700 = vmul.f32 %v1668, %v1612
      %v1701 = vmul.f32 %v1669, %v1612
      %v1702 = vmul.f32 %v1670, %v1612
      %v1703 = vmul.f32 %v1671, %v1612
      %v1704 = vmul.f32 %v1672, %v1612
      %v1705 = vmul.f32 %v1673, %v1612
      %v1706 = vmul.f32 %v1674, %v1612
      %v1707 = vmul.f32 %v1675, %v1612
      %v1708 = vmul.f32 %v1676, %v1612
      %v1709 = vmax.f32 %v1677, 0.0
      %v1710 = vmax.f32 %v1678, 0.0
      %v1711 = vmax.f32 %v1679, 0.0
      %v1712 = vmax.f32 %v1680, 0.0
      %v1713 = vmax.f32 %v1681, 0.0
      %v1714 = vmax.f32 %v1682, 0.0
      %v1715 = vmax.f32 %v1683, 0.0
      %v1716 = vmax.f32 %v1684, 0.0
      %v1717 = vmax.f32 %v1685, 0.0
      %v1718 = vmax.f32 %v1686, 0.0
      %v1719 = vmax.f32 %v1687, 0.0
      %v1720 = vmax.f32 %v1688, 0.0
      %v1721 = vmax.f32 %v1689, 0.0
      %v1722 = vmax.f32 %v1690, 0.0
      %v1723 = vmax.f32 %v1691, 0.0
      %v1724 = vmax.f32 %v1692, 0.0
      %v1725 = vmax.f32 %v1693, 0.0
      %v1726 = vmax.f32 %v1694, 0.0
      %v1727 = vmax.f32 %v1695, 0.0
      %v1728 = vmax.f32 %v1696, 0.0
      %v1729 = vmax.f32 %v1697, 0.0
      %v1730 = vmax.f32 %v1698, 0.0
      %v1731 = vmax.f32 %v1699, 0.0
      %v1732 = vmax.f32 %v1700, 0.0
      %v1733 = vmax.f32 %v1701, 0.0
      %v1734 = vmax.f32 %v1702, 0.0
      %v1735 = vmax.f32 %v1703, 0.0
      %v1736 = vmax.f32 %v1704, 0.0
      %v1737 = vmax.f32 %v1705, 0.0
      %v1738 = vmax.f32 %v1706, 0.0
      %v1739 = vmax.f32 %v1707, 0.0
      %v1740 = vmax.f32 %v1708, 0.0
      %v1757 = vrot.slane %v1711, 1
      %v1758 = vrot.slane %v1709, 1
      %v1759 = vrot.slane %v1713, 1
      %v1760 = vrot.slane %v1715, 1
      %v1761 = vrot.slane %v1717, 1
      %v1762 = vrot.slane %v1719, 1
      %v1763 = vrot.slane %v1721, 1
      %v1764 = vrot.slane %v1723, 1
      %v1765 = vrot.slane %v1725, 1
      %v1766 = vrot.slane %v1727, 1
      %v1767 = vrot.slane %v1729, 1
      %v1768 = vrot.slane %v1731, 1
      %v1769 = vrot.slane %v1733, 1
      %v1770 = vrot.slane %v1735, 1
      %v1771 = vrot.slane %v1737, 1
      %v1772 = vrot.slane %v1739, 1
      %v1805 = vrot.slane %v1711, 7
      %v1806 = vrot.slane %v1712, 7
      %v1807 = vsel %vm267, %v1805, %v1806
      %v1808 = vrot.slane %v1709, 7
      %v1809 = vrot.slane %v1710, 7
      %v1810 = vsel %vm267, %v1808, %v1809
      %v1811 = vrot.slane %v1713, 7
      %v1812 = vrot.slane %v1714, 7
      %v1813 = vsel %vm267, %v1811, %v1812
      %v1814 = vrot.slane %v1715, 7
      %v1815 = vrot.slane %v1716, 7
      %v1816 = vsel %vm267, %v1814, %v1815
      %v1817 = vrot.slane %v1717, 7
      %v1818 = vrot.slane %v1718, 7
      %v1819 = vsel %vm267, %v1817, %v1818
      %v1820 = vrot.slane %v1719, 7
      %v1821 = vrot.slane %v1720, 7
      %v1822 = vsel %vm267, %v1820, %v1821
      %v1823 = vrot.slane %v1721, 7
      %v1824 = vrot.slane %v1722, 7
      %v1825 = vsel %vm267, %v1823, %v1824
      %v1826 = vrot.slane %v1723, 7
      %v1827 = vrot.slane %v1724, 7
      %v1828 = vsel %vm267, %v1826, %v1827
      %v1829 = vrot.slane %v1725, 7
      %v1830 = vrot.slane %v1726, 7
      %v1831 = vsel %vm267, %v1829, %v1830
      %v1832 = vrot.slane %v1727, 7
      %v1833 = vrot.slane %v1728, 7
      %v1834 = vsel %vm267, %v1832, %v1833
      %v1835 = vrot.slane %v1729, 7
      %v1836 = vrot.slane %v1730, 7
      %v1837 = vsel %vm267, %v1835, %v1836
      %v1838 = vrot.slane %v1731, 7
      %v1839 = vrot.slane %v1732, 7
      %v1840 = vsel %vm267, %v1838, %v1839
      %v1841 = vrot.slane %v1733, 7
      %v1842 = vrot.slane %v1734, 7
      %v1843 = vsel %vm267, %v1841, %v1842
      %v1844 = vrot.slane %v1735, 7
      %v1845 = vrot.slane %v1736, 7
      %v1846 = vsel %vm267, %v1844, %v1845
      %v1847 = vrot.slane %v1737, 7
      %v1848 = vrot.slane %v1738, 7
      %v1849 = vsel %vm267, %v1847, %v1848
      %v1850 = vrot.slane %v1739, 7
      %v1851 = vrot.slane %v1740, 7
      %v1852 = vsel %vm267, %v1850, %v1851
      %v1885 = vsel %vm267, %v1757, %v1805
      %v1886 = vsel %vm267, %v1758, %v1808
      %v1887 = vsel %vm267, %v1759, %v1811
      %v1888 = vsel %vm267, %v1760, %v1814
      %v1889 = vsel %vm267, %v1761, %v1817
      %v1890 = vsel %vm267, %v1762, %v1820
      %v1891 = vsel %vm267, %v1763, %v1823
      %v1892 = vsel %vm267, %v1764, %v1826
      %v1893 = vsel %vm267, %v1765, %v1829
      %v1894 = vsel %vm267, %v1766, %v1832
      %v1895 = vsel %vm267, %v1767, %v1835
      %v1896 = vsel %vm267, %v1768, %v1838
      %v1897 = vsel %vm267, %v1769, %v1841
      %v1898 = vsel %vm267, %v1770, %v1844
      %v1899 = vsel %vm267, %v1771, %v1847
      %v1900 = vsel %vm267, %v1772, %v1850
      %v1901 = vrot.slane %v1712, 1
      %v1902 = vsel %vm364, %v1757, %v1901
      %v1903 = vrot.slane %v1710, 1
      %v1904 = vsel %vm364, %v1758, %v1903
      %v1905 = vrot.slane %v1714, 1
      %v1906 = vsel %vm364, %v1759, %v1905
      %v1907 = vrot.slane %v1716, 1
      %v1908 = vsel %vm364, %v1760, %v1907
      %v1909 = vrot.slane %v1718, 1
      %v1910 = vsel %vm364, %v1761, %v1909
      %v1911 = vrot.slane %v1720, 1
      %v1912 = vsel %vm364, %v1762, %v1911
      %v1913 = vrot.slane %v1722, 1
      %v1914 = vsel %vm364, %v1763, %v1913
      %v1915 = vrot.slane %v1724, 1
      %v1916 = vsel %vm364, %v1764, %v1915
      %v1917 = vrot.slane %v1726, 1
      %v1918 = vsel %vm364, %v1765, %v1917
      %v1919 = vrot.slane %v1728, 1
      %v1920 = vsel %vm364, %v1766, %v1919
      %v1921 = vrot.slane %v1730, 1
      %v1922 = vsel %vm364, %v1767, %v1921
      %v1923 = vrot.slane %v1732, 1
      %v1924 = vsel %vm364, %v1768, %v1923
      %v1925 = vrot.slane %v1734, 1
      %v1926 = vsel %vm364, %v1769, %v1925
      %v1927 = vrot.slane %v1736, 1
      %v1928 = vsel %vm364, %v1770, %v1927
      %v1929 = vrot.slane %v1738, 1
      %v1930 = vsel %vm364, %v1771, %v1929
      %v1931 = vrot.slane %v1740, 1
      %v1932 = vsel %vm364, %v1772, %v1931
      %v1965 = vsel %vm364, %v1901, %v1806
      %v1966 = vsel %vm364, %v1903, %v1809
      %v1967 = vsel %vm364, %v1905, %v1812
      %v1968 = vsel %vm364, %v1907, %v1815
      %v1969 = vsel %vm364, %v1909, %v1818
      %v1970 = vsel %vm364, %v1911, %v1821
      %v1971 = vsel %vm364, %v1913, %v1824
      %v1972 = vsel %vm364, %v1915, %v1827
      %v1973 = vsel %vm364, %v1917, %v1830
      %v1974 = vsel %vm364, %v1919, %v1833
      %v1975 = vsel %vm364, %v1921, %v1836
      %v1976 = vsel %vm364, %v1923, %v1839
      %v1977 = vsel %vm364, %v1925, %v1842
      %v1978 = vsel %vm364, %v1927, %v1845
      %v1979 = vsel %vm364, %v1929, %v1848
      %v1980 = vsel %vm364, %v1931, %v1851
      %1981 = vrot.lane.b32.xlu0 %v1711, 4
      %v1982 = vpop.permute.xlu0 %1981
      %1983 = vrot.lane.b32.xlu0 %v1712, 4
      %v1984 = vpop.permute.xlu0 %1983
      %1985 = vrot.lane.b32.xlu0 %v1709, 4
      %v1986 = vpop.permute.xlu0 %1985
      %1987 = vrot.lane.b32.xlu0 %v1710, 4
      %v1988 = vpop.permute.xlu0 %1987
      %1989 = vrot.lane.b32.xlu0 %v1713, 4
      %v1990 = vpop.permute.xlu0 %1989
      %1991 = vrot.lane.b32.xlu0 %v1714, 4
      %v1992 = vpop.permute.xlu0 %1991
      %1993 = vrot.lane.b32.xlu0 %v1715, 4
      %v1994 = vpop.permute.xlu0 %1993
      %1995 = vrot.lane.b32.xlu0 %v1716, 4
      %v1996 = vpop.permute.xlu0 %1995
      %1997 = vrot.lane.b32.xlu0 %v1717, 4
      %v1998 = vpop.permute.xlu0 %1997
      %1999 = vrot.lane.b32.xlu0 %v1718, 4
      %v2000 = vpop.permute.xlu0 %1999
      %2001 = vrot.lane.b32.xlu0 %v1719, 4
      %v2002 = vpop.permute.xlu0 %2001
      %2003 = vrot.lane.b32.xlu0 %v1720, 4
      %v2004 = vpop.permute.xlu0 %2003
      %2005 = vrot.lane.b32.xlu0 %v1721, 4
      %v2006 = vpop.permute.xlu0 %2005
      %2007 = vrot.lane.b32.xlu0 %v1722, 4
      %v2008 = vpop.permute.xlu0 %2007
      %2009 = vrot.lane.b32.xlu0 %v1723, 4
      %v2010 = vpop.permute.xlu0 %2009
      %2011 = vrot.lane.b32.xlu0 %v1724, 4
      %v2012 = vpop.permute.xlu0 %2011
      %2013 = vrot.lane.b32.xlu0 %v1725, 4
      %v2014 = vpop.permute.xlu0 %2013
      %2015 = vrot.lane.b32.xlu0 %v1726, 4
      %v2016 = vpop.permute.xlu0 %2015
      %2017 = vrot.lane.b32.xlu0 %v1727, 4
      %v2018 = vpop.permute.xlu0 %2017
      %2019 = vrot.lane.b32.xlu0 %v1728, 4
      %v2020 = vpop.permute.xlu0 %2019
      %2021 = vrot.lane.b32.xlu0 %v1729, 4
      %v2022 = vpop.permute.xlu0 %2021
      %2023 = vrot.lane.b32.xlu0 %v1730, 4
      %v2024 = vpop.permute.xlu0 %2023
      %2025 = vrot.lane.b32.xlu0 %v1731, 4
      %v2026 = vpop.permute.xlu0 %2025
      %2027 = vrot.lane.b32.xlu0 %v1732, 4
      %v2028 = vpop.permute.xlu0 %2027
      %2029 = vrot.lane.b32.xlu0 %v1733, 4
      %v2030 = vpop.permute.xlu0 %2029
      %2031 = vrot.lane.b32.xlu0 %v1734, 4
      %v2032 = vpop.permute.xlu0 %2031
      %2033 = vrot.lane.b32.xlu0 %v1735, 4
      %v2034 = vpop.permute.xlu0 %2033
      %2035 = vrot.lane.b32.xlu0 %v1736, 4
      %v2036 = vpop.permute.xlu0 %2035
      %2037 = vrot.lane.b32.xlu0 %v1737, 4
      %v2038 = vpop.permute.xlu0 %2037
      %2039 = vrot.lane.b32.xlu0 %v1738, 4
      %v2040 = vpop.permute.xlu0 %2039
      %2041 = vrot.lane.b32.xlu0 %v1739, 4
      %v2042 = vpop.permute.xlu0 %2041
      %2043 = vrot.lane.b32.xlu0 %v1740, 4
      %v2044 = vpop.permute.xlu0 %2043
      %2093 = vrot.lane.b32.xlu0 %v1902, 8
      %v2094 = vpop.permute.xlu0 %2093
      %2095 = vrot.lane.b32.xlu0 %v1965, 8
      %v2096 = vpop.permute.xlu0 %2095
      %2097 = vrot.lane.b32.xlu0 %v1904, 8
      %v2098 = vpop.permute.xlu0 %2097
      %2099 = vrot.lane.b32.xlu0 %v1966, 8
      %v2100 = vpop.permute.xlu0 %2099
      %2101 = vrot.lane.b32.xlu0 %v1906, 8
      %v2102 = vpop.permute.xlu0 %2101
      %2103 = vrot.lane.b32.xlu0 %v1967, 8
      %v2104 = vpop.permute.xlu0 %2103
      %2105 = vrot.lane.b32.xlu0 %v1908, 8
      %v2106 = vpop.permute.xlu0 %2105
      %2107 = vrot.lane.b32.xlu0 %v1968, 8
      %v2108 = vpop.permute.xlu0 %2107
      %2109 = vrot.lane.b32.xlu0 %v1910, 8
      %v2110 = vpop.permute.xlu0 %2109
      %2111 = vrot.lane.b32.xlu0 %v1969, 8
      %v2112 = vpop.permute.xlu0 %2111
      %2113 = vrot.lane.b32.xlu0 %v1912, 8
      %v2114 = vpop.permute.xlu0 %2113
      %2115 = vrot.lane.b32.xlu0 %v1970, 8
      %v2116 = vpop.permute.xlu0 %2115
      %2117 = vrot.lane.b32.xlu0 %v1914, 8
      %v2118 = vpop.permute.xlu0 %2117
      %2119 = vrot.lane.b32.xlu0 %v1971, 8
      %v2120 = vpop.permute.xlu0 %2119
      %2121 = vrot.lane.b32.xlu0 %v1916, 8
      %v2122 = vpop.permute.xlu0 %2121
      %2123 = vrot.lane.b32.xlu0 %v1972, 8
      %v2124 = vpop.permute.xlu0 %2123
      %2125 = vrot.lane.b32.xlu0 %v1918, 8
      %v2126 = vpop.permute.xlu0 %2125
      %2127 = vrot.lane.b32.xlu0 %v1973, 8
      %v2128 = vpop.permute.xlu0 %2127
      %2129 = vrot.lane.b32.xlu0 %v1920, 8
      %v2130 = vpop.permute.xlu0 %2129
      %2131 = vrot.lane.b32.xlu0 %v1974, 8
      %v2132 = vpop.permute.xlu0 %2131
      %2133 = vrot.lane.b32.xlu0 %v1922, 8
      %v2134 = vpop.permute.xlu0 %2133
      %2135 = vrot.lane.b32.xlu0 %v1975, 8
      %v2136 = vpop.permute.xlu0 %2135
      %2137 = vrot.lane.b32.xlu0 %v1924, 8
      %v2138 = vpop.permute.xlu0 %2137
      %2139 = vrot.lane.b32.xlu0 %v1976, 8
      %v2140 = vpop.permute.xlu0 %2139
      %2141 = vrot.lane.b32.xlu0 %v1926, 8
      %v2142 = vpop.permute.xlu0 %2141
      %2143 = vrot.lane.b32.xlu0 %v1977, 8
      %v2144 = vpop.permute.xlu0 %2143
      %2145 = vrot.lane.b32.xlu0 %v1928, 8
      %v2146 = vpop.permute.xlu0 %2145
      %2147 = vrot.lane.b32.xlu0 %v1978, 8
      %v2148 = vpop.permute.xlu0 %2147
      %2149 = vrot.lane.b32.xlu0 %v1930, 8
      %v2150 = vpop.permute.xlu0 %2149
      %2151 = vrot.lane.b32.xlu0 %v1979, 8
      %v2152 = vpop.permute.xlu0 %2151
      %2153 = vrot.lane.b32.xlu0 %v1932, 8
      %v2154 = vpop.permute.xlu0 %2153
      %2155 = vrot.lane.b32.xlu0 %v1980, 8
      %v2156 = vpop.permute.xlu0 %2155
      %v2189 = vsel %vm653, %v1885, %v1982
      %v2190 = vsel %vm653, %v1807, %v1984
      %v2191 = vsel %vm653, %v1886, %v1986
      %v2192 = vsel %vm653, %v1810, %v1988
      %v2193 = vsel %vm653, %v1887, %v1990
      %v2194 = vsel %vm653, %v1813, %v1992
      %v2195 = vsel %vm653, %v1888, %v1994
      %v2196 = vsel %vm653, %v1816, %v1996
      %v2197 = vsel %vm653, %v1889, %v1998
      %v2198 = vsel %vm653, %v1819, %v2000
      %v2199 = vsel %vm653, %v1890, %v2002
      %v2200 = vsel %vm653, %v1822, %v2004
      %v2201 = vsel %vm653, %v1891, %v2006
      %v2202 = vsel %vm653, %v1825, %v2008
      %v2203 = vsel %vm653, %v1892, %v2010
      %v2204 = vsel %vm653, %v1828, %v2012
      %v2205 = vsel %vm653, %v1893, %v2014
      %v2206 = vsel %vm653, %v1831, %v2016
      %v2207 = vsel %vm653, %v1894, %v2018
      %v2208 = vsel %vm653, %v1834, %v2020
      %v2209 = vsel %vm653, %v1895, %v2022
      %v2210 = vsel %vm653, %v1837, %v2024
      %v2211 = vsel %vm653, %v1896, %v2026
      %v2212 = vsel %vm653, %v1840, %v2028
      %v2213 = vsel %vm653, %v1897, %v2030
      %v2214 = vsel %vm653, %v1843, %v2032
      %v2215 = vsel %vm653, %v1898, %v2034
      %v2216 = vsel %vm653, %v1846, %v2036
      %v2217 = vsel %vm653, %v1899, %v2038
      %v2218 = vsel %vm653, %v1849, %v2040
      %v2219 = vsel %vm653, %v1900, %v2042
      %v2220 = vsel %vm653, %v1852, %v2044
      %v2221 = vsel %vm686, %v2189, %v2094
      %v2222 = vsel %vm686, %v2190, %v2096
      %v2223 = vsel %vm686, %v2191, %v2098
      %v2224 = vsel %vm686, %v2192, %v2100
      %v2225 = vsel %vm686, %v2193, %v2102
      %v2226 = vsel %vm686, %v2194, %v2104
      %v2227 = vsel %vm686, %v2195, %v2106
      %v2228 = vsel %vm686, %v2196, %v2108
      %v2229 = vsel %vm686, %v2197, %v2110
      %v2230 = vsel %vm686, %v2198, %v2112
      %v2231 = vsel %vm686, %v2199, %v2114
      %v2232 = vsel %vm686, %v2200, %v2116
      %v2233 = vsel %vm686, %v2201, %v2118
      %v2234 = vsel %vm686, %v2202, %v2120
      %v2235 = vsel %vm686, %v2203, %v2122
      %v2236 = vsel %vm686, %v2204, %v2124
      %v2237 = vsel %vm686, %v2205, %v2126
      %v2238 = vsel %vm686, %v2206, %v2128
      %v2239 = vsel %vm686, %v2207, %v2130
      %v2240 = vsel %vm686, %v2208, %v2132
      %v2241 = vsel %vm686, %v2209, %v2134
      %v2242 = vsel %vm686, %v2210, %v2136
      %v2243 = vsel %vm686, %v2211, %v2138
      %v2244 = vsel %vm686, %v2212, %v2140
      %v2245 = vsel %vm686, %v2213, %v2142
      %v2246 = vsel %vm686, %v2214, %v2144
      %v2247 = vsel %vm686, %v2215, %v2146
      %v2248 = vsel %vm686, %v2216, %v2148
      %v2249 = vsel %vm686, %v2217, %v2150
      %v2250 = vsel %vm686, %v2218, %v2152
      %v2251 = vsel %vm686, %v2219, %v2154
      %v2252 = vsel %vm686, %v2220, %v2156
      %2285 = vrot.lane.b32.xlu0 %v2223, 12
      %v2286 = vpop.permute.xlu0 %2285
      %2287 = vrot.lane.b32.xlu0 %v2224, 12
      %v2288 = vpop.permute.xlu0 %2287
      %2289 = vrot.lane.b32.xlu0 %v2221, 12
      %v2290 = vpop.permute.xlu0 %2289
      %2291 = vrot.lane.b32.xlu0 %v2222, 12
      %v2292 = vpop.permute.xlu0 %2291
      %2293 = vrot.lane.b32.xlu0 %v2225, 12
      %v2294 = vpop.permute.xlu0 %2293
      %2295 = vrot.lane.b32.xlu0 %v2226, 12
      %v2296 = vpop.permute.xlu0 %2295
      %2297 = vrot.lane.b32.xlu0 %v2227, 12
      %v2298 = vpop.permute.xlu0 %2297
      %2299 = vrot.lane.b32.xlu0 %v2228, 12
      %v2300 = vpop.permute.xlu0 %2299
      %2301 = vrot.lane.b32.xlu0 %v2229, 12
      %v2302 = vpop.permute.xlu0 %2301
      %2303 = vrot.lane.b32.xlu0 %v2230, 12
      %v2304 = vpop.permute.xlu0 %2303
      %2305 = vrot.lane.b32.xlu0 %v2231, 12
      %v2306 = vpop.permute.xlu0 %2305
      %2307 = vrot.lane.b32.xlu0 %v2232, 12
      %v2308 = vpop.permute.xlu0 %2307
      %2309 = vrot.lane.b32.xlu0 %v2233, 12
      %v2310 = vpop.permute.xlu0 %2309
      %2311 = vrot.lane.b32.xlu0 %v2234, 12
      %v2312 = vpop.permute.xlu0 %2311
      %2313 = vrot.lane.b32.xlu0 %v2235, 12
      %v2314 = vpop.permute.xlu0 %2313
      %2315 = vrot.lane.b32.xlu0 %v2236, 12
      %v2316 = vpop.permute.xlu0 %2315
      %2317 = vrot.lane.b32.xlu0 %v2237, 12
      %v2318 = vpop.permute.xlu0 %2317
      %2319 = vrot.lane.b32.xlu0 %v2238, 12
      %v2320 = vpop.permute.xlu0 %2319
      %2321 = vrot.lane.b32.xlu0 %v2239, 12
      %v2322 = vpop.permute.xlu0 %2321
      %2323 = vrot.lane.b32.xlu0 %v2240, 12
      %v2324 = vpop.permute.xlu0 %2323
      %2325 = vrot.lane.b32.xlu0 %v2241, 12
      %v2326 = vpop.permute.xlu0 %2325
      %2327 = vrot.lane.b32.xlu0 %v2242, 12
      %v2328 = vpop.permute.xlu0 %2327
      %2329 = vrot.lane.b32.xlu0 %v2243, 12
      %v2330 = vpop.permute.xlu0 %2329
      %2331 = vrot.lane.b32.xlu0 %v2244, 12
      %v2332 = vpop.permute.xlu0 %2331
      %2333 = vrot.lane.b32.xlu0 %v2245, 12
      %v2334 = vpop.permute.xlu0 %2333
      %2335 = vrot.lane.b32.xlu0 %v2246, 12
      %v2336 = vpop.permute.xlu0 %2335
      %2337 = vrot.lane.b32.xlu0 %v2247, 12
      %v2338 = vpop.permute.xlu0 %2337
      %2339 = vrot.lane.b32.xlu0 %v2248, 12
      %v2340 = vpop.permute.xlu0 %2339
      %2341 = vrot.lane.b32.xlu0 %v2249, 12
      %v2342 = vpop.permute.xlu0 %2341
      %2343 = vrot.lane.b32.xlu0 %v2250, 12
      %v2344 = vpop.permute.xlu0 %2343
      %2345 = vrot.lane.b32.xlu0 %v2251, 12
      %v2346 = vpop.permute.xlu0 %2345
      %2347 = vrot.lane.b32.xlu0 %v2252, 12
      %v2348 = vpop.permute.xlu0 %2347
      %2381 = vrot.lane.b32.xlu0 %v2221, 24
      %v2382 = vpop.permute.xlu0 %2381
      %2383 = vrot.lane.b32.xlu0 %v2222, 24
      %v2384 = vpop.permute.xlu0 %2383
      %2385 = vrot.lane.b32.xlu0 %v2225, 24
      %v2386 = vpop.permute.xlu0 %2385
      %2387 = vrot.lane.b32.xlu0 %v2226, 24
      %v2388 = vpop.permute.xlu0 %2387
      %2389 = vrot.lane.b32.xlu0 %v2227, 24
      %v2390 = vpop.permute.xlu0 %2389
      %2391 = vrot.lane.b32.xlu0 %v2228, 24
      %v2392 = vpop.permute.xlu0 %2391
      %2393 = vrot.lane.b32.xlu0 %v2229, 24
      %v2394 = vpop.permute.xlu0 %2393
      %2395 = vrot.lane.b32.xlu0 %v2230, 24
      %v2396 = vpop.permute.xlu0 %2395
      %2397 = vrot.lane.b32.xlu0 %v2231, 24
      %v2398 = vpop.permute.xlu0 %2397
      %2399 = vrot.lane.b32.xlu0 %v2232, 24
      %v2400 = vpop.permute.xlu0 %2399
      %2401 = vrot.lane.b32.xlu0 %v2233, 24
      %v2402 = vpop.permute.xlu0 %2401
      %2403 = vrot.lane.b32.xlu0 %v2234, 24
      %v2404 = vpop.permute.xlu0 %2403
      %2405 = vrot.lane.b32.xlu0 %v2235, 24
      %v2406 = vpop.permute.xlu0 %2405
      %2407 = vrot.lane.b32.xlu0 %v2236, 24
      %v2408 = vpop.permute.xlu0 %2407
      %2409 = vrot.lane.b32.xlu0 %v2237, 24
      %v2410 = vpop.permute.xlu0 %2409
      %2411 = vrot.lane.b32.xlu0 %v2238, 24
      %v2412 = vpop.permute.xlu0 %2411
      %2413 = vrot.lane.b32.xlu0 %v2239, 24
      %v2414 = vpop.permute.xlu0 %2413
      %2415 = vrot.lane.b32.xlu0 %v2240, 24
      %v2416 = vpop.permute.xlu0 %2415
      %2417 = vrot.lane.b32.xlu0 %v2241, 24
      %v2418 = vpop.permute.xlu0 %2417
      %2419 = vrot.lane.b32.xlu0 %v2242, 24
      %v2420 = vpop.permute.xlu0 %2419
      %2421 = vrot.lane.b32.xlu0 %v2243, 24
      %v2422 = vpop.permute.xlu0 %2421
      %2423 = vrot.lane.b32.xlu0 %v2244, 24
      %v2424 = vpop.permute.xlu0 %2423
      %2425 = vrot.lane.b32.xlu0 %v2245, 24
      %v2426 = vpop.permute.xlu0 %2425
      %2427 = vrot.lane.b32.xlu0 %v2246, 24
      %v2428 = vpop.permute.xlu0 %2427
      %2429 = vrot.lane.b32.xlu0 %v2247, 24
      %v2430 = vpop.permute.xlu0 %2429
      %2431 = vrot.lane.b32.xlu0 %v2248, 24
      %v2432 = vpop.permute.xlu0 %2431
      %2433 = vrot.lane.b32.xlu0 %v2249, 24
      %v2434 = vpop.permute.xlu0 %2433
      %2435 = vrot.lane.b32.xlu0 %v2250, 24
      %v2436 = vpop.permute.xlu0 %2435
      %2437 = vrot.lane.b32.xlu0 %v2251, 24
      %v2438 = vpop.permute.xlu0 %2437
      %2439 = vrot.lane.b32.xlu0 %v2252, 24
      %v2440 = vpop.permute.xlu0 %2439
      %v2471 = vsel %vm937, %v2221, %v2286
      %v2472 = vsel %vm937, %v2222, %v2288
      %v2473 = vsel %vm937, %v2223, %v2290
      %v2474 = vsel %vm937, %v2224, %v2292
      %v2475 = vsel %vm937, %v2221, %v2294
      %v2476 = vsel %vm937, %v2222, %v2296
      %v2477 = vsel %vm937, %v2225, %v2298
      %v2478 = vsel %vm937, %v2226, %v2300
      %v2479 = vsel %vm937, %v2227, %v2302
      %v2480 = vsel %vm937, %v2228, %v2304
      %v2481 = vsel %vm937, %v2229, %v2306
      %v2482 = vsel %vm937, %v2230, %v2308
      %v2483 = vsel %vm937, %v2231, %v2310
      %v2484 = vsel %vm937, %v2232, %v2312
      %v2485 = vsel %vm937, %v2233, %v2314
      %v2486 = vsel %vm937, %v2234, %v2316
      %v2487 = vsel %vm937, %v2235, %v2318
      %v2488 = vsel %vm937, %v2236, %v2320
      %v2489 = vsel %vm937, %v2237, %v2322
      %v2490 = vsel %vm937, %v2238, %v2324
      %v2491 = vsel %vm937, %v2239, %v2326
      %v2492 = vsel %vm937, %v2240, %v2328
      %v2493 = vsel %vm937, %v2241, %v2330
      %v2494 = vsel %vm937, %v2242, %v2332
      %v2495 = vsel %vm937, %v2243, %v2334
      %v2496 = vsel %vm937, %v2244, %v2336
      %v2497 = vsel %vm937, %v2245, %v2338
      %v2498 = vsel %vm937, %v2246, %v2340
      %v2499 = vsel %vm937, %v2247, %v2342
      %v2500 = vsel %vm937, %v2248, %v2344
      %v2501 = vsel %vm937, %v2249, %v2346
      %v2502 = vsel %vm937, %v2250, %v2348
      %v2503 = vsel %vm970, %v2471, %v2382
      %v2504 = vsel %vm970, %v2472, %v2384
      %v2505 = vsel %vm970, %v2473, %v2386
      %v2506 = vsel %vm970, %v2474, %v2388
      %v2507 = vsel %vm970, %v2475, %v2390
      %v2508 = vsel %vm970, %v2476, %v2392
      %v2509 = vsel %vm970, %v2477, %v2394
      %v2510 = vsel %vm970, %v2478, %v2396
      %v2511 = vsel %vm970, %v2479, %v2398
      %v2512 = vsel %vm970, %v2480, %v2400
      %v2513 = vsel %vm970, %v2481, %v2402
      %v2514 = vsel %vm970, %v2482, %v2404
      %v2515 = vsel %vm970, %v2483, %v2406
      %v2516 = vsel %vm970, %v2484, %v2408
      %v2517 = vsel %vm970, %v2485, %v2410
      %v2518 = vsel %vm970, %v2486, %v2412
      %v2519 = vsel %vm970, %v2487, %v2414
      %v2520 = vsel %vm970, %v2488, %v2416
      %v2521 = vsel %vm970, %v2489, %v2418
      %v2522 = vsel %vm970, %v2490, %v2420
      %v2523 = vsel %vm970, %v2491, %v2422
      %v2524 = vsel %vm970, %v2492, %v2424
      %v2525 = vsel %vm970, %v2493, %v2426
      %v2526 = vsel %vm970, %v2494, %v2428
      %v2527 = vsel %vm970, %v2495, %v2430
      %v2528 = vsel %vm970, %v2496, %v2432
      %v2529 = vsel %vm970, %v2497, %v2434
      %v2530 = vsel %vm970, %v2498, %v2436
      %v2531 = vsel %vm970, %v2499, %v2438
      %v2532 = vsel %vm970, %v2500, %v2440
      %v2533 = vsel %vm970, %v2501, %v2434
      %v2534 = vsel %vm970, %v2502, %v2436
      %2535 = vst.msk [vmem:[#allocation2] sm:$0xff] %vm1003, %v2503
      %2536 = vst.msk [vmem:[#allocation2 + $0x8] sm:$0xff] %vm1003, %v2504
      %2537 = vst.msk [vmem:[#allocation2 + $0x10] sm:$0xff] %vm1003, %v2505
      %2538 = vst.msk [vmem:[#allocation2 + $0x18] sm:$0xff] %vm1003, %v2506
      %2539 = vst.msk [vmem:[#allocation2 + $0x20] sm:$0xff] %vm1003, %v2507
      %2540 = vst.msk [vmem:[#allocation2 + $0x28] sm:$0xff] %vm1003, %v2508
      %2541 = vst.msk [vmem:[#allocation2 + $0x30] sm:$0xff] %vm1003, %v2509
      %2542 = vst.msk [vmem:[#allocation2 + $0x38] sm:$0xff] %vm1003, %v2510
      %2543 = vst.msk [vmem:[#allocation2 + $0x40] sm:$0xff] %vm1003, %v2511
      %2544 = vst.msk [vmem:[#allocation2 + $0x48] sm:$0xff] %vm1003, %v2512
      %2545 = vst.msk [vmem:[#allocation2 + $0x50] sm:$0xff] %vm1003, %v2513
      %2546 = vst.msk [vmem:[#allocation2 + $0x58] sm:$0xff] %vm1003, %v2514
      %2547 = vst.msk [vmem:[#allocation2 + $0x60] sm:$0xff] %vm1003, %v2515
      %2548 = vst.msk [vmem:[#allocation2 + $0x68] sm:$0xff] %vm1003, %v2516
      %2549 = vst.msk [vmem:[#allocation2 + $0x70] sm:$0xff] %vm1003, %v2517
      %2550 = vst.msk [vmem:[#allocation2 + $0x78] sm:$0xff] %vm1003, %v2518
      %2551 = vst.msk [vmem:[#allocation2 + $0x80] sm:$0xff] %vm1003, %v2519
      %2552 = vst.msk [vmem:[#allocation2 + $0x88] sm:$0xff] %vm1003, %v2520
      %2553 = vst.msk [vmem:[#allocation2 + $0x90] sm:$0xff] %vm1003, %v2521
      %2554 = vst.msk [vmem:[#allocation2 + $0x98] sm:$0xff] %vm1003, %v2522
      %2555 = vst.msk [vmem:[#allocation2 + $0xa0] sm:$0xff] %vm1003, %v2523
      %2556 = vst.msk [vmem:[#allocation2 + $0xa8] sm:$0xff] %vm1003, %v2524
      %2557 = vst.msk [vmem:[#allocation2 + $0xb0] sm:$0xff] %vm1003, %v2525
      %2558 = vst.msk [vmem:[#allocation2 + $0xb8] sm:$0xff] %vm1003, %v2526
      %2559 = vst.msk [vmem:[#allocation2 + $0xc0] sm:$0xff] %vm1003, %v2527
      %2560 = vst.msk [vmem:[#allocation2 + $0xc8] sm:$0xff] %vm1003, %v2528
      %2561 = vst.msk [vmem:[#allocation2 + $0xd0] sm:$0xff] %vm1003, %v2529
      %2562 = vst.msk [vmem:[#allocation2 + $0xd8] sm:$0xff] %vm1003, %v2530
      %2563 = vst.msk [vmem:[#allocation2 + $0xe0] sm:$0xff] %vm1003, %v2531
      %2564 = vst.msk [vmem:[#allocation2 + $0xe8] sm:$0xff] %vm1003, %v2532
      %2565 = vst.msk [vmem:[#allocation2 + $0xf0] sm:$0xff] %vm1003, %v2533
      %2566 = vst.msk [vmem:[#allocation2 + $0xf8] sm:$0xff] %vm1003, %v2534
      %v2567 = vld [vmem:[%s1037] sm:$0xff]
      %v2568 = vld [vmem:[%s1037 + $0x8] sm:$0xff]
      %v2569 = vld [vmem:[%s1037 + $0x10] sm:$0xff]
      %v2570 = vld [vmem:[%s1037 + $0x18] sm:$0xff]
      %v2571 = vld [vmem:[%s1037 + $0x20] sm:$0xff]
      %v2572 = vld [vmem:[%s1037 + $0x28] sm:$0xff]
      %v2573 = vld [vmem:[%s1037 + $0x30] sm:$0xff]
      %v2574 = vld [vmem:[%s1037 + $0x38] sm:$0xff]
      %v2575 = vld [vmem:[%s1037 + $0x40] sm:$0xff]
      %v2576 = vld [vmem:[%s1037 + $0x48] sm:$0xff]
      %v2577 = vld [vmem:[%s1037 + $0x50] sm:$0xff]
      %v2578 = vld [vmem:[%s1037 + $0x58] sm:$0xff]
      %v2579 = vld [vmem:[%s1037 + $0x60] sm:$0xff]
      %v2580 = vld [vmem:[%s1037 + $0x68] sm:$0xff]
      %v2581 = vld [vmem:[%s1037 + $0x70] sm:$0xff]
      %v2582 = vld [vmem:[%s1037 + $0x78] sm:$0xff]
      %v2583 = vld [vmem:[%s1037 + $0x80] sm:$0xff]
      %v2584 = vld [vmem:[%s1037 + $0x88] sm:$0xff]
      %v2585 = vld [vmem:[%s1037 + $0x90] sm:$0xff]
      %v2586 = vld [vmem:[%s1037 + $0x98] sm:$0xff]
      %v2587 = vld [vmem:[%s1037 + $0xa0] sm:$0xff]
      %v2588 = vld [vmem:[%s1037 + $0xa8] sm:$0xff]
      %v2589 = vld [vmem:[%s1037 + $0xb0] sm:$0xff]
      %v2590 = vld [vmem:[%s1037 + $0xb8] sm:$0xff]
      %v2591 = vld [vmem:[%s1037 + $0xc0] sm:$0xff]
      %v2592 = vld [vmem:[%s1037 + $0xc8] sm:$0xff]
      %v2593 = vld [vmem:[%s1037 + $0xd0] sm:$0xff]
      %v2594 = vld [vmem:[%s1037 + $0xd8] sm:$0xff]
      %v2595 = vld [vmem:[%s1037 + $0xe0] sm:$0xff]
      %v2596 = vld [vmem:[%s1037 + $0xe8] sm:$0xff]
      %v2597 = vld [vmem:[%s1037 + $0xf0] sm:$0xff]
      %v2598 = vld [vmem:[%s1037 + $0xf8] sm:$0xff]
      %v2599 = vld [vmem:[%s2] sm:$0xff]
      %v2600 = vld [vmem:[%s2 + $0x8] sm:$0xff]
      %v2601 = vld [vmem:[%s2 + $0x10] sm:$0xff]
      %v2602 = vld [vmem:[%s2 + $0x18] sm:$0xff]
      %v2603 = vld [vmem:[%s2 + $0x20] sm:$0xf]
      %v2605 = vsel %vm1003, %v2567, 0
      %v2608 = vsel %vm1003, %v2568, 0
      %v2611 = vsel %vm1003, %v2569, 0
      %v2614 = vsel %vm1003, %v2570, 0
      %v2617 = vsel %vm1003, %v2571, 0
      %v2620 = vsel %vm1003, %v2572, 0
      %v2623 = vsel %vm1003, %v2573, 0
      %v2626 = vsel %vm1003, %v2574, 0
      %v2629 = vsel %vm1003, %v2575, 0
      %v2632 = vsel %vm1003, %v2576, 0
      %v2635 = vsel %vm1003, %v2577, 0
      %v2638 = vsel %vm1003, %v2578, 0
      %v2641 = vsel %vm1003, %v2579, 0
      %v2644 = vsel %vm1003, %v2580, 0
      %v2647 = vsel %vm1003, %v2581, 0
      %v2650 = vsel %vm1003, %v2582, 0
      %v2653 = vsel %vm1003, %v2583, 0
      %v2656 = vsel %vm1003, %v2584, 0
      %v2659 = vsel %vm1003, %v2585, 0
      %v2662 = vsel %vm1003, %v2586, 0
      %v2665 = vsel %vm1003, %v2587, 0
      %v2668 = vsel %vm1003, %v2588, 0
      %v2671 = vsel %vm1003, %v2589, 0
      %v2674 = vsel %vm1003, %v2590, 0
      %v2677 = vsel %vm1003, %v2591, 0
      %v2680 = vsel %vm1003, %v2592, 0
      %v2683 = vsel %vm1003, %v2593, 0
      %v2686 = vsel %vm1003, %v2594, 0
      %v2689 = vsel %vm1003, %v2595, 0
      %v2692 = vsel %vm1003, %v2596, 0
      %v2695 = vsel %vm1003, %v2597, 0
      %v2698 = vsel %vm1003, %v2598, 0
      %v2701 = vsel %vm1171, %v2603, 0
      %2703 = vmatprep.subr.mxu0 0.0
      %2704 = vmatpush1.msra.mxu0 0.0
      %2705 = vmatprep.subr.mxu0 0.0
      %2706 = vmatpush1.msra.mxu0 0.0
      %2707 = vmatprep.subr.mxu0 0.0
      %2708 = vmatpush1.msra.mxu0 0.0
      %2709 = vmatprep.subr.mxu0 0.0
      %2710 = vmatpush1.msra.mxu0 0.0
      %2711 = vmatprep.subr.mxu0 0.0
      %2712 = vmatpush1.msra.mxu0 0.0
      %2713 = vmatprep.subr.mxu0 0.0
      %2714 = vmatpush1.msra.mxu0 0.0
      %2715 = vmatprep.subr.mxu0 0.0
      %2716 = vmatpush1.msra.mxu0 0.0
      %2717 = vmatprep.subr.mxu0 0.0
      %2718 = vmatpush1.msra.mxu0 0.0
      %2719 = vmatprep.subr.mxu0 0.0
      %2720 = vmatpush1.msra.mxu0 0.0
      %2721 = vmatprep.subr.mxu0 0.0
      %2722 = vmatpush1.msra.mxu0 0.0
      %2723 = vmatprep.subr.mxu0 0.0
      %2724 = vmatpush1.msra.mxu0 0.0
      %2725 = vmatprep.subr.mxu0 0.0
      %2726 = vmatpush1.msra.mxu0 %v2701
      %2727 = vmatprep.subr.mxu0 0.0
      %2728 = vmatpush1.msra.mxu0 %v2602
      %2729 = vmatprep.subr.mxu0 0.0
      %2730 = vmatpush1.msra.mxu0 %v2601
      %2731 = vmatprep.subr.mxu0 0.0
      %2732 = vmatpush1.msra.mxu0 %v2600
      %2733 = vmatprep.subr.mxu0 0.0
      %2734 = vmatpush1.msra.mxu0 %v2599
      %2735 = vmatprep.subr.mxu0 0.0
      %2736 = vmatpush2.msra.mxu0 0.0
      %2737 = vmatprep.subr.mxu0 0.0
      %2738 = vmatpush2.msra.mxu0 0.0
      %2739 = vmatprep.subr.mxu0 0.0
      %2740 = vmatpush2.msra.mxu0 0.0
      %2741 = vmatprep.subr.mxu0 0.0
      %2742 = vmatpush2.msra.mxu0 0.0
      %2743 = vmatprep.subr.mxu0 0.0
      %2744 = vmatpush2.msra.mxu0 0.0
      %2745 = vmatprep.subr.mxu0 0.0
      %2746 = vmatpush2.msra.mxu0 0.0
      %2747 = vmatprep.subr.mxu0 0.0
      %2748 = vmatpush2.msra.mxu0 0.0
      %2749 = vmatprep.subr.mxu0 0.0
      %2750 = vmatpush2.msra.mxu0 0.0
      %2751 = vmatprep.subr.mxu0 0.0
      %2752 = vmatpush2.msra.mxu0 0.0
      %2753 = vmatprep.subr.mxu0 0.0
      %2754 = vmatpush2.msra.mxu0 0.0
      %2755 = vmatprep.subr.mxu0 0.0
      %2756 = vmatpush2.msra.mxu0 0.0
      %2757 = vmatprep.subr.mxu0 0.0
      %2758 = vmatpush2.msra.mxu0 0.0
      %2759 = vmatprep.subr.mxu0 0.0
      %2760 = vmatpush2.msra.mxu0 0.0
      %2761 = vmatprep.subr.mxu0 0.0
      %2762 = vmatpush2.msra.mxu0 0.0
      %2763 = vmatprep.subr.mxu0 0.0
      %2764 = vmatpush2.msra.mxu0 0.0
      %2765 = vmatprep.subr.mxu0 0.0
      %2766 = vmatpush2.msra.mxu0 0.0
      %2767 = vmatprep.mubr.f32.mxu0 0.0
      %2768 = vmatmul.mubr.f32.gmra.mxu0 %v2605
      %v2769 = vpop.f32.mrf.mxu0
      %v2770 = vadd.f32 0.0, %v2769
      %v2771 = vpop.f32.mrf.mxu0
      %2772 = vmatprep.mubr.f32.mxu0 0.0
      %2773 = vmatmul.mubr.f32.gmra.mxu0 %v2608
      %v2774 = vpop.f32.mrf.mxu0
      %v2775 = vadd.f32 0.0, %v2774
      %v2776 = vpop.f32.mrf.mxu0
      %2777 = vmatprep.mubr.f32.mxu0 0.0
      %2778 = vmatmul.mubr.f32.gmra.mxu0 %v2611
      %v2779 = vpop.f32.mrf.mxu0
      %v2780 = vadd.f32 0.0, %v2779
      %v2781 = vpop.f32.mrf.mxu0
      %2782 = vmatprep.mubr.f32.mxu0 0.0
      %2783 = vmatmul.mubr.f32.gmra.mxu0 %v2614
      %v2784 = vpop.f32.mrf.mxu0
      %v2785 = vadd.f32 0.0, %v2784
      %v2786 = vpop.f32.mrf.mxu0
      %2787 = vmatprep.mubr.f32.mxu0 0.0
      %2788 = vmatmul.mubr.f32.gmra.mxu0 %v2617
      %v2789 = vpop.f32.mrf.mxu0
      %v2790 = vadd.f32 0.0, %v2789
      %v2791 = vpop.f32.mrf.mxu0
      %2792 = vmatprep.mubr.f32.mxu0 0.0
      %2793 = vmatmul.mubr.f32.gmra.mxu0 %v2620
      %v2794 = vpop.f32.mrf.mxu0
      %v2795 = vadd.f32 0.0, %v2794
      %v2796 = vpop.f32.mrf.mxu0
      %2797 = vmatprep.mubr.f32.mxu0 0.0
      %2798 = vmatmul.mubr.f32.gmra.mxu0 %v2623
      %v2799 = vpop.f32.mrf.mxu0
      %v2800 = vadd.f32 0.0, %v2799
      %v2801 = vpop.f32.mrf.mxu0
      %2802 = vmatprep.mubr.f32.mxu0 0.0
      %2803 = vmatmul.mubr.f32.gmra.mxu0 %v2626
      %v2804 = vpop.f32.mrf.mxu0
      %v2805 = vadd.f32 0.0, %v2804
      %v2806 = vpop.f32.mrf.mxu0
      %2807 = vmatprep.mubr.f32.mxu0 0.0
      %2808 = vmatmul.mubr.f32.gmra.mxu0 %v2629
      %v2809 = vpop.f32.mrf.mxu0
      %v2810 = vadd.f32 0.0, %v2809
      %v2811 = vpop.f32.mrf.mxu0
      %2812 = vmatprep.mubr.f32.mxu0 0.0
      %2813 = vmatmul.mubr.f32.gmra.mxu0 %v2632
      %v2814 = vpop.f32.mrf.mxu0
      %v2815 = vadd.f32 0.0, %v2814
      %v2816 = vpop.f32.mrf.mxu0
      %2817 = vmatprep.mubr.f32.mxu0 0.0
      %2818 = vmatmul.mubr.f32.gmra.mxu0 %v2635
      %v2819 = vpop.f32.mrf.mxu0
      %v2820 = vadd.f32 0.0, %v2819
      %v2821 = vpop.f32.mrf.mxu0
      %2822 = vmatprep.mubr.f32.mxu0 0.0
      %2823 = vmatmul.mubr.f32.gmra.mxu0 %v2638
      %v2824 = vpop.f32.mrf.mxu0
      %v2825 = vadd.f32 0.0, %v2824
      %v2826 = vpop.f32.mrf.mxu0
      %2827 = vmatprep.mubr.f32.mxu0 0.0
      %2828 = vmatmul.mubr.f32.gmra.mxu0 %v2641
      %v2829 = vpop.f32.mrf.mxu0
      %v2830 = vadd.f32 0.0, %v2829
      %v2831 = vpop.f32.mrf.mxu0
      %2832 = vmatprep.mubr.f32.mxu0 0.0
      %2833 = vmatmul.mubr.f32.gmra.mxu0 %v2644
      %v2834 = vpop.f32.mrf.mxu0
      %v2835 = vadd.f32 0.0, %v2834
      %v2836 = vpop.f32.mrf.mxu0
      %2837 = vmatprep.mubr.f32.mxu0 0.0
      %2838 = vmatmul.mubr.f32.gmra.mxu0 %v2647
      %v2839 = vpop.f32.mrf.mxu0
      %v2840 = vadd.f32 0.0, %v2839
      %v2841 = vpop.f32.mrf.mxu0
      %2842 = vmatprep.mubr.f32.mxu0 0.0
      %2843 = vmatmul.mubr.f32.gmra.mxu0 %v2650
      %v2844 = vpop.f32.mrf.mxu0
      %v2845 = vadd.f32 0.0, %v2844
      %v2846 = vpop.f32.mrf.mxu0
      %2847 = vmatprep.mubr.f32.mxu0 0.0
      %2848 = vmatmul.mubr.f32.gmra.mxu0 %v2653
      %v2849 = vpop.f32.mrf.mxu0
      %v2850 = vadd.f32 0.0, %v2849
      %v2851 = vpop.f32.mrf.mxu0
      %2852 = vmatprep.mubr.f32.mxu0 0.0
      %2853 = vmatmul.mubr.f32.gmra.mxu0 %v2656
      %v2854 = vpop.f32.mrf.mxu0
      %v2855 = vadd.f32 0.0, %v2854
      %v2856 = vpop.f32.mrf.mxu0
      %2857 = vmatprep.mubr.f32.mxu0 0.0
      %2858 = vmatmul.mubr.f32.gmra.mxu0 %v2659
      %v2859 = vpop.f32.mrf.mxu0
      %v2860 = vadd.f32 0.0, %v2859
      %v2861 = vpop.f32.mrf.mxu0
      %2862 = vmatprep.mubr.f32.mxu0 0.0
      %2863 = vmatmul.mubr.f32.gmra.mxu0 %v2662
      %v2864 = vpop.f32.mrf.mxu0
      %v2865 = vadd.f32 0.0, %v2864
      %v2866 = vpop.f32.mrf.mxu0
      %2867 = vmatprep.mubr.f32.mxu0 0.0
      %2868 = vmatmul.mubr.f32.gmra.mxu0 %v2665
      %v2869 = vpop.f32.mrf.mxu0
      %v2870 = vadd.f32 0.0, %v2869
      %v2871 = vpop.f32.mrf.mxu0
      %2872 = vmatprep.mubr.f32.mxu0 0.0
      %2873 = vmatmul.mubr.f32.gmra.mxu0 %v2668
      %v2874 = vpop.f32.mrf.mxu0
      %v2875 = vadd.f32 0.0, %v2874
      %v2876 = vpop.f32.mrf.mxu0
      %2877 = vmatprep.mubr.f32.mxu0 0.0
      %2878 = vmatmul.mubr.f32.gmra.mxu0 %v2671
      %v2879 = vpop.f32.mrf.mxu0
      %v2880 = vadd.f32 0.0, %v2879
      %v2881 = vpop.f32.mrf.mxu0
      %2882 = vmatprep.mubr.f32.mxu0 0.0
      %2883 = vmatmul.mubr.f32.gmra.mxu0 %v2674
      %v2884 = vpop.f32.mrf.mxu0
      %v2885 = vadd.f32 0.0, %v2884
      %v2886 = vpop.f32.mrf.mxu0
      %2887 = vmatprep.mubr.f32.mxu0 0.0
      %2888 = vmatmul.mubr.f32.gmra.mxu0 %v2677
      %v2889 = vpop.f32.mrf.mxu0
      %v2890 = vadd.f32 0.0, %v2889
      %v2891 = vpop.f32.mrf.mxu0
      %2892 = vmatprep.mubr.f32.mxu0 0.0
      %2893 = vmatmul.mubr.f32.gmra.mxu0 %v2680
      %v2894 = vpop.f32.mrf.mxu0
      %v2895 = vadd.f32 0.0, %v2894
      %v2896 = vpop.f32.mrf.mxu0
      %2897 = vmatprep.mubr.f32.mxu0 0.0
      %2898 = vmatmul.mubr.f32.gmra.mxu0 %v2683
      %v2899 = vpop.f32.mrf.mxu0
      %v2900 = vadd.f32 0.0, %v2899
      %v2901 = vpop.f32.mrf.mxu0
      %2902 = vmatprep.mubr.f32.mxu0 0.0
      %2903 = vmatmul.mubr.f32.gmra.mxu0 %v2686
      %v2904 = vpop.f32.mrf.mxu0
      %v2905 = vadd.f32 0.0, %v2904
      %v2906 = vpop.f32.mrf.mxu0
      %2907 = vmatprep.mubr.f32.mxu0 0.0
      %2908 = vmatmul.mubr.f32.gmra.mxu0 %v2689
      %v2909 = vpop.f32.mrf.mxu0
      %v2910 = vadd.f32 0.0, %v2909
      %v2911 = vpop.f32.mrf.mxu0
      %2912 = vmatprep.mubr.f32.mxu0 0.0
      %2913 = vmatmul.mubr.f32.gmra.mxu0 %v2692
      %v2914 = vpop.f32.mrf.mxu0
      %v2915 = vadd.f32 0.0, %v2914
      %v2916 = vpop.f32.mrf.mxu0
      %2917 = vmatprep.mubr.f32.mxu0 0.0
      %2918 = vmatmul.mubr.f32.gmra.mxu0 %v2695
      %v2919 = vpop.f32.mrf.mxu0
      %v2920 = vadd.f32 0.0, %v2919
      %v2921 = vpop.f32.mrf.mxu0
      %2922 = vmatprep.mubr.f32.mxu0 0.0
      %2923 = vmatmul.mubr.f32.gmra.mxu0 %v2698
      %v2924 = vpop.f32.mrf.mxu0
      %v2925 = vadd.f32 0.0, %v2924
      %v2926 = vpop.f32.mrf.mxu0
      %2927 = vdwg.mxu0
      %2928 = vst.msk [vmem:[%s1400] sm:$0xff] %vm653, %v2770
      %2929 = vst.msk [vmem:[%s1400 + $0x8] sm:$0xff] %vm653, %v2775
      %2930 = vst.msk [vmem:[%s1400 + $0x10] sm:$0xff] %vm653, %v2780
      %2931 = vst.msk [vmem:[%s1400 + $0x18] sm:$0xff] %vm653, %v2785
      %2932 = vst.msk [vmem:[%s1400 + $0x20] sm:$0xff] %vm653, %v2790
      %2933 = vst.msk [vmem:[%s1400 + $0x28] sm:$0xff] %vm653, %v2795
      %2934 = vst.msk [vmem:[%s1400 + $0x30] sm:$0xff] %vm653, %v2800
      %2935 = vst.msk [vmem:[%s1400 + $0x38] sm:$0xff] %vm653, %v2805
      %2936 = vst.msk [vmem:[%s1400 + $0x40] sm:$0xff] %vm653, %v2810
      %2937 = vst.msk [vmem:[%s1400 + $0x48] sm:$0xff] %vm653, %v2815
      %2938 = vst.msk [vmem:[%s1400 + $0x50] sm:$0xff] %vm653, %v2820
      %2939 = vst.msk [vmem:[%s1400 + $0x58] sm:$0xff] %vm653, %v2825
      %2940 = vst.msk [vmem:[%s1400 + $0x60] sm:$0xff] %vm653, %v2830
      %2941 = vst.msk [vmem:[%s1400 + $0x68] sm:$0xff] %vm653, %v2835
      %2942 = vst.msk [vmem:[%s1400 + $0x70] sm:$0xff] %vm653, %v2840
      %2943 = vst.msk [vmem:[%s1400 + $0x78] sm:$0xff] %vm653, %v2845
      %2944 = vst.msk [vmem:[%s1400 + $0x80] sm:$0xff] %vm653, %v2850
      %2945 = vst.msk [vmem:[%s1400 + $0x88] sm:$0xff] %vm653, %v2855
      %2946 = vst.msk [vmem:[%s1400 + $0x90] sm:$0xff] %vm653, %v2860
      %2947 = vst.msk [vmem:[%s1400 + $0x98] sm:$0xff] %vm653, %v2865
      %2948 = vst.msk [vmem:[%s1400 + $0xa0] sm:$0xff] %vm653, %v2870
      %2949 = vst.msk [vmem:[%s1400 + $0xa8] sm:$0xff] %vm653, %v2875
      %2950 = vst.msk [vmem:[%s1400 + $0xb0] sm:$0xff] %vm653, %v2880
      %2951 = vst.msk [vmem:[%s1400 + $0xb8] sm:$0xff] %vm653, %v2885
      %2952 = vst.msk [vmem:[%s1400 + $0xc0] sm:$0xff] %vm653, %v2890
      %2953 = vst.msk [vmem:[%s1400 + $0xc8] sm:$0xff] %vm653, %v2895
      %2954 = vst.msk [vmem:[%s1400 + $0xd0] sm:$0xff] %vm653, %v2900
      %2955 = vst.msk [vmem:[%s1400 + $0xd8] sm:$0xff] %vm653, %v2905
      %2956 = vst.msk [vmem:[%s1400 + $0xe0] sm:$0xff] %vm653, %v2910
      %2957 = vst.msk [vmem:[%s1400 + $0xe8] sm:$0xff] %vm653, %v2915
      %2958 = vst.msk [vmem:[%s1400 + $0xf0] sm:$0xff] %vm653, %v2920
      %2959 = vst.msk [vmem:[%s1400 + $0xf8] sm:$0xff] %vm653, %v2925
      %v2960 = vsel %vm653, %v2770, 0.0
      %v2961 = vsel %vm653, %v2775, 0.0
      %v2962 = vadd.f32 %v2960, %v2961
      %v2963 = vsel %vm653, %v2780, 0.0
      %v2964 = vadd.f32 %v2962, %v2963
      %v2965 = vsel %vm653, %v2785, 0.0
      %v2966 = vadd.f32 %v2964, %v2965
      %v2967 = vsel %vm653, %v2790, 0.0
      %v2968 = vadd.f32 %v2966, %v2967
      %v2969 = vsel %vm653, %v2795, 0.0
      %v2970 = vadd.f32 %v2968, %v2969
      %v2971 = vsel %vm653, %v2800, 0.0
      %v2972 = vadd.f32 %v2970, %v2971
      %v2973 = vsel %vm653, %v2805, 0.0
      %v2974 = vadd.f32 %v2972, %v2973
      %v2975 = vsel %vm653, %v2810, 0.0
      %v2976 = vadd.f32 %v2974, %v2975
      %v2977 = vsel %vm653, %v2815, 0.0
      %v2978 = vadd.f32 %v2976, %v2977
      %v2979 = vsel %vm653, %v2820, 0.0
      %v2980 = vadd.f32 %v2978, %v2979
      %v2981 = vsel %vm653, %v2825, 0.0
      %v2982 = vadd.f32 %v2980, %v2981
      %v2983 = vsel %vm653, %v2830, 0.0
      %v2984 = vadd.f32 %v2982, %v2983
      %v2985 = vsel %vm653, %v2835, 0.0
      %v2986 = vadd.f32 %v2984, %v2985
      %v2987 = vsel %vm653, %v2840, 0.0
      %v2988 = vadd.f32 %v2986, %v2987
      %v2989 = vsel %vm653, %v2845, 0.0
      %v2990 = vadd.f32 %v2988, %v2989
      %v2991 = vsel %vm653, %v2850, 0.0
      %v2992 = vadd.f32 %v2990, %v2991
      %v2993 = vsel %vm653, %v2855, 0.0
      %v2994 = vadd.f32 %v2992, %v2993
      %v2995 = vsel %vm653, %v2860, 0.0
      %v2996 = vadd.f32 %v2994, %v2995
      %v2997 = vsel %vm653, %v2865, 0.0
      %v2998 = vadd.f32 %v2996, %v2997
      %v2999 = vsel %vm653, %v2870, 0.0
      %v3000 = vadd.f32 %v2998, %v2999
      %v3001 = vsel %vm653, %v2875, 0.0
      %v3002 = vadd.f32 %v3000, %v3001
      %v3003 = vsel %vm653, %v2880, 0.0
      %v3004 = vadd.f32 %v3002, %v3003
      %v3005 = vsel %vm653, %v2885, 0.0
      %v3006 = vadd.f32 %v3004, %v3005
      %v3007 = vsel %vm653, %v2890, 0.0
      %v3008 = vadd.f32 %v3006, %v3007
      %v3009 = vsel %vm653, %v2895, 0.0
      %v3010 = vadd.f32 %v3008, %v3009
      %v3011 = vsel %vm653, %v2900, 0.0
      %v3012 = vadd.f32 %v3010, %v3011
      %v3013 = vsel %vm653, %v2905, 0.0
      %v3014 = vadd.f32 %v3012, %v3013
      %v3015 = vsel %vm653, %v2910, 0.0
      %v3016 = vadd.f32 %v3014, %v3015
      %v3017 = vsel %vm653, %v2915, 0.0
      %v3018 = vadd.f32 %v3016, %v3017
      %v3019 = vsel %vm653, %v2920, 0.0
      %v3020 = vadd.f32 %v3018, %v3019
      %v3021 = vsel %vm653, %v2925, 0.0
      %v3022 = vadd.f32 %v3020, %v3021
      %v3023 = vrot.slane %v3022, 4
      %v3024 = vadd.f32 %v3022, %v3023
      %v3025 = vrot.slane %v3024, 2
      %v3026 = vadd.f32 %v3024, %v3025
      %v3027 = vrot.slane %v3026, 1
      %v3028 = vadd.f32 %v3026, %v3027
      %v3029 = vadd.f32 %v3028, 0.0
      %v3030 = vmul.f32 %v2770, %v2770
      %v3031 = vmul.f32 %v2775, %v2775
      %v3032 = vmul.f32 %v2780, %v2780
      %v3033 = vmul.f32 %v2785, %v2785
      %v3034 = vmul.f32 %v2790, %v2790
      %v3035 = vmul.f32 %v2795, %v2795
      %v3036 = vmul.f32 %v2800, %v2800
      %v3037 = vmul.f32 %v2805, %v2805
      %v3038 = vmul.f32 %v2810, %v2810
      %v3039 = vmul.f32 %v2815, %v2815
      %v3040 = vmul.f32 %v2820, %v2820
      %v3041 = vmul.f32 %v2825, %v2825
      %v3042 = vmul.f32 %v2830, %v2830
      %v3043 = vmul.f32 %v2835, %v2835
      %v3044 = vmul.f32 %v2840, %v2840
      %v3045 = vmul.f32 %v2845, %v2845
      %v3046 = vmul.f32 %v2850, %v2850
      %v3047 = vmul.f32 %v2855, %v2855
      %v3048 = vmul.f32 %v2860, %v2860
      %v3049 = vmul.f32 %v2865, %v2865
      %v3050 = vmul.f32 %v2870, %v2870
      %v3051 = vmul.f32 %v2875, %v2875
      %v3052 = vmul.f32 %v2880, %v2880
      %v3053 = vmul.f32 %v2885, %v2885
      %v3054 = vmul.f32 %v2890, %v2890
      %v3055 = vmul.f32 %v2895, %v2895
      %v3056 = vmul.f32 %v2900, %v2900
      %v3057 = vmul.f32 %v2905, %v2905
      %v3058 = vmul.f32 %v2910, %v2910
      %v3059 = vmul.f32 %v2915, %v2915
      %v3060 = vmul.f32 %v2920, %v2920
      %v3061 = vmul.f32 %v2925, %v2925
      %v3062 = vsel %vm653, %v3030, 0.0
      %v3063 = vsel %vm653, %v3031, 0.0
      %v3064 = vadd.f32 %v3062, %v3063
      %v3065 = vsel %vm653, %v3032, 0.0
      %v3066 = vadd.f32 %v3064, %v3065
      %v3067 = vsel %vm653, %v3033, 0.0
      %v3068 = vadd.f32 %v3066, %v3067
      %v3069 = vsel %vm653, %v3034, 0.0
      %v3070 = vadd.f32 %v3068, %v3069
      %v3071 = vsel %vm653, %v3035, 0.0
      %v3072 = vadd.f32 %v3070, %v3071
      %v3073 = vsel %vm653, %v3036, 0.0
      %v3074 = vadd.f32 %v3072, %v3073
      %v3075 = vsel %vm653, %v3037, 0.0
      %v3076 = vadd.f32 %v3074, %v3075
      %v3077 = vsel %vm653, %v3038, 0.0
      %v3078 = vadd.f32 %v3076, %v3077
      %v3079 = vsel %vm653, %v3039, 0.0
      %v3080 = vadd.f32 %v3078, %v3079
      %v3081 = vsel %vm653, %v3040, 0.0
      %v3082 = vadd.f32 %v3080, %v3081
      %v3083 = vsel %vm653, %v3041, 0.0
      %v3084 = vadd.f32 %v3082, %v3083
      %v3085 = vsel %vm653, %v3042, 0.0
      %v3086 = vadd.f32 %v3084, %v3085
      %v3087 = vsel %vm653, %v3043, 0.0
      %v3088 = vadd.f32 %v3086, %v3087
      %v3089 = vsel %vm653, %v3044, 0.0
      %v3090 = vadd.f32 %v3088, %v3089
      %v3091 = vsel %vm653, %v3045, 0.0
      %v3092 = vadd.f32 %v3090, %v3091
      %v3093 = vsel %vm653, %v3046, 0.0
      %v3094 = vadd.f32 %v3092, %v3093
      %v3095 = vsel %vm653, %v3047, 0.0
      %v3096 = vadd.f32 %v3094, %v3095
      %v3097 = vsel %vm653, %v3048, 0.0
      %v3098 = vadd.f32 %v3096, %v3097
      %v3099 = vsel %vm653, %v3049, 0.0
      %v3100 = vadd.f32 %v3098, %v3099
      %v3101 = vsel %vm653, %v3050, 0.0
      %v3102 = vadd.f32 %v3100, %v3101
      %v3103 = vsel %vm653, %v3051, 0.0
      %v3104 = vadd.f32 %v3102, %v3103
      %v3105 = vsel %vm653, %v3052, 0.0
      %v3106 = vadd.f32 %v3104, %v3105
      %v3107 = vsel %vm653, %v3053, 0.0
      %v3108 = vadd.f32 %v3106, %v3107
      %v3109 = vsel %vm653, %v3054, 0.0
      %v3110 = vadd.f32 %v3108, %v3109
      %v3111 = vsel %vm653, %v3055, 0.0
      %v3112 = vadd.f32 %v3110, %v3111
      %v3113 = vsel %vm653, %v3056, 0.0
      %v3114 = vadd.f32 %v3112, %v3113
      %v3115 = vsel %vm653, %v3057, 0.0
      %v3116 = vadd.f32 %v3114, %v3115
      %v3117 = vsel %vm653, %v3058, 0.0
      %v3118 = vadd.f32 %v3116, %v3117
      %v3119 = vsel %vm653, %v3059, 0.0
      %v3120 = vadd.f32 %v3118, %v3119
      %v3121 = vsel %vm653, %v3060, 0.0
      %v3122 = vadd.f32 %v3120, %v3121
      %v3123 = vsel %vm653, %v3061, 0.0
      %v3124 = vadd.f32 %v3122, %v3123
      %v3125 = vrot.slane %v3124, 4
      %v3126 = vadd.f32 %v3124, %v3125
      %v3127 = vrot.slane %v3126, 2
      %v3128 = vadd.f32 %v3126, %v3127
      %v3129 = vrot.slane %v3128, 1
      %v3130 = vadd.f32 %v3128, %v3129
      %v3131 = vadd.f32 %v3130, 0.0
      %v3132 = vmul.f32 %v3029, %v1605
      %v3133 = vmul.f32 %v3131, %v1605
      %v3134 = vmul.f32 %v3132, %v3132
      %v3135 = vsub.f32 %v3133, %v3134
      %v3136 = vmax.f32 %v3135, 0.0
      %v3137 = vadd.f32 %v3136, 1e-05
      %v3138 = vrsqrt.pop %v3137
      %v3139 = vld [vmem:[#allocation3] sm:$0xff]
      %v3140 = vld [vmem:[#allocation3 + $0x8] sm:$0xff]
      %v3141 = vld [vmem:[#allocation3 + $0x10] sm:$0xff]
      %v3142 = vld [vmem:[#allocation3 + $0x18] sm:$0xff]
      %v3143 = vld [vmem:[#allocation3 + $0x20] sm:$0xff]
      %v3144 = vld [vmem:[#allocation3 + $0x28] sm:$0xff]
      %v3145 = vld [vmem:[#allocation3 + $0x30] sm:$0xff]
      %v3146 = vld [vmem:[#allocation3 + $0x38] sm:$0xff]
      %v3147 = vld [vmem:[#allocation3 + $0x40] sm:$0xff]
      %v3148 = vld [vmem:[#allocation3 + $0x48] sm:$0xff]
      %v3149 = vld [vmem:[#allocation3 + $0x50] sm:$0xff]
      %v3150 = vld [vmem:[#allocation3 + $0x58] sm:$0xff]
      %v3151 = vld [vmem:[#allocation3 + $0x60] sm:$0xff]
      %v3152 = vld [vmem:[#allocation3 + $0x68] sm:$0xff]
      %v3153 = vld [vmem:[#allocation3 + $0x70] sm:$0xff]
      %v3154 = vld [vmem:[#allocation3 + $0x78] sm:$0xff]
      %v3155 = vld [vmem:[#allocation3 + $0x80] sm:$0xff]
      %v3156 = vld [vmem:[#allocation3 + $0x88] sm:$0xff]
      %v3157 = vld [vmem:[#allocation3 + $0x90] sm:$0xff]
      %v3158 = vld [vmem:[#allocation3 + $0x98] sm:$0xff]
      %v3159 = vld [vmem:[#allocation3 + $0xa0] sm:$0xff]
      %v3160 = vld [vmem:[#allocation3 + $0xa8] sm:$0xff]
      %v3161 = vld [vmem:[#allocation3 + $0xb0] sm:$0xff]
      %v3162 = vld [vmem:[#allocation3 + $0xb8] sm:$0xff]
      %v3163 = vld [vmem:[#allocation3 + $0xc0] sm:$0xff]
      %v3164 = vld [vmem:[#allocation3 + $0xc8] sm:$0xff]
      %v3165 = vld [vmem:[#allocation3 + $0xd0] sm:$0xff]
      %v3166 = vld [vmem:[#allocation3 + $0xd8] sm:$0xff]
      %v3167 = vld [vmem:[#allocation3 + $0xe0] sm:$0xff]
      %v3168 = vld [vmem:[#allocation3 + $0xe8] sm:$0xff]
      %v3169 = vld [vmem:[#allocation3 + $0xf0] sm:$0xff]
      %v3170 = vld [vmem:[#allocation3 + $0xf8] sm:$0xff]
      %v3171 = vsub.f32 %v3139, %v3132
      %v3172 = vsub.f32 %v3140, %v3132
      %v3173 = vsub.f32 %v3141, %v3132
      %v3174 = vsub.f32 %v3142, %v3132
      %v3175 = vsub.f32 %v3143, %v3132
      %v3176 = vsub.f32 %v3144, %v3132
      %v3177 = vsub.f32 %v3145, %v3132
      %v3178 = vsub.f32 %v3146, %v3132
      %v3179 = vsub.f32 %v3147, %v3132
      %v3180 = vsub.f32 %v3148, %v3132
      %v3181 = vsub.f32 %v3149, %v3132
      %v3182 = vsub.f32 %v3150, %v3132
      %v3183 = vsub.f32 %v3151, %v3132
      %v3184 = vsub.f32 %v3152, %v3132
      %v3185 = vsub.f32 %v3153, %v3132
      %v3186 = vsub.f32 %v3154, %v3132
      %v3187 = vsub.f32 %v3155, %v3132
      %v3188 = vsub.f32 %v3156, %v3132
      %v3189 = vsub.f32 %v3157, %v3132
      %v3190 = vsub.f32 %v3158, %v3132
      %v3191 = vsub.f32 %v3159, %v3132
      %v3192 = vsub.f32 %v3160, %v3132
      %v3193 = vsub.f32 %v3161, %v3132
      %v3194 = vsub.f32 %v3162, %v3132
      %v3195 = vsub.f32 %v3163, %v3132
      %v3196 = vsub.f32 %v3164, %v3132
      %v3197 = vsub.f32 %v3165, %v3132
      %v3198 = vsub.f32 %v3166, %v3132
      %v3199 = vsub.f32 %v3167, %v3132
      %v3200 = vsub.f32 %v3168, %v3132
      %v3201 = vsub.f32 %v3169, %v3132
      %v3202 = vsub.f32 %v3170, %v3132
      %v3203 = vmul.f32 %v3171, %v3138
      %v3204 = vmul.f32 %v3172, %v3138
      %v3205 = vmul.f32 %v3173, %v3138
      %v3206 = vmul.f32 %v3174, %v3138
      %v3207 = vmul.f32 %v3175, %v3138
      %v3208 = vmul.f32 %v3176, %v3138
      %v3209 = vmul.f32 %v3177, %v3138
      %v3210 = vmul.f32 %v3178, %v3138
      %v3211 = vmul.f32 %v3179, %v3138
      %v3212 = vmul.f32 %v3180, %v3138
      %v3213 = vmul.f32 %v3181, %v3138
      %v3214 = vmul.f32 %v3182, %v3138
      %v3215 = vmul.f32 %v3183, %v3138
      %v3216 = vmul.f32 %v3184, %v3138
      %v3217 = vmul.f32 %v3185, %v3138
      %v3218 = vmul.f32 %v3186, %v3138
      %v3219 = vmul.f32 %v3187, %v3138
      %v3220 = vmul.f32 %v3188, %v3138
      %v3221 = vmul.f32 %v3189, %v3138
      %v3222 = vmul.f32 %v3190, %v3138
      %v3223 = vmul.f32 %v3191, %v3138
      %v3224 = vmul.f32 %v3192, %v3138
      %v3225 = vmul.f32 %v3193, %v3138
      %v3226 = vmul.f32 %v3194, %v3138
      %v3227 = vmul.f32 %v3195, %v3138
      %v3228 = vmul.f32 %v3196, %v3138
      %v3229 = vmul.f32 %v3197, %v3138
      %v3230 = vmul.f32 %v3198, %v3138
      %v3231 = vmul.f32 %v3199, %v3138
      %v3232 = vmul.f32 %v3200, %v3138
      %v3233 = vmul.f32 %v3201, %v3138
      %v3234 = vmul.f32 %v3202, %v3138
      %v3235 = vld [vmem:[%s165] sm:$0xff]
      %v3236 = vld [vmem:[%s165 + $0x8] sm:$0xff]
      %v3237 = vld [vmem:[%s165 + $0x10] sm:$0xff]
      %v3238 = vld [vmem:[%s165 + $0x18] sm:$0xff]
      %v3239 = vld [vmem:[%s165 + $0x20] sm:$0xff]
      %v3240 = vld [vmem:[%s165 + $0x28] sm:$0xff]
      %v3241 = vld [vmem:[%s165 + $0x30] sm:$0xff]
      %v3242 = vld [vmem:[%s165 + $0x38] sm:$0xff]
      %v3243 = vld [vmem:[%s165 + $0x40] sm:$0xff]
      %v3244 = vld [vmem:[%s165 + $0x48] sm:$0xff]
      %v3245 = vld [vmem:[%s165 + $0x50] sm:$0xff]
      %v3246 = vld [vmem:[%s165 + $0x58] sm:$0xff]
      %v3247 = vld [vmem:[%s165 + $0x60] sm:$0xff]
      %v3248 = vld [vmem:[%s165 + $0x68] sm:$0xff]
      %v3249 = vld [vmem:[%s165 + $0x70] sm:$0xff]
      %v3250 = vld [vmem:[%s165 + $0x78] sm:$0xff]
      %v3251 = vld [vmem:[%s165 + $0x80] sm:$0xff]
      %v3252 = vld [vmem:[%s165 + $0x88] sm:$0xff]
      %v3253 = vld [vmem:[%s165 + $0x90] sm:$0xff]
      %v3254 = vld [vmem:[%s165 + $0x98] sm:$0xff]
      %v3255 = vld [vmem:[%s165 + $0xa0] sm:$0xff]
      %v3256 = vld [vmem:[%s165 + $0xa8] sm:$0xff]
      %v3257 = vld [vmem:[%s165 + $0xb0] sm:$0xff]
      %v3258 = vld [vmem:[%s165 + $0xb8] sm:$0xff]
      %v3259 = vld [vmem:[%s165 + $0xc0] sm:$0xff]
      %v3260 = vld [vmem:[%s165 + $0xc8] sm:$0xff]
      %v3261 = vld [vmem:[%s165 + $0xd0] sm:$0xff]
      %v3262 = vld [vmem:[%s165 + $0xd8] sm:$0xff]
      %v3263 = vld [vmem:[%s165 + $0xe0] sm:$0xff]
      %v3264 = vld [vmem:[%s165 + $0xe8] sm:$0xff]
      %v3265 = vld [vmem:[%s165 + $0xf0] sm:$0xff]
      %v3266 = vld [vmem:[%s165 + $0xf8] sm:$0xff]
      %v3267 = vadd.f32 %v3203, %v3235
      %v3268 = vadd.f32 %v3204, %v3236
      %v3269 = vadd.f32 %v3205, %v3237
      %v3270 = vadd.f32 %v3206, %v3238
      %v3271 = vadd.f32 %v3207, %v3239
      %v3272 = vadd.f32 %v3208, %v3240
      %v3273 = vadd.f32 %v3209, %v3241
      %v3274 = vadd.f32 %v3210, %v3242
      %v3275 = vadd.f32 %v3211, %v3243
      %v3276 = vadd.f32 %v3212, %v3244
      %v3277 = vadd.f32 %v3213, %v3245
      %v3278 = vadd.f32 %v3214, %v3246
      %v3279 = vadd.f32 %v3215, %v3247
      %v3280 = vadd.f32 %v3216, %v3248
      %v3281 = vadd.f32 %v3217, %v3249
      %v3282 = vadd.f32 %v3218, %v3250
      %v3283 = vadd.f32 %v3219, %v3251
      %v3284 = vadd.f32 %v3220, %v3252
      %v3285 = vadd.f32 %v3221, %v3253
      %v3286 = vadd.f32 %v3222, %v3254
      %v3287 = vadd.f32 %v3223, %v3255
      %v3288 = vadd.f32 %v3224, %v3256
      %v3289 = vadd.f32 %v3225, %v3257
      %v3290 = vadd.f32 %v3226, %v3258
      %v3291 = vadd.f32 %v3227, %v3259
      %v3292 = vadd.f32 %v3228, %v3260
      %v3293 = vadd.f32 %v3229, %v3261
      %v3294 = vadd.f32 %v3230, %v3262
      %v3295 = vadd.f32 %v3231, %v3263
      %v3296 = vadd.f32 %v3232, %v3264
      %v3297 = vadd.f32 %v3233, %v3265
      %v3298 = vadd.f32 %v3234, %v3266
      %3299 = vst.msk [vmem:[%s170] sm:$0xff] %vm653, %v3267
      %3300 = vst.msk [vmem:[%s170 + $0x8] sm:$0xff] %vm653, %v3268
      %3301 = vst.msk [vmem:[%s170 + $0x10] sm:$0xff] %vm653, %v3269
      %3302 = vst.msk [vmem:[%s170 + $0x18] sm:$0xff] %vm653, %v3270
      %3303 = vst.msk [vmem:[%s170 + $0x20] sm:$0xff] %vm653, %v3271
      %3304 = vst.msk [vmem:[%s170 + $0x28] sm:$0xff] %vm653, %v3272
      %3305 = vst.msk [vmem:[%s170 + $0x30] sm:$0xff] %vm653, %v3273
      %3306 = vst.msk [vmem:[%s170 + $0x38] sm:$0xff] %vm653, %v3274
      %3307 = vst.msk [vmem:[%s170 + $0x40] sm:$0xff] %vm653, %v3275
      %3308 = vst.msk [vmem:[%s170 + $0x48] sm:$0xff] %vm653, %v3276
      %3309 = vst.msk [vmem:[%s170 + $0x50] sm:$0xff] %vm653, %v3277
      %3310 = vst.msk [vmem:[%s170 + $0x58] sm:$0xff] %vm653, %v3278
      %3311 = vst.msk [vmem:[%s170 + $0x60] sm:$0xff] %vm653, %v3279
      %3312 = vst.msk [vmem:[%s170 + $0x68] sm:$0xff] %vm653, %v3280
      %3313 = vst.msk [vmem:[%s170 + $0x70] sm:$0xff] %vm653, %v3281
      %3314 = vst.msk [vmem:[%s170 + $0x78] sm:$0xff] %vm653, %v3282
      %3315 = vst.msk [vmem:[%s170 + $0x80] sm:$0xff] %vm653, %v3283
      %3316 = vst.msk [vmem:[%s170 + $0x88] sm:$0xff] %vm653, %v3284
      %3317 = vst.msk [vmem:[%s170 + $0x90] sm:$0xff] %vm653, %v3285
      %3318 = vst.msk [vmem:[%s170 + $0x98] sm:$0xff] %vm653, %v3286
      %3319 = vst.msk [vmem:[%s170 + $0xa0] sm:$0xff] %vm653, %v3287
      %3320 = vst.msk [vmem:[%s170 + $0xa8] sm:$0xff] %vm653, %v3288
      %3321 = vst.msk [vmem:[%s170 + $0xb0] sm:$0xff] %vm653, %v3289
      %3322 = vst.msk [vmem:[%s170 + $0xb8] sm:$0xff] %vm653, %v3290
      %3323 = vst.msk [vmem:[%s170 + $0xc0] sm:$0xff] %vm653, %v3291
      %3324 = vst.msk [vmem:[%s170 + $0xc8] sm:$0xff] %vm653, %v3292
      %3325 = vst.msk [vmem:[%s170 + $0xd0] sm:$0xff] %vm653, %v3293
      %3326 = vst.msk [vmem:[%s170 + $0xd8] sm:$0xff] %vm653, %v3294
      %3327 = vst.msk [vmem:[%s170 + $0xe0] sm:$0xff] %vm653, %v3295
      %3328 = vst.msk [vmem:[%s170 + $0xe8] sm:$0xff] %vm653, %v3296
      %3329 = vst.msk [vmem:[%s170 + $0xf0] sm:$0xff] %vm653, %v3297
      %3330 = vst.msk [vmem:[%s170 + $0xf8] sm:$0xff] %vm653, %v3298
      %p3331 = scmp.lt.s32.totalorder %s14, 1
      %s3332 = scalar_select %p3331, %s14, 1
      %s3333 = smul.addr %s3332, 32
      %s3334 = smul.addr %s3333, 8
      %s3335 = scalar_lea.vmem %s3, %s3334
      // Predicated region
      $region33: #{tpu_custom_call.1} parent=31 // pred_check
        %p3336 = pneg %p100
      $region34: #{tpu_custom_call.1} parent=31 // pred_check_branch
        %3338 = sbr.rel (%p3336) target = $region36
      $region35: #{tpu_custom_call.1} parent=31 // pred_region
        _
      $region36: #{tpu_custom_call.1} parent=31 // pred_fallthru
        _
    $region32: #{tpu_custom_call.1} parent=5 // pred_fallthru
      _
    %p3339 = scmp.le.s32.totalorder 2, %s9
    // Predicated region
    $region37: #{tpu_custom_call.1} parent=5 // pred_check
      %p3340 = pneg %p3339
    $region38: #{tpu_custom_call.1} parent=5 // pred_check_branch
      %3342 = sbr.rel (%p3340) target = $region40
    $region39: #{tpu_custom_call.1} parent=5 // pred_region
      %s3343 = ssub.s32 %s9, 2
      // Predicated region
      $region41: #{tpu_custom_call.1} parent=39 // pred_check
        %p3344 = pneg %p106
      $region42: #{tpu_custom_call.1} parent=39 // pred_check_branch
        %3346 = sbr.rel (%p3344) target = $region44
      $region43: #{tpu_custom_call.1} parent=39 // pred_region
        %p3347 = scmp.lt.s32.totalorder %s15, 1
        %s3348 = scalar_select %p3347, %s15, 1
        %s3349 = smul.addr %s3348, 32
        %s3350 = smul.addr %s3349, 8
        %s3351 = scalar_lea.vmem %s3, %s3350
      $region44: #{tpu_custom_call.1} parent=39 // pred_fallthru
        _
    $region40: #{tpu_custom_call.1} parent=5 // pred_fallthru
      _
  $region6: #{tpu_custom_call.1} parent=0 // loop_footer
    %s13 = sadd.s32 1, %s9
  $region7: #{tpu_custom_call.1} parent=0 // loop_footer_branch
    %8 = sbr.rel target = $region3
  $region8: #{tpu_custom_call.1} parent=0 // loop_exit
    _

</llo_original>
